<compile_context>
chip_gen: v7x
topology: tpu7x:2x2x1
jax: 0.10.0
libtpu: 0.0.40
codegen_flags: <defaults>
</compile_context>

<pallas_src>
import functools

import jax
import jax.numpy as jnp
import numpy as np
from jax.experimental import pallas as pl
from jax.experimental.pallas import tpu as pltpu


# ----------------------------------------------------------------------------
# Fused kernel: conv3x3+BN1+ReLU -> conv3x3+BN2 -> residual (one batch element)
# ----------------------------------------------------------------------------
def _resnet_block_kernel(x_ref, mask_ref, w1_ref, w2_ref, b_ref, out_ref,
                         stack_ref, y1_ref, *, offsets, ext, b0, c,
                         stack_w, y1_w):
    """
    x_ref    : (C, XEXT)      f32, zero-padded flattened input; the (Hp*Wp)
                              padded-flat image lives at lanes [ext, ext+lp)
    mask_ref : (1, STACK_W)   f32, 1.0 at valid (non-pad) flat positions else 0.0
    w?_ref   : (C, 9*C)       bf16, per-tap conv weights (BN scale folded in),
                              column order (dh*3+dw)*C + in_channel
    b_ref    : (C, 2)         f32, [folded bias1 | folded bias2]
    out_ref  : (C, STACK_W)   f32, lanes [0, lv) are the contiguous valid block
    stack_ref: (9*C, STACK_W) bf16 scratch, shared im2col stack for both convs
    y1_ref   : (C, Y1_W)      bf16 scratch, masked first-stage feature map
    """
    mask = mask_ref[...]                                        # (1, STACK_W) f32

    # ---- conv1 (+ folded BN1): build im2col stack once, one K=9*C matmul ------
    for k, off in enumerate(offsets):
        s = ext + off
        stack_ref[k * c:(k + 1) * c, :] = (
            x_ref[:, s:s + stack_w].astype(jnp.bfloat16))
    acc1 = jnp.dot(w1_ref[...], stack_ref[...],
                   preferred_element_type=jnp.float32)          # (C, STACK_W) f32
    # ReLU (f32), then zero every padded / junk position: this *is* conv2's
    # zero padding.  Store as bf16 — it is the next dot's operand.
    y1 = jnp.maximum(acc1 + b_ref[:, 0:1], 0.0) * mask
    y1_ref[:, :stack_w] = y1.astype(jnp.bfloat16)
    y1_ref[:, stack_w:] = jnp.zeros((c, y1_w - stack_w), jnp.bfloat16)

    # ---- conv2 (+ folded BN2): rebuild the stack from shifted y1 slices -------
    for k, off in enumerate(offsets):
        t = b0 + off
        stack_ref[k * c:(k + 1) * c, :] = y1_ref[:, t:t + stack_w]
    acc2 = jnp.dot(w2_ref[...], stack_ref[...],
                   preferred_element_type=jnp.float32)          # (C, STACK_W) f32

    # ---- residual add in f32; pad/garbage lanes are cropped by the wrapper ----
    x_res = x_ref[:, ext + b0:ext + b0 + stack_w]               # original x block
    out_ref[...] = x_res + acc2 + b_ref[:, 1:2]


# ----------------------------------------------------------------------------
# Wrapper: BN folding, padding / flattening glue, pallas_call
# ----------------------------------------------------------------------------
def resnet_block_pallas(x, params, eps=1e-5):
    n, c, h, w = x.shape
    hp, wp = h + 2, w + 2
    lp = hp * wp                                  # flattened padded extent (324)
    b0 = wp + 1                                   # flat index of first valid pixel
    ext = wp + 1                                  # halo so tap slices stay in-bounds
    stack_w = pl.cdiv(lp, 128) * 128              # lane-dense dot / output width (384)
    y1_w = pl.cdiv(2 * ext + stack_w, 128) * 128  # y1 scratch width (512)
    xext = y1_w                                   # halo-extended input width (512)
    offsets = tuple((dh - 1) * wp + (dw - 1) for dh in range(3) for dw in range(3))

    # ---- fold inference-mode BatchNorm into conv weight / bias (f32, one-time) -
    s1 = params["bn1_g"] / jnp.sqrt(params["bn1_rv"] + eps)
    s2 = params["bn2_g"] / jnp.sqrt(params["bn2_rv"] + eps)
    w1f = params["w1"] * s1[:, None, None, None]
    w2f = params["w2"] * s2[:, None, None, None]
    b1f = (params["b1"] - params["bn1_rm"]) * s1 + params["bn1_b"]
    b2f = (params["b2"] - params["bn2_rm"]) * s2 + params["bn2_b"]
    # (O, I, 3, 3) -> (O, 9*I) with column order (dh*3+dw)*I + i (matches stack rows)
    w1s = jnp.transpose(w1f, (0, 2, 3, 1)).reshape(c, 9 * c).astype(jnp.bfloat16)
    w2s = jnp.transpose(w2f, (0, 2, 3, 1)).reshape(c, 9 * c).astype(jnp.bfloat16)
    b12 = jnp.stack([b1f, b2f], axis=1)                           # (C, 2) f32

    # ---- halo-extended, flattened input: lanes [ext, ext+lp) hold the (Hp, Wp)
    #      zero-padded image flattened row-major; zeros elsewhere.
    xw = jnp.pad(x, ((0, 0), (0, 0), (0, 0), (1, 1)))             # (N, C, H, Wp)
    x_ext = jnp.pad(xw.reshape(n, c, h * wp),
                    ((0, 0), (0, 0), (ext + wp, xext - ext - wp - h * wp)))

    # ---- validity mask over the padded-flat extent (zeros at pads and the tail)
    f = jnp.arange(stack_w)
    row, col = f // wp, f % wp
    mask = (((row >= 1) & (row <= h) & (col >= 1) & (col <= w))
            .astype(jnp.float32))[None, :]                        # (1, STACK_W)

    kernel = functools.partial(_resnet_block_kernel, offsets=offsets, ext=ext,
                               b0=b0, c=c, stack_w=stack_w, y1_w=y1_w)

    out = pl.pallas_call(
        kernel,
        out_shape=jax.ShapeDtypeStruct((n, c, stack_w), jnp.float32),
        grid=(n,),
        in_specs=[
            pl.BlockSpec((None, c, xext), lambda i: (i, 0, 0)),   # x (per batch elem)
            pl.BlockSpec((1, stack_w), lambda i: (0, 0)),         # validity mask
            pl.BlockSpec((c, 9 * c), lambda i: (0, 0)),           # conv1 (+BN1) weight
            pl.BlockSpec((c, 9 * c), lambda i: (0, 0)),           # conv2 (+BN2) weight
            pl.BlockSpec((c, 2), lambda i: (0, 0)),               # [bias1 | bias2]
        ],
        out_specs=pl.BlockSpec((None, c, stack_w), lambda i: (i, 0, 0)),
        scratch_shapes=[
            pltpu.VMEM((9 * c, stack_w), jnp.bfloat16),   # shared im2col stack
            pltpu.VMEM((c, y1_w), jnp.bfloat16),          # stage-1 feature map
        ],
        compiler_params=pltpu.CompilerParams(dimension_semantics=("parallel",)),
    )(x_ext, mask, w1s, w2s, b12)

    # un-flatten: out lane j = r*Wp + cc holds padded pixel (r+1, cc+1); crop cc < W.
    return out[:, :, :h * wp].reshape(n, c, h, wp)[:, :, :, :w]


# ----------------------------------------------------------------------------
# Pure-JAX reference (mirrors the PyTorch forward, inference-mode BN)
# ----------------------------------------------------------------------------
def resnet_block_ref(x, p, eps=1e-5):
    def conv(t, wgt, b):
        y = jax.lax.conv_general_dilated(
            t, wgt, window_strides=(1, 1), padding=((1, 1), (1, 1)),
            dimension_numbers=("NCHW", "OIHW", "NCHW"),
            precision=jax.lax.Precision.HIGHEST)
        return y + b[None, :, None, None]

    def bn(t, g, b, rm, rv):
        s = g / jnp.sqrt(rv + eps)
        return (t - rm[None, :, None, None]) * s[None, :, None, None] + b[None, :, None, None]

    hmid = jax.nn.relu(bn(conv(x, p["w1"], p["b1"]),
                          p["bn1_g"], p["bn1_b"], p["bn1_rm"], p["bn1_rv"]))
    hout = bn(conv(hmid, p["w2"], p["b2"]),
              p["bn2_g"], p["bn2_b"], p["bn2_rm"], p["bn2_rv"])
    return x + hout


# ----------------------------------------------------------------------------
if __name__ == "__main__":
    # ResnetBlock is hard-wired to 64 channels: Conv2d(64, 64, 3, padding=1)
    N, C, H, W = 2, 64, 16, 16

    key = jax.random.PRNGKey(0)
    ks = jax.random.split(key, 16)

    def nrm(k, shape, scale):
        return scale * jax.random.normal(k, shape, dtype=jnp.float32)

    P = {
        "w1": nrm(ks[0], (C, C, 3, 3), 0.05), "b1": nrm(ks[1], (C,), 0.1),
        "bn1_g": 1.0 + nrm(ks[2], (C,), 0.1), "bn1_b": nrm(ks[3], (C,), 0.1),
        "bn1_rm": nrm(ks[4], (C,), 0.1),
        "bn1_rv": 0.8 + 0.4 * jax.random.uniform(ks[5], (C,), dtype=jnp.float32),
        "w2": nrm(ks[6], (C, C, 3, 3), 0.05), "b2": nrm(ks[7], (C,), 0.1),
        "bn2_g": 1.0 + nrm(ks[8], (C,), 0.1), "bn2_b": nrm(ks[9], (C,), 0.1),
        "bn2_rm": nrm(ks[10], (C,), 0.1),
        "bn2_rv": 0.8 + 0.4 * jax.random.uniform(ks[11], (C,), dtype=jnp.float32),
    }
    x = jax.random.normal(ks[12], (N, C, H, W), dtype=jnp.float32)

    out = jax.block_until_ready(resnet_block_pallas(x, P))
    ref = resnet_block_ref(x, P)
    np.testing.assert_allclose(np.asarray(out), np.asarray(ref), rtol=2e-2, atol=2e-2)

    print("KERNEL_OK")
</pallas_src>

<mosaic_0001>
module attributes {stable_mosaic.version = 11 : i64} {
  func.func @_resnet_block_kernel(%arg0: i32, %arg1: memref<1x64x512xf32, #tpu.memory_space<vmem>>, %arg2: memref<1x384xf32, #tpu.memory_space<vmem>>, %arg3: memref<64x576xbf16, #tpu.memory_space<vmem>>, %arg4: memref<64x576xbf16, #tpu.memory_space<vmem>>, %arg5: memref<64x2xf32, #tpu.memory_space<vmem>>, %arg6: memref<1x64x384xf32, #tpu.memory_space<vmem>>, %arg7: memref<576x384xbf16, #tpu.memory_space<vmem>>, %arg8: memref<64x512xbf16, #tpu.memory_space<vmem>>) attributes {dimension_semantics = [#tpu.dimension_semantics<parallel>], iteration_bounds = array<i64: 2>, scalar_prefetch = 0 : i64, scratch_operands = 2 : i64, tpu.core_type = #tpu.core_type<tc>, window_params = [{transform_indices = @transform_0, window_bounds = array<i64: 1, 64, 512>}, {pipeline_mode = #tpu.pipeline_mode<synchronous>, transform_indices = @transform_1, window_bounds = array<i64: 1, 384>}, {pipeline_mode = #tpu.pipeline_mode<synchronous>, transform_indices = @transform_2, window_bounds = array<i64: 64, 576>}, {pipeline_mode = #tpu.pipeline_mode<synchronous>, transform_indices = @transform_3, window_bounds = array<i64: 64, 576>}, {pipeline_mode = #tpu.pipeline_mode<synchronous>, transform_indices = @transform_4, window_bounds = array<i64: 64, 2>}, {transform_indices = @transform_5, window_bounds = array<i64: 1, 64, 384>}]} {
    %c0 = arith.constant 0 : index
    %c0_0 = arith.constant 0 : index
    %0 = vector.load %arg2[%c0, %c0_0] : memref<1x384xf32, #tpu.memory_space<vmem>>, vector<1x384xf32>
    %c0_1 = arith.constant 0 : index
    %c0_2 = arith.constant 0 : index
    %c0_3 = arith.constant 0 : index
    %1 = vector.load %arg1[%c0_1, %c0_2, %c0_3] : memref<1x64x512xf32, #tpu.memory_space<vmem>>, vector<1x64x384xf32>
    %2 = vector.shape_cast %1 : vector<1x64x384xf32> to vector<64x384xf32>
    %3 = arith.truncf %2 : vector<64x384xf32> to vector<64x384xbf16>
    %c0_4 = arith.constant 0 : index
    %c0_5 = arith.constant 0 : index
    %4 = vector.load %arg7[%c0_4, %c0_5] : memref<576x384xbf16, #tpu.memory_space<vmem>>, vector<64x384xbf16>
    tpu.vector_store %arg7[%c0_4, %c0_5], %3 {strides = array<i32>} : memref<576x384xbf16, #tpu.memory_space<vmem>>, vector<64x384xbf16>,
    %c0_6 = arith.constant 0 : index
    %c0_7 = arith.constant 0 : index
    %c1 = arith.constant 1 : index
    %5 = vector.load %arg1[%c0_6, %c0_7, %c1] : memref<1x64x512xf32, #tpu.memory_space<vmem>>, vector<1x64x384xf32>
    %6 = vector.shape_cast %5 : vector<1x64x384xf32> to vector<64x384xf32>
    %7 = arith.truncf %6 : vector<64x384xf32> to vector<64x384xbf16>
    %c64 = arith.constant 64 : index
    %c0_8 = arith.constant 0 : index
    %8 = vector.load %arg7[%c64, %c0_8] : memref<576x384xbf16, #tpu.memory_space<vmem>>, vector<64x384xbf16>
    tpu.vector_store %arg7[%c64, %c0_8], %7 {strides = array<i32>} : memref<576x384xbf16, #tpu.memory_space<vmem>>, vector<64x384xbf16>,
    %c0_9 = arith.constant 0 : index
    %c0_10 = arith.constant 0 : index
    %c2 = arith.constant 2 : index
    %9 = vector.load %arg1[%c0_9, %c0_10, %c2] : memref<1x64x512xf32, #tpu.memory_space<vmem>>, vector<1x64x384xf32>
    %10 = vector.shape_cast %9 : vector<1x64x384xf32> to vector<64x384xf32>
    %11 = arith.truncf %10 : vector<64x384xf32> to vector<64x384xbf16>
    %c128 = arith.constant 128 : index
    %c0_11 = arith.constant 0 : index
    %12 = vector.load %arg7[%c128, %c0_11] : memref<576x384xbf16, #tpu.memory_space<vmem>>, vector<64x384xbf16>
    tpu.vector_store %arg7[%c128, %c0_11], %11 {strides = array<i32>} : memref<576x384xbf16, #tpu.memory_space<vmem>>, vector<64x384xbf16>,
    %c0_12 = arith.constant 0 : index
    %c0_13 = arith.constant 0 : index
    %c18 = arith.constant 18 : index
    %13 = vector.load %arg1[%c0_12, %c0_13, %c18] : memref<1x64x512xf32, #tpu.memory_space<vmem>>, vector<1x64x384xf32>
    %14 = vector.shape_cast %13 : vector<1x64x384xf32> to vector<64x384xf32>
    %15 = arith.truncf %14 : vector<64x384xf32> to vector<64x384xbf16>
    %c192 = arith.constant 192 : index
    %c0_14 = arith.constant 0 : index
    %16 = vector.load %arg7[%c192, %c0_14] : memref<576x384xbf16, #tpu.memory_space<vmem>>, vector<64x384xbf16>
    tpu.vector_store %arg7[%c192, %c0_14], %15 {strides = array<i32>} : memref<576x384xbf16, #tpu.memory_space<vmem>>, vector<64x384xbf16>,
    %c0_15 = arith.constant 0 : index
    %c0_16 = arith.constant 0 : index
    %c19 = arith.constant 19 : index
    %17 = vector.load %arg1[%c0_15, %c0_16, %c19] : memref<1x64x512xf32, #tpu.memory_space<vmem>>, vector<1x64x384xf32>
    %18 = vector.shape_cast %17 : vector<1x64x384xf32> to vector<64x384xf32>
    %19 = arith.truncf %18 : vector<64x384xf32> to vector<64x384xbf16>
    %c256 = arith.constant 256 : index
    %c0_17 = arith.constant 0 : index
    %20 = vector.load %arg7[%c256, %c0_17] : memref<576x384xbf16, #tpu.memory_space<vmem>>, vector<64x384xbf16>
    tpu.vector_store %arg7[%c256, %c0_17], %19 {strides = array<i32>} : memref<576x384xbf16, #tpu.memory_space<vmem>>, vector<64x384xbf16>,
    %c0_18 = arith.constant 0 : index
    %c0_19 = arith.constant 0 : index
    %c20 = arith.constant 20 : index
    %21 = vector.load %arg1[%c0_18, %c0_19, %c20] : memref<1x64x512xf32, #tpu.memory_space<vmem>>, vector<1x64x384xf32>
    %22 = vector.shape_cast %21 : vector<1x64x384xf32> to vector<64x384xf32>
    %23 = arith.truncf %22 : vector<64x384xf32> to vector<64x384xbf16>
    %c320 = arith.constant 320 : index
    %c0_20 = arith.constant 0 : index
    %24 = vector.load %arg7[%c320, %c0_20] : memref<576x384xbf16, #tpu.memory_space<vmem>>, vector<64x384xbf16>
    tpu.vector_store %arg7[%c320, %c0_20], %23 {strides = array<i32>} : memref<576x384xbf16, #tpu.memory_space<vmem>>, vector<64x384xbf16>,
    %c0_21 = arith.constant 0 : index
    %c0_22 = arith.constant 0 : index
    %c36 = arith.constant 36 : index
    %25 = vector.load %arg1[%c0_21, %c0_22, %c36] : memref<1x64x512xf32, #tpu.memory_space<vmem>>, vector<1x64x384xf32>
    %26 = vector.shape_cast %25 : vector<1x64x384xf32> to vector<64x384xf32>
    %27 = arith.truncf %26 : vector<64x384xf32> to vector<64x384xbf16>
    %c384 = arith.constant 384 : index
    %c0_23 = arith.constant 0 : index
    %28 = vector.load %arg7[%c384, %c0_23] : memref<576x384xbf16, #tpu.memory_space<vmem>>, vector<64x384xbf16>
    tpu.vector_store %arg7[%c384, %c0_23], %27 {strides = array<i32>} : memref<576x384xbf16, #tpu.memory_space<vmem>>, vector<64x384xbf16>,
    %c0_24 = arith.constant 0 : index
    %c0_25 = arith.constant 0 : index
    %c37 = arith.constant 37 : index
    %29 = vector.load %arg1[%c0_24, %c0_25, %c37] : memref<1x64x512xf32, #tpu.memory_space<vmem>>, vector<1x64x384xf32>
    %30 = vector.shape_cast %29 : vector<1x64x384xf32> to vector<64x384xf32>
    %31 = arith.truncf %30 : vector<64x384xf32> to vector<64x384xbf16>
    %c448 = arith.constant 448 : index
    %c0_26 = arith.constant 0 : index
    %32 = vector.load %arg7[%c448, %c0_26] : memref<576x384xbf16, #tpu.memory_space<vmem>>, vector<64x384xbf16>
    tpu.vector_store %arg7[%c448, %c0_26], %31 {strides = array<i32>} : memref<576x384xbf16, #tpu.memory_space<vmem>>, vector<64x384xbf16>,
    %c0_27 = arith.constant 0 : index
    %c0_28 = arith.constant 0 : index
    %c38 = arith.constant 38 : index
    %33 = vector.load %arg1[%c0_27, %c0_28, %c38] : memref<1x64x512xf32, #tpu.memory_space<vmem>>, vector<1x64x384xf32>
    %34 = vector.shape_cast %33 : vector<1x64x384xf32> to vector<64x384xf32>
    %35 = arith.truncf %34 : vector<64x384xf32> to vector<64x384xbf16>
    %c512 = arith.constant 512 : index
    %c0_29 = arith.constant 0 : index
    %36 = vector.load %arg7[%c512, %c0_29] : memref<576x384xbf16, #tpu.memory_space<vmem>>, vector<64x384xbf16>
    tpu.vector_store %arg7[%c512, %c0_29], %35 {strides = array<i32>} : memref<576x384xbf16, #tpu.memory_space<vmem>>, vector<64x384xbf16>,
    %c0_30 = arith.constant 0 : index
    %c0_31 = arith.constant 0 : index
    %37 = vector.load %arg3[%c0_30, %c0_31] : memref<64x576xbf16, #tpu.memory_space<vmem>>, vector<64x576xbf16>
    %c0_32 = arith.constant 0 : index
    %c0_33 = arith.constant 0 : index
    %38 = vector.load %arg7[%c0_32, %c0_33] : memref<576x384xbf16, #tpu.memory_space<vmem>>, vector<576x384xbf16>
    %cst = arith.constant dense<0.000000e+00> : vector<64x384xf32>
    %39 = tpu.matmul %37, %38, %cst {dimension_numbers = #tpu.dot_dimension_numbers<[1], [0], [0], [1], [0, 0, 1, 1], [], []>} : vector<64x576xbf16>, vector<576x384xbf16>, vector<64x384xf32> -> vector<64x384xf32>
    %c0_34 = arith.constant 0 : index
    %c0_35 = arith.constant 0 : index
    %40 = vector.load %arg5[%c0_34, %c0_35] : memref<64x2xf32, #tpu.memory_space<vmem>>, vector<64x1xf32>
    %41 = vector.broadcast %40 : vector<64x1xf32> to vector<64x384xf32>
    %42 = arith.addf %39, %41 : vector<64x384xf32>
    %cst_36 = arith.constant 0.000000e+00 : f32
    %43 = vector.broadcast %cst_36 : f32 to vector<64x384xf32>
    %44 = arith.maximumf %42, %43 : vector<64x384xf32>
    %45 = vector.broadcast %0 : vector<1x384xf32> to vector<64x384xf32>
    %46 = arith.mulf %44, %45 : vector<64x384xf32>
    %47 = arith.truncf %46 : vector<64x384xf32> to vector<64x384xbf16>
    %c0_37 = arith.constant 0 : index
    %c0_38 = arith.constant 0 : index
    %48 = vector.load %arg8[%c0_37, %c0_38] : memref<64x512xbf16, #tpu.memory_space<vmem>>, vector<64x384xbf16>
    tpu.vector_store %arg8[%c0_37, %c0_38], %47 {strides = array<i32>} : memref<64x512xbf16, #tpu.memory_space<vmem>>, vector<64x384xbf16>,
    %cst_39 = arith.constant 0.000000e+00 : bf16
    %49 = vector.broadcast %cst_39 : bf16 to vector<64x128xbf16>
    %c0_40 = arith.constant 0 : index
    %c384_41 = arith.constant 384 : index
    %50 = vector.load %arg8[%c0_40, %c384_41] : memref<64x512xbf16, #tpu.memory_space<vmem>>, vector<64x128xbf16>
    tpu.vector_store %arg8[%c0_40, %c384_41], %49 {strides = array<i32>} : memref<64x512xbf16, #tpu.memory_space<vmem>>, vector<64x128xbf16>,
    %c0_42 = arith.constant 0 : index
    %c0_43 = arith.constant 0 : index
    %51 = vector.load %arg8[%c0_42, %c0_43] : memref<64x512xbf16, #tpu.memory_space<vmem>>, vector<64x384xbf16>
    %c0_44 = arith.constant 0 : index
    %c0_45 = arith.constant 0 : index
    %52 = vector.load %arg7[%c0_44, %c0_45] : memref<576x384xbf16, #tpu.memory_space<vmem>>, vector<64x384xbf16>
    tpu.vector_store %arg7[%c0_44, %c0_45], %51 {strides = array<i32>} : memref<576x384xbf16, #tpu.memory_space<vmem>>, vector<64x384xbf16>,
    %c0_46 = arith.constant 0 : index
    %c1_47 = arith.constant 1 : index
    %53 = vector.load %arg8[%c0_46, %c1_47] : memref<64x512xbf16, #tpu.memory_space<vmem>>, vector<64x384xbf16>
    %c64_48 = arith.constant 64 : index
    %c0_49 = arith.constant 0 : index
    %54 = vector.load %arg7[%c64_48, %c0_49] : memref<576x384xbf16, #tpu.memory_space<vmem>>, vector<64x384xbf16>
    tpu.vector_store %arg7[%c64_48, %c0_49], %53 {strides = array<i32>} : memref<576x384xbf16, #tpu.memory_space<vmem>>, vector<64x384xbf16>,
    %c0_50 = arith.constant 0 : index
    %c2_51 = arith.constant 2 : index
    %55 = vector.load %arg8[%c0_50, %c2_51] : memref<64x512xbf16, #tpu.memory_space<vmem>>, vector<64x384xbf16>
    %c128_52 = arith.constant 128 : index
    %c0_53 = arith.constant 0 : index
    %56 = vector.load %arg7[%c128_52, %c0_53] : memref<576x384xbf16, #tpu.memory_space<vmem>>, vector<64x384xbf16>
    tpu.vector_store %arg7[%c128_52, %c0_53], %55 {strides = array<i32>} : memref<576x384xbf16, #tpu.memory_space<vmem>>, vector<64x384xbf16>,
    %c0_54 = arith.constant 0 : index
    %c18_55 = arith.constant 18 : index
    %57 = vector.load %arg8[%c0_54, %c18_55] : memref<64x512xbf16, #tpu.memory_space<vmem>>, vector<64x384xbf16>
    %c192_56 = arith.constant 192 : index
    %c0_57 = arith.constant 0 : index
    %58 = vector.load %arg7[%c192_56, %c0_57] : memref<576x384xbf16, #tpu.memory_space<vmem>>, vector<64x384xbf16>
    tpu.vector_store %arg7[%c192_56, %c0_57], %57 {strides = array<i32>} : memref<576x384xbf16, #tpu.memory_space<vmem>>, vector<64x384xbf16>,
    %c0_58 = arith.constant 0 : index
    %c19_59 = arith.constant 19 : index
    %59 = vector.load %arg8[%c0_58, %c19_59] : memref<64x512xbf16, #tpu.memory_space<vmem>>, vector<64x384xbf16>
    %c256_60 = arith.constant 256 : index
    %c0_61 = arith.constant 0 : index
    %60 = vector.load %arg7[%c256_60, %c0_61] : memref<576x384xbf16, #tpu.memory_space<vmem>>, vector<64x384xbf16>
    tpu.vector_store %arg7[%c256_60, %c0_61], %59 {strides = array<i32>} : memref<576x384xbf16, #tpu.memory_space<vmem>>, vector<64x384xbf16>,
    %c0_62 = arith.constant 0 : index
    %c20_63 = arith.constant 20 : index
    %61 = vector.load %arg8[%c0_62, %c20_63] : memref<64x512xbf16, #tpu.memory_space<vmem>>, vector<64x384xbf16>
    %c320_64 = arith.constant 320 : index
    %c0_65 = arith.constant 0 : index
    %62 = vector.load %arg7[%c320_64, %c0_65] : memref<576x384xbf16, #tpu.memory_space<vmem>>, vector<64x384xbf16>
    tpu.vector_store %arg7[%c320_64, %c0_65], %61 {strides = array<i32>} : memref<576x384xbf16, #tpu.memory_space<vmem>>, vector<64x384xbf16>,
    %c0_66 = arith.constant 0 : index
    %c36_67 = arith.constant 36 : index
    %63 = vector.load %arg8[%c0_66, %c36_67] : memref<64x512xbf16, #tpu.memory_space<vmem>>, vector<64x384xbf16>
    %c384_68 = arith.constant 384 : index
    %c0_69 = arith.constant 0 : index
    %64 = vector.load %arg7[%c384_68, %c0_69] : memref<576x384xbf16, #tpu.memory_space<vmem>>, vector<64x384xbf16>
    tpu.vector_store %arg7[%c384_68, %c0_69], %63 {strides = array<i32>} : memref<576x384xbf16, #tpu.memory_space<vmem>>, vector<64x384xbf16>,
    %c0_70 = arith.constant 0 : index
    %c37_71 = arith.constant 37 : index
    %65 = vector.load %arg8[%c0_70, %c37_71] : memref<64x512xbf16, #tpu.memory_space<vmem>>, vector<64x384xbf16>
    %c448_72 = arith.constant 448 : index
    %c0_73 = arith.constant 0 : index
    %66 = vector.load %arg7[%c448_72, %c0_73] : memref<576x384xbf16, #tpu.memory_space<vmem>>, vector<64x384xbf16>
    tpu.vector_store %arg7[%c448_72, %c0_73], %65 {strides = array<i32>} : memref<576x384xbf16, #tpu.memory_space<vmem>>, vector<64x384xbf16>,
    %c0_74 = arith.constant 0 : index
    %c38_75 = arith.constant 38 : index
    %67 = vector.load %arg8[%c0_74, %c38_75] : memref<64x512xbf16, #tpu.memory_space<vmem>>, vector<64x384xbf16>
    %c512_76 = arith.constant 512 : index
    %c0_77 = arith.constant 0 : index
    %68 = vector.load %arg7[%c512_76, %c0_77] : memref<576x384xbf16, #tpu.memory_space<vmem>>, vector<64x384xbf16>
    tpu.vector_store %arg7[%c512_76, %c0_77], %67 {strides = array<i32>} : memref<576x384xbf16, #tpu.memory_space<vmem>>, vector<64x384xbf16>,
    %c0_78 = arith.constant 0 : index
    %c0_79 = arith.constant 0 : index
    %69 = vector.load %arg4[%c0_78, %c0_79] : memref<64x576xbf16, #tpu.memory_space<vmem>>, vector<64x576xbf16>
    %c0_80 = arith.constant 0 : index
    %c0_81 = arith.constant 0 : index
    %70 = vector.load %arg7[%c0_80, %c0_81] : memref<576x384xbf16, #tpu.memory_space<vmem>>, vector<576x384xbf16>
    %cst_82 = arith.constant dense<0.000000e+00> : vector<64x384xf32>
    %71 = tpu.matmul %69, %70, %cst_82 {dimension_numbers = #tpu.dot_dimension_numbers<[1], [0], [0], [1], [0, 0, 1, 1], [], []>} : vector<64x576xbf16>, vector<576x384xbf16>, vector<64x384xf32> -> vector<64x384xf32>
    %c0_83 = arith.constant 0 : index
    %c0_84 = arith.constant 0 : index
    %c38_85 = arith.constant 38 : index
    %72 = vector.load %arg1[%c0_83, %c0_84, %c38_85] : memref<1x64x512xf32, #tpu.memory_space<vmem>>, vector<1x64x384xf32>
    %73 = vector.shape_cast %72 : vector<1x64x384xf32> to vector<64x384xf32>
    %74 = arith.addf %73, %71 : vector<64x384xf32>
    %c0_86 = arith.constant 0 : index
    %c1_87 = arith.constant 1 : index
    %75 = vector.load %arg5[%c0_86, %c1_87] : memref<64x2xf32, #tpu.memory_space<vmem>>, vector<64x1xf32>
    %76 = vector.broadcast %75 : vector<64x1xf32> to vector<64x384xf32>
    %77 = arith.addf %74, %76 : vector<64x384xf32>
    %c0_88 = arith.constant 0 : index
    %c0_89 = arith.constant 0 : index
    %c0_90 = arith.constant 0 : index
    %78 = vector.load %arg6[%c0_88, %c0_89, %c0_90] : memref<1x64x384xf32, #tpu.memory_space<vmem>>, vector<1x64x384xf32>
    %79 = vector.shape_cast %78 : vector<1x64x384xf32> to vector<64x384xf32>
    %80 = vector.shape_cast %77 : vector<64x384xf32> to vector<1x64x384xf32>
    tpu.vector_store %arg6[%c0_88, %c0_89, %c0_90], %80 {strides = array<i32>} : memref<1x64x384xf32, #tpu.memory_space<vmem>>, vector<1x64x384xf32>,
    return
  }
  func.func @transform_0(%arg0: i32) -> (i32, i32, i32) {
    %c0_i32 = arith.constant 0 : i32
    %c0_i32_0 = arith.constant 0 : i32
    %c0_i32_1 = arith.constant 0 : i32
    return %arg0, %c0_i32, %c0_i32_0 : i32, i32, i32
  }
  func.func @transform_1(%arg0: i32) -> (i32, i32) {
    %c0_i32 = arith.constant 0 : i32
    %c0_i32_0 = arith.constant 0 : i32
    %c0_i32_1 = arith.constant 0 : i32
    return %c0_i32, %c0_i32_0 : i32, i32
  }
  func.func @transform_2(%arg0: i32) -> (i32, i32) {
    %c0_i32 = arith.constant 0 : i32
    %c0_i32_0 = arith.constant 0 : i32
    %c0_i32_1 = arith.constant 0 : i32
    return %c0_i32, %c0_i32_0 : i32, i32
  }
  func.func @transform_3(%arg0: i32) -> (i32, i32) {
    %c0_i32 = arith.constant 0 : i32
    %c0_i32_0 = arith.constant 0 : i32
    %c0_i32_1 = arith.constant 0 : i32
    return %c0_i32, %c0_i32_0 : i32, i32
  }
  func.func @transform_4(%arg0: i32) -> (i32, i32) {
    %c0_i32 = arith.constant 0 : i32
    %c0_i32_0 = arith.constant 0 : i32
    %c0_i32_1 = arith.constant 0 : i32
    return %c0_i32, %c0_i32_0 : i32, i32
  }
  func.func @transform_5(%arg0: i32) -> (i32, i32, i32) {
    %c0_i32 = arith.constant 0 : i32
    %c0_i32_0 = arith.constant 0 : i32
    %c0_i32_1 = arith.constant 0 : i32
    return %arg0, %c0_i32, %c0_i32_0 : i32, i32, i32
  }
}

</mosaic_0001>

<llo_original>
// kernel: tpu_custom_call.1
$region0: #{tpu_custom_call.1}
  #allocation0 [shape = 'u32[]', space=smem, size = 0x4, offset = 0x4, fixed_abs, tag = 'smem constant byte address 0x4 - core index']
  #allocation1 [shape = 'u32[144,128]{1,0:T(1,128)}', space=vmem, size = 0x12000, scoped, tag = 'internal scratch']
  #allocation2 [shape = 'bf16[576,384]{1,0:T(16,128)(2,1)}', space=vmem, size = 0x6c000, scoped, tag = 'scratch operand']
  #allocation3 [shape = 'bf16[64,512]{1,0:T(16,128)(2,1)}', space=vmem, size = 0x10000, scoped, tag = 'scratch operand']
  %s0 = inlined_call_operand.hbm [shape: f32[2,64,512], index: 0, kind: input, shape index: {}]
  %s1 = inlined_call_operand.vmem [shape: f32[1,384], index: 1, kind: input, shape index: {}]
  %s2 = inlined_call_operand.hbm [shape: bf16[64,576], index: 2, kind: input, shape index: {}]
  %s3 = inlined_call_operand.hbm [shape: bf16[64,576], index: 3, kind: input, shape index: {}]
  %s4 = inlined_call_operand.vmem [shape: f32[64,2], index: 4, kind: input, shape index: {}]
  %s5 = inlined_call_operand.hbm [shape: f32[2,64,384], index: 5, kind: output, shape index: {}]
  %s6 = sld [smem:[#allocation0]]
  $region65: #{tpu_custom_call.1} parent=0
    _
  %s8 = ssub.s32 1, %s6
  %s9 = scalar_select 0, %s8, %s6
  $region1: #{tpu_custom_call.1} parent=0
    #allocation4 [shape = 'u8[262144]{0}', space=vmem, size = 0x40000, scoped, tag = 'input window, operand 0']
    #allocation5 [shape = 's32[2]{0}', space=sflag, size = 0x8, scoped, tag = 'scoped memory for tpu_custom_call.1']
    #allocation6 [shape = 's32[2]{0}', space=sflag, size = 0x8, scoped, tag = 'scoped memory for tpu_custom_call.1']
    #allocation7 [shape = 'u8[81920]{0}', space=vmem, size = 0x14000, scoped, tag = 'input window, operand 2, single buffered']
    #allocation8 [shape = 's32[1]{0}', space=sflag, size = 0x4, scoped, tag = 'scoped memory for tpu_custom_call.1']
    #allocation9 [shape = 'u8[81920]{0}', space=vmem, size = 0x14000, scoped, tag = 'input window, operand 3, single buffered']
    #allocation10 [shape = 'u8[196608]{0}', space=vmem, size = 0x30000, scoped, tag = 'output window, operand 0']
    %10 = vsyncpa [#allocation5], 0
    %s11 = scalar_lea.sflag [#allocation5], 1
    %12 = vsyncpa %s11, 0
    %13 = vsyncpa [#allocation8], 0
    %14 = vsyncpa [#allocation6], 0
    %s15 = scalar_lea.sflag [#allocation6], 1
    %16 = vsyncpa %s15, 0
    loop: start=0, step=1, limit=4
    $region2: #{tpu_custom_call.1} parent=1 // loop_pre_header
      _
    $region3: #{tpu_custom_call.1} parent=1 // loop_header
      %s18 = sphi 0, %s22
      %p19 = scmp.ge.s32.totalorder %s18, 4
      %s28 = sphi 0, %s30
      %s31 = sphi 0, %s28
      %s32 = sphi 0, %s31
      %s48 = sphi 0, %s32
      %s52 = sphi 0, %s52
      %s54 = sphi 0, %s52
      %s55 = sphi 0, %s54
      %s69 = sphi 0, %s55
      %s73 = sphi 0, %s73
      %s75 = sphi 0, %s73
      %s76 = sphi 0, %s75
      %s90 = sphi 0, %s76
      %s94 = sphi 0, %s94
      %s96 = sphi 0, %s94
      %s97 = sphi 0, %s96
      %s111 = sphi 0, %s97
      %s115 = sphi 0, %s115
      %s117 = sphi 0, %s115
      %s118 = sphi 0, %s117
      %s132 = sphi 0, %s118
      %s138 = sphi 0, %s140
      %s141 = sphi 0, %s138
      %s142 = sphi 0, %s141
      %s158 = sphi 0, %s142
    $region4: #{tpu_custom_call.1} parent=1 // loop_header_branch
      %21 = sbr.rel (%p19) target = $region8
    $region5: #{tpu_custom_call.1} parent=1 // loop_body
      %s23 = ssub.s32 %s18, 1
      %s24 = ssub.s32 %s18, 2
      %s25 = sadd.s32 %s18, 1
      %s26 = ssub.s32 %s18, %s25
      %p27 = scmp.eq.s32.totalorder %s26, 0
      %s29 = sadd.s32 %s28, 1
      %s30 = scalar_select %p27, %s28, %s29
      %p33 = pneg %p27
      %p34 = scmp.eq.s32.totalorder %s18, 1
      %p35 = por %p33, %p34
      %p36 = scmp.ne.s32.totalorder %s28, %s31
      %p37 = scmp.eq.s32.totalorder %s18, 0
      %p38 = por %p36, %p37
      %p39 = scmp.ne.s32.totalorder %s28, %s31
      %p40 = scmp.eq.s32.totalorder %s23, 1
      %p41 = por %p39, %p40
      %p42 = scmp.ne.s32.totalorder %s31, %s32
      %p43 = scmp.eq.s32.totalorder %s23, 0
      %p44 = por %p42, %p43
      %p45 = scmp.ne.s32.totalorder %s31, %s32
      %p46 = scmp.eq.s32.totalorder %s24, 1
      %p47 = por %p45, %p46
      %p49 = scmp.ne.s32.totalorder %s32, %s48
      %p50 = scmp.eq.s32.totalorder %s24, 0
      %p51 = por %p49, %p50
      %s53 = sadd.s32 %s52, 1
      %p56 = scmp.eq.s32.totalorder %s18, 1
      %p57 = scmp.ne.s32.totalorder %s52, %s54
      %p58 = scmp.eq.s32.totalorder %s18, 0
      %p59 = por %p57, %p58
      %p60 = scmp.ne.s32.totalorder %s52, %s54
      %p61 = scmp.eq.s32.totalorder %s23, 1
      %p62 = por %p60, %p61
      %p63 = scmp.ne.s32.totalorder %s54, %s55
      %p64 = scmp.eq.s32.totalorder %s23, 0
      %p65 = por %p63, %p64
      %p66 = scmp.ne.s32.totalorder %s54, %s55
      %p67 = scmp.eq.s32.totalorder %s24, 1
      %p68 = por %p66, %p67
      %p70 = scmp.ne.s32.totalorder %s55, %s69
      %p71 = scmp.eq.s32.totalorder %s24, 0
      %p72 = por %p70, %p71
      %s74 = sadd.s32 %s73, 1
      %p77 = scmp.eq.s32.totalorder %s18, 1
      %p78 = scmp.ne.s32.totalorder %s73, %s75
      %p79 = scmp.eq.s32.totalorder %s18, 0
      %p80 = por %p78, %p79
      %p81 = scmp.ne.s32.totalorder %s73, %s75
      %p82 = scmp.eq.s32.totalorder %s23, 1
      %p83 = por %p81, %p82
      %p84 = scmp.ne.s32.totalorder %s75, %s76
      %p85 = scmp.eq.s32.totalorder %s23, 0
      %p86 = por %p84, %p85
      %p87 = scmp.ne.s32.totalorder %s75, %s76
      %p88 = scmp.eq.s32.totalorder %s24, 1
      %p89 = por %p87, %p88
      %p91 = scmp.ne.s32.totalorder %s76, %s90
      %p92 = scmp.eq.s32.totalorder %s24, 0
      %p93 = por %p91, %p92
      %s95 = sadd.s32 %s94, 1
      %p98 = scmp.eq.s32.totalorder %s18, 1
      %p99 = scmp.ne.s32.totalorder %s94, %s96
      %p100 = scmp.eq.s32.totalorder %s18, 0
      %p101 = por %p99, %p100
      %p102 = scmp.ne.s32.totalorder %s94, %s96
      %p103 = scmp.eq.s32.totalorder %s23, 1
      %p104 = por %p102, %p103
      %p105 = scmp.ne.s32.totalorder %s96, %s97
      %p106 = scmp.eq.s32.totalorder %s23, 0
      %p107 = por %p105, %p106
      %p108 = scmp.ne.s32.totalorder %s96, %s97
      %p109 = scmp.eq.s32.totalorder %s24, 1
      %p110 = por %p108, %p109
      %p112 = scmp.ne.s32.totalorder %s97, %s111
      %p113 = scmp.eq.s32.totalorder %s24, 0
      %p114 = por %p112, %p113
      %s116 = sadd.s32 %s115, 1
      %p119 = scmp.eq.s32.totalorder %s18, 1
      %p120 = scmp.ne.s32.totalorder %s115, %s117
      %p121 = scmp.eq.s32.totalorder %s18, 0
      %p122 = por %p120, %p121
      %p123 = scmp.ne.s32.totalorder %s115, %s117
      %p124 = scmp.eq.s32.totalorder %s23, 1
      %p125 = por %p123, %p124
      %p126 = scmp.ne.s32.totalorder %s117, %s118
      %p127 = scmp.eq.s32.totalorder %s23, 0
      %p128 = por %p126, %p127
      %p129 = scmp.ne.s32.totalorder %s117, %s118
      %p130 = scmp.eq.s32.totalorder %s24, 1
      %p131 = por %p129, %p130
      %p133 = scmp.ne.s32.totalorder %s118, %s132
      %p134 = scmp.eq.s32.totalorder %s24, 0
      %p135 = por %p133, %p134
      %s136 = ssub.s32 %s18, %s25
      %p137 = scmp.eq.s32.totalorder %s136, 0
      %s139 = sadd.s32 %s138, 1
      %s140 = scalar_select %p137, %s138, %s139
      %p143 = pneg %p137
      %p144 = scmp.eq.s32.totalorder %s18, 1
      %p145 = por %p143, %p144
      %p146 = scmp.ne.s32.totalorder %s138, %s141
      %p147 = scmp.eq.s32.totalorder %s18, 0
      %p148 = por %p146, %p147
      %p149 = scmp.ne.s32.totalorder %s138, %s141
      %p150 = scmp.eq.s32.totalorder %s23, 1
      %p151 = por %p149, %p150
      %p152 = scmp.ne.s32.totalorder %s141, %s142
      %p153 = scmp.eq.s32.totalorder %s23, 0
      %p154 = por %p152, %p153
      %p155 = scmp.ne.s32.totalorder %s141, %s142
      %p156 = scmp.eq.s32.totalorder %s24, 1
      %p157 = por %p155, %p156
      %p159 = scmp.ne.s32.totalorder %s142, %s158
      %p160 = scmp.eq.s32.totalorder %s24, 0
      %p161 = por %p159, %p160
      %p162 = scmp.le.s32.totalorder 1, %s18
      %p163 = scmp.lt.s32.totalorder %s18, 3
      %p164 = pnand %p162, %p163
      %p165 = pneg %p164
      // Predicated region
      $region9: #{tpu_custom_call.1} parent=5 // pred_check
        _
      $region10: #{tpu_custom_call.1} parent=5 // pred_check_branch
        %167 = sbr.rel (%p164) target = $region12
      $region11: #{tpu_custom_call.1} parent=5 // pred_region
        %s168 = ssub.s32 %s18, 1
        // Predicated region
        $region13: #{tpu_custom_call.1} parent=11 // pred_check
          %p169 = pneg %p65
        $region14: #{tpu_custom_call.1} parent=11 // pred_check_branch
          %171 = sbr.rel (%p169) target = $region16
        $region15: #{tpu_custom_call.1} parent=11 // pred_region
          _
        $region16: #{tpu_custom_call.1} parent=11 // pred_fallthru
          _
        // Predicated region
        $region17: #{tpu_custom_call.1} parent=11 // pred_check
          %p172 = pneg %p86
        $region18: #{tpu_custom_call.1} parent=11 // pred_check_branch
          %174 = sbr.rel (%p172) target = $region20
        $region19: #{tpu_custom_call.1} parent=11 // pred_region
          %s176 = ssub.s32 2560, 2560
          %177 = vsyncadd [#allocation8], %s176
          %s178 = sshll.u32 [#allocation7], 4
          %s179 = int_to_ptr.vmem [resolvable:$true] %s178
          %184 = dma.hbm_to_vmem [thread:$0]  %s2, 2560, %s179, [#allocation8], 320, 320, 20
        $region20: #{tpu_custom_call.1} parent=11 // pred_fallthru
          _
        // Predicated region
        $region21: #{tpu_custom_call.1} parent=11 // pred_check
          %p185 = pneg %p107
        $region22: #{tpu_custom_call.1} parent=11 // pred_check_branch
          %187 = sbr.rel (%p185) target = $region24
        $region23: #{tpu_custom_call.1} parent=11 // pred_region
          %s189 = ssub.s32 2560, 2560
          %190 = vsyncadd [#allocation8], %s189
          %s191 = sshll.u32 [#allocation9], 4
          %s192 = int_to_ptr.vmem [resolvable:$true] %s191
          %197 = dma.hbm_to_vmem [thread:$0]  %s3, 2560, %s192, [#allocation8], 320, 320, 20
        $region24: #{tpu_custom_call.1} parent=11 // pred_fallthru
          _
        // Predicated region
        $region25: #{tpu_custom_call.1} parent=11 // pred_check
          %p198 = pneg %p128
        $region26: #{tpu_custom_call.1} parent=11 // pred_check_branch
          %200 = sbr.rel (%p198) target = $region28
        $region27: #{tpu_custom_call.1} parent=11 // pred_region
          _
        $region28: #{tpu_custom_call.1} parent=11 // pred_fallthru
          _
      $region12: #{tpu_custom_call.1} parent=5 // pred_fallthru
        _
      %p201 = scmp.lt.s32.totalorder %s18, 2
      // Predicated region
      $region29: #{tpu_custom_call.1} parent=5 // pred_check
        %p202 = pneg %p201
      $region30: #{tpu_custom_call.1} parent=5 // pred_check_branch
        %204 = sbr.rel (%p202) target = $region32
      $region31: #{tpu_custom_call.1} parent=5 // pred_region
        // Predicated region
        $region33: #{tpu_custom_call.1} parent=31 // pred_check
          %p205 = pneg %p38
        $region34: #{tpu_custom_call.1} parent=31 // pred_check_branch
          %207 = sbr.rel (%p205) target = $region36
        $region35: #{tpu_custom_call.1} parent=31 // pred_region
          %s208 = sand.u32 %s28, 1
          %s209 = scalar_lea.sflag [#allocation5], %s208
          %s210 = sand.u32 %s28, 1
          %s211 = smul.addr %s210, 256
          %s212 = scalar_lea.vmem [#allocation4], %s211
          %s214 = ssub.s32 4096, 4096
          %215 = vsyncadd %s209, %s214
          %s216 = smul.addr %s18, 32
          %s217 = smul.addr %s216, 128
          %s218 = scalar_lea.hbm %s0, %s217
          %s219 = sshll.u32 %s212, 4
          %s220 = int_to_ptr.vmem [resolvable:$true] %s219
          %225 = dma.hbm_to_vmem [thread:$0]  %s218, 4096, %s220, %s209, 512, 512, 32
        $region36: #{tpu_custom_call.1} parent=31 // pred_fallthru
          _
      $region32: #{tpu_custom_call.1} parent=5 // pred_fallthru
        _
      %p226 = scmp.le.s32.totalorder 1, %s18
      %p227 = scmp.lt.s32.totalorder %s18, 3
      %p228 = pnand %p226, %p227
      %p229 = pneg %p228
      // Predicated region
      $region37: #{tpu_custom_call.1} parent=5 // pred_check
        _
      $region38: #{tpu_custom_call.1} parent=5 // pred_check_branch
        %231 = sbr.rel (%p228) target = $region40
      $region39: #{tpu_custom_call.1} parent=5 // pred_region
        %s232 = ssub.s32 %s18, 1
        %s233 = sand.u32 %s31, 1
        %s234 = scalar_lea.sflag [#allocation5], %s233
        %s235 = sand.u32 %s31, 1
        %s236 = smul.addr %s235, 256
        %s237 = scalar_lea.vmem [#allocation4], %s236
        // Predicated region
        $region41: #{tpu_custom_call.1} parent=39 // pred_check
          %p238 = pneg %p44
        $region42: #{tpu_custom_call.1} parent=39 // pred_check_branch
          %240 = sbr.rel (%p238) target = $region44
        $region43: #{tpu_custom_call.1} parent=39 // pred_region
          %241 = dma.done %s234, 4096
        $region44: #{tpu_custom_call.1} parent=39 // pred_fallthru
          _
        // Predicated region
        $region45: #{tpu_custom_call.1} parent=39 // pred_check
          %p242 = pneg %p86
        $region46: #{tpu_custom_call.1} parent=39 // pred_check_branch
          %244 = sbr.rel (%p242) target = $region48
        $region47: #{tpu_custom_call.1} parent=39 // pred_region
          %245 = dma.done [#allocation8], 2560
        $region48: #{tpu_custom_call.1} parent=39 // pred_fallthru
          _
        // Predicated region
        $region49: #{tpu_custom_call.1} parent=39 // pred_check
          %p246 = pneg %p107
        $region50: #{tpu_custom_call.1} parent=39 // pred_check_branch
          %248 = sbr.rel (%p246) target = $region52
        $region51: #{tpu_custom_call.1} parent=39 // pred_region
          %249 = dma.done [#allocation8], 2560
        $region52: #{tpu_custom_call.1} parent=39 // pred_fallthru
          _
        %s250 = sand.u32 %s31, 1
        %s251 = scalar_lea.sflag [#allocation5], %s250
        %s252 = sand.u32 %s31, 1
        %s253 = smul.addr %s252, 256
        %s254 = scalar_lea.vmem [#allocation4], %s253
        %p255 = pneg %p44
        %p256 = pneg %p41
        %p257 = pneg %p65
        %p258 = pneg %p62
        %p259 = pneg %p86
        %p260 = pneg %p83
        %p261 = pneg %p107
        %p262 = pneg %p104
        %p263 = pneg %p128
        %p264 = pneg %p125
        %p265 = pneg %p154
        %p266 = pneg %p151
        %s267 = sand.u32 %s141, 1
        %s268 = scalar_lea.sflag [#allocation6], %s267
        %s269 = sand.u32 %s141, 1
        %s270 = smul.addr %s269, 192
        %s271 = scalar_lea.vmem [#allocation10], %s270
        %v273 = vld [vmem:[%s1] sm:$0x7]
        %v274 = vld [vmem:[%s237] sm:$0xff]
        %v275 = vld [vmem:[%s237 + $0x8] sm:$0xff]
        %v276 = vld [vmem:[%s237 + $0x10] sm:$0xff]
        %v277 = vld [vmem:[%s237 + $0x20] sm:$0xff]
        %v278 = vld [vmem:[%s237 + $0x28] sm:$0xff]
        %v279 = vld [vmem:[%s237 + $0x30] sm:$0xff]
        %v280 = vld [vmem:[%s237 + $0x40] sm:$0xff]
        %v281 = vld [vmem:[%s237 + $0x48] sm:$0xff]
        %v282 = vld [vmem:[%s237 + $0x50] sm:$0xff]
        %v283 = vld [vmem:[%s237 + $0x60] sm:$0xff]
        %v284 = vld [vmem:[%s237 + $0x68] sm:$0xff]
        %v285 = vld [vmem:[%s237 + $0x70] sm:$0xff]
        %v286 = vld [vmem:[%s237 + $0x80] sm:$0xff]
        %v287 = vld [vmem:[%s237 + $0x88] sm:$0xff]
        %v288 = vld [vmem:[%s237 + $0x90] sm:$0xff]
        %v289 = vld [vmem:[%s237 + $0xa0] sm:$0xff]
        %v290 = vld [vmem:[%s237 + $0xa8] sm:$0xff]
        %v291 = vld [vmem:[%s237 + $0xb0] sm:$0xff]
        %v292 = vld [vmem:[%s237 + $0xc0] sm:$0xff]
        %v293 = vld [vmem:[%s237 + $0xc8] sm:$0xff]
        %v294 = vld [vmem:[%s237 + $0xd0] sm:$0xff]
        %v295 = vld [vmem:[%s237 + $0xe0] sm:$0xff]
        %v296 = vld [vmem:[%s237 + $0xe8] sm:$0xff]
        %v297 = vld [vmem:[%s237 + $0xf0] sm:$0xff]
        %v298 = vpack.c.bf16 %v277, %v274
        %v299 = vpack.c.bf16 %v278, %v275
        %v300 = vpack.c.bf16 %v279, %v276
        %v301 = vpack.c.bf16 %v283, %v280
        %v302 = vpack.c.bf16 %v284, %v281
        %v303 = vpack.c.bf16 %v285, %v282
        %v304 = vpack.c.bf16 %v289, %v286
        %v305 = vpack.c.bf16 %v290, %v287
        %v306 = vpack.c.bf16 %v291, %v288
        %v307 = vpack.c.bf16 %v295, %v292
        %v308 = vpack.c.bf16 %v296, %v293
        %v309 = vpack.c.bf16 %v297, %v294
        %310 = vst [vmem:[#allocation2] sm:$0xff] %v298
        %311 = vst [vmem:[#allocation2 + $0x8] sm:$0xff] %v299
        %312 = vst [vmem:[#allocation2 + $0x10] sm:$0xff] %v300
        %313 = vst [vmem:[#allocation2 + $0x18] sm:$0xff] %v301
        %314 = vst [vmem:[#allocation2 + $0x20] sm:$0xff] %v302
        %315 = vst [vmem:[#allocation2 + $0x28] sm:$0xff] %v303
        %316 = vst [vmem:[#allocation2 + $0x30] sm:$0xff] %v304
        %317 = vst [vmem:[#allocation2 + $0x38] sm:$0xff] %v305
        %318 = vst [vmem:[#allocation2 + $0x40] sm:$0xff] %v306
        %319 = vst [vmem:[#allocation2 + $0x48] sm:$0xff] %v307
        %320 = vst [vmem:[#allocation2 + $0x50] sm:$0xff] %v308
        %321 = vst [vmem:[#allocation2 + $0x58] sm:$0xff] %v309
        %v322 = vld [vmem:[%s237] sm:$0xff]
        %v323 = vld [vmem:[%s237 + $0x8] sm:$0xff]
        %v324 = vld [vmem:[%s237 + $0x10] sm:$0xff]
        %v325 = vld [vmem:[%s237 + $0x18] sm:$0xff]
        %v326 = vld [vmem:[%s237 + $0x20] sm:$0xff]
        %v327 = vld [vmem:[%s237 + $0x28] sm:$0xff]
        %v328 = vld [vmem:[%s237 + $0x30] sm:$0xff]
        %v329 = vld [vmem:[%s237 + $0x38] sm:$0xff]
        %v330 = vld [vmem:[%s237 + $0x40] sm:$0xff]
        %v331 = vld [vmem:[%s237 + $0x48] sm:$0xff]
        %v332 = vld [vmem:[%s237 + $0x50] sm:$0xff]
        %v333 = vld [vmem:[%s237 + $0x58] sm:$0xff]
        %v334 = vld [vmem:[%s237 + $0x60] sm:$0xff]
        %v335 = vld [vmem:[%s237 + $0x68] sm:$0xff]
        %v336 = vld [vmem:[%s237 + $0x70] sm:$0xff]
        %v337 = vld [vmem:[%s237 + $0x78] sm:$0xff]
        %v338 = vld [vmem:[%s237 + $0x80] sm:$0xff]
        %v339 = vld [vmem:[%s237 + $0x88] sm:$0xff]
        %v340 = vld [vmem:[%s237 + $0x90] sm:$0xff]
        %v341 = vld [vmem:[%s237 + $0x98] sm:$0xff]
        %v342 = vld [vmem:[%s237 + $0xa0] sm:$0xff]
        %v343 = vld [vmem:[%s237 + $0xa8] sm:$0xff]
        %v344 = vld [vmem:[%s237 + $0xb0] sm:$0xff]
        %v345 = vld [vmem:[%s237 + $0xb8] sm:$0xff]
        %v346 = vld [vmem:[%s237 + $0xc0] sm:$0xff]
        %v347 = vld [vmem:[%s237 + $0xc8] sm:$0xff]
        %v348 = vld [vmem:[%s237 + $0xd0] sm:$0xff]
        %v349 = vld [vmem:[%s237 + $0xd8] sm:$0xff]
        %v350 = vld [vmem:[%s237 + $0xe0] sm:$0xff]
        %v351 = vld [vmem:[%s237 + $0xe8] sm:$0xff]
        %v352 = vld [vmem:[%s237 + $0xf0] sm:$0xff]
        %v353 = vld [vmem:[%s237 + $0xf8] sm:$0xff]
        %v354 = vpack.c.bf16 %v326, %v322
        %v355 = vpack.c.bf16 %v327, %v323
        %v356 = vpack.c.bf16 %v328, %v324
        %v357 = vpack.c.bf16 %v329, %v325
        %v358 = vpack.c.bf16 %v334, %v330
        %v359 = vpack.c.bf16 %v335, %v331
        %v360 = vpack.c.bf16 %v336, %v332
        %v361 = vpack.c.bf16 %v337, %v333
        %v362 = vpack.c.bf16 %v342, %v338
        %v363 = vpack.c.bf16 %v343, %v339
        %v364 = vpack.c.bf16 %v344, %v340
        %v365 = vpack.c.bf16 %v345, %v341
        %v366 = vpack.c.bf16 %v350, %v346
        %v367 = vpack.c.bf16 %v351, %v347
        %v368 = vpack.c.bf16 %v352, %v348
        %v369 = vpack.c.bf16 %v353, %v349
        %386 = vrot.lane.b32.xlu0 %v354, 127
        %v387 = vpop.permute.xlu0 %386
        %388 = vrot.lane.b32.xlu0 %v355, 127
        %v389 = vpop.permute.xlu0 %388
        %390 = vrot.lane.b32.xlu0 %v356, 127
        %v391 = vpop.permute.xlu0 %390
        %392 = vrot.lane.b32.xlu0 %v357, 127
        %v393 = vpop.permute.xlu0 %392
        %394 = vrot.lane.b32.xlu0 %v358, 127
        %v395 = vpop.permute.xlu0 %394
        %396 = vrot.lane.b32.xlu0 %v359, 127
        %v397 = vpop.permute.xlu0 %396
        %398 = vrot.lane.b32.xlu0 %v360, 127
        %v399 = vpop.permute.xlu0 %398
        %400 = vrot.lane.b32.xlu0 %v361, 127
        %v401 = vpop.permute.xlu0 %400
        %402 = vrot.lane.b32.xlu0 %v362, 127
        %v403 = vpop.permute.xlu0 %402
        %404 = vrot.lane.b32.xlu0 %v363, 127
        %v405 = vpop.permute.xlu0 %404
        %406 = vrot.lane.b32.xlu0 %v364, 127
        %v407 = vpop.permute.xlu0 %406
        %408 = vrot.lane.b32.xlu0 %v365, 127
        %v409 = vpop.permute.xlu0 %408
        %410 = vrot.lane.b32.xlu0 %v366, 127
        %v411 = vpop.permute.xlu0 %410
        %412 = vrot.lane.b32.xlu0 %v367, 127
        %v413 = vpop.permute.xlu0 %412
        %414 = vrot.lane.b32.xlu0 %v368, 127
        %v415 = vpop.permute.xlu0 %414
        %416 = vrot.lane.b32.xlu0 %v369, 127
        %v417 = vpop.permute.xlu0 %416
        %vm418 = vcmask 1039360
        %v419 = vsel %vm418, %v387, %v389
        %v420 = vsel %vm418, %v389, %v391
        %v421 = vsel %vm418, %v391, %v393
        %v422 = vsel %vm418, %v395, %v397
        %v423 = vsel %vm418, %v397, %v399
        %v424 = vsel %vm418, %v399, %v401
        %v425 = vsel %vm418, %v403, %v405
        %v426 = vsel %vm418, %v405, %v407
        %v427 = vsel %vm418, %v407, %v409
        %v428 = vsel %vm418, %v411, %v413
        %v429 = vsel %vm418, %v413, %v415
        %v430 = vsel %vm418, %v415, %v417
        %443 = vst [vmem:[#allocation2 + $0x60] sm:$0xff] %v419
        %444 = vst [vmem:[#allocation2 + $0x68] sm:$0xff] %v420
        %445 = vst [vmem:[#allocation2 + $0x70] sm:$0xff] %v421
        %446 = vst [vmem:[#allocation2 + $0x78] sm:$0xff] %v422
        %447 = vst [vmem:[#allocation2 + $0x80] sm:$0xff] %v423
        %448 = vst [vmem:[#allocation2 + $0x88] sm:$0xff] %v424
        %449 = vst [vmem:[#allocation2 + $0x90] sm:$0xff] %v425
        %450 = vst [vmem:[#allocation2 + $0x98] sm:$0xff] %v426
        %451 = vst [vmem:[#allocation2 + $0xa0] sm:$0xff] %v427
        %452 = vst [vmem:[#allocation2 + $0xa8] sm:$0xff] %v428
        %453 = vst [vmem:[#allocation2 + $0xb0] sm:$0xff] %v429
        %454 = vst [vmem:[#allocation2 + $0xb8] sm:$0xff] %v430
        %v455 = vld [vmem:[%s237] sm:$0xff]
        %v456 = vld [vmem:[%s237 + $0x8] sm:$0xff]
        %v457 = vld [vmem:[%s237 + $0x10] sm:$0xff]
        %v458 = vld [vmem:[%s237 + $0x18] sm:$0xff]
        %v459 = vld [vmem:[%s237 + $0x20] sm:$0xff]
        %v460 = vld [vmem:[%s237 + $0x28] sm:$0xff]
        %v461 = vld [vmem:[%s237 + $0x30] sm:$0xff]
        %v462 = vld [vmem:[%s237 + $0x38] sm:$0xff]
        %v463 = vld [vmem:[%s237 + $0x40] sm:$0xff]
        %v464 = vld [vmem:[%s237 + $0x48] sm:$0xff]
        %v465 = vld [vmem:[%s237 + $0x50] sm:$0xff]
        %v466 = vld [vmem:[%s237 + $0x58] sm:$0xff]
        %v467 = vld [vmem:[%s237 + $0x60] sm:$0xff]
        %v468 = vld [vmem:[%s237 + $0x68] sm:$0xff]
        %v469 = vld [vmem:[%s237 + $0x70] sm:$0xff]
        %v470 = vld [vmem:[%s237 + $0x78] sm:$0xff]
        %v471 = vld [vmem:[%s237 + $0x80] sm:$0xff]
        %v472 = vld [vmem:[%s237 + $0x88] sm:$0xff]
        %v473 = vld [vmem:[%s237 + $0x90] sm:$0xff]
        %v474 = vld [vmem:[%s237 + $0x98] sm:$0xff]
        %v475 = vld [vmem:[%s237 + $0xa0] sm:$0xff]
        %v476 = vld [vmem:[%s237 + $0xa8] sm:$0xff]
        %v477 = vld [vmem:[%s237 + $0xb0] sm:$0xff]
        %v478 = vld [vmem:[%s237 + $0xb8] sm:$0xff]
        %v479 = vld [vmem:[%s237 + $0xc0] sm:$0xff]
        %v480 = vld [vmem:[%s237 + $0xc8] sm:$0xff]
        %v481 = vld [vmem:[%s237 + $0xd0] sm:$0xff]
        %v482 = vld [vmem:[%s237 + $0xd8] sm:$0xff]
        %v483 = vld [vmem:[%s237 + $0xe0] sm:$0xff]
        %v484 = vld [vmem:[%s237 + $0xe8] sm:$0xff]
        %v485 = vld [vmem:[%s237 + $0xf0] sm:$0xff]
        %v486 = vld [vmem:[%s237 + $0xf8] sm:$0xff]
        %v487 = vpack.c.bf16 %v459, %v455
        %v488 = vpack.c.bf16 %v460, %v456
        %v489 = vpack.c.bf16 %v461, %v457
        %v490 = vpack.c.bf16 %v462, %v458
        %v491 = vpack.c.bf16 %v467, %v463
        %v492 = vpack.c.bf16 %v468, %v464
        %v493 = vpack.c.bf16 %v469, %v465
        %v494 = vpack.c.bf16 %v470, %v466
        %v495 = vpack.c.bf16 %v475, %v471
        %v496 = vpack.c.bf16 %v476, %v472
        %v497 = vpack.c.bf16 %v477, %v473
        %v498 = vpack.c.bf16 %v478, %v474
        %v499 = vpack.c.bf16 %v483, %v479
        %v500 = vpack.c.bf16 %v484, %v480
        %v501 = vpack.c.bf16 %v485, %v481
        %v502 = vpack.c.bf16 %v486, %v482
        %519 = vrot.lane.b32.xlu0 %v487, 126
        %v520 = vpop.permute.xlu0 %519
        %521 = vrot.lane.b32.xlu0 %v488, 126
        %v522 = vpop.permute.xlu0 %521
        %523 = vrot.lane.b32.xlu0 %v489, 126
        %v524 = vpop.permute.xlu0 %523
        %525 = vrot.lane.b32.xlu0 %v490, 126
        %v526 = vpop.permute.xlu0 %525
        %527 = vrot.lane.b32.xlu0 %v491, 126
        %v528 = vpop.permute.xlu0 %527
        %529 = vrot.lane.b32.xlu0 %v492, 126
        %v530 = vpop.permute.xlu0 %529
        %531 = vrot.lane.b32.xlu0 %v493, 126
        %v532 = vpop.permute.xlu0 %531
        %533 = vrot.lane.b32.xlu0 %v494, 126
        %v534 = vpop.permute.xlu0 %533
        %535 = vrot.lane.b32.xlu0 %v495, 126
        %v536 = vpop.permute.xlu0 %535
        %537 = vrot.lane.b32.xlu0 %v496, 126
        %v538 = vpop.permute.xlu0 %537
        %539 = vrot.lane.b32.xlu0 %v497, 126
        %v540 = vpop.permute.xlu0 %539
        %541 = vrot.lane.b32.xlu0 %v498, 126
        %v542 = vpop.permute.xlu0 %541
        %543 = vrot.lane.b32.xlu0 %v499, 126
        %v544 = vpop.permute.xlu0 %543
        %545 = vrot.lane.b32.xlu0 %v500, 126
        %v546 = vpop.permute.xlu0 %545
        %547 = vrot.lane.b32.xlu0 %v501, 126
        %v548 = vpop.permute.xlu0 %547
        %549 = vrot.lane.b32.xlu0 %v502, 126
        %v550 = vpop.permute.xlu0 %549
        %vm551 = vcmask 1031168
        %v552 = vsel %vm551, %v520, %v522
        %v553 = vsel %vm551, %v522, %v524
        %v554 = vsel %vm551, %v524, %v526
        %v555 = vsel %vm551, %v528, %v530
        %v556 = vsel %vm551, %v530, %v532
        %v557 = vsel %vm551, %v532, %v534
        %v558 = vsel %vm551, %v536, %v538
        %v559 = vsel %vm551, %v538, %v540
        %v560 = vsel %vm551, %v540, %v542
        %v561 = vsel %vm551, %v544, %v546
        %v562 = vsel %vm551, %v546, %v548
        %v563 = vsel %vm551, %v548, %v550
        %576 = vst [vmem:[#allocation2 + $0xc0] sm:$0xff] %v552
        %577 = vst [vmem:[#allocation2 + $0xc8] sm:$0xff] %v553
        %578 = vst [vmem:[#allocation2 + $0xd0] sm:$0xff] %v554
        %579 = vst [vmem:[#allocation2 + $0xd8] sm:$0xff] %v555
        %580 = vst [vmem:[#allocation2 + $0xe0] sm:$0xff] %v556
        %581 = vst [vmem:[#allocation2 + $0xe8] sm:$0xff] %v557
        %582 = vst [vmem:[#allocation2 + $0xf0] sm:$0xff] %v558
        %583 = vst [vmem:[#allocation2 + $0xf8] sm:$0xff] %v559
        %584 = vst [vmem:[#allocation2 + $0x100] sm:$0xff] %v560
        %585 = vst [vmem:[#allocation2 + $0x108] sm:$0xff] %v561
        %586 = vst [vmem:[#allocation2 + $0x110] sm:$0xff] %v562
        %587 = vst [vmem:[#allocation2 + $0x118] sm:$0xff] %v563
        %v588 = vld [vmem:[%s237] sm:$0xff]
        %v589 = vld [vmem:[%s237 + $0x8] sm:$0xff]
        %v590 = vld [vmem:[%s237 + $0x10] sm:$0xff]
        %v591 = vld [vmem:[%s237 + $0x18] sm:$0xff]
        %v592 = vld [vmem:[%s237 + $0x20] sm:$0xff]
        %v593 = vld [vmem:[%s237 + $0x28] sm:$0xff]
        %v594 = vld [vmem:[%s237 + $0x30] sm:$0xff]
        %v595 = vld [vmem:[%s237 + $0x38] sm:$0xff]
        %v596 = vld [vmem:[%s237 + $0x40] sm:$0xff]
        %v597 = vld [vmem:[%s237 + $0x48] sm:$0xff]
        %v598 = vld [vmem:[%s237 + $0x50] sm:$0xff]
        %v599 = vld [vmem:[%s237 + $0x58] sm:$0xff]
        %v600 = vld [vmem:[%s237 + $0x60] sm:$0xff]
        %v601 = vld [vmem:[%s237 + $0x68] sm:$0xff]
        %v602 = vld [vmem:[%s237 + $0x70] sm:$0xff]
        %v603 = vld [vmem:[%s237 + $0x78] sm:$0xff]
        %v604 = vld [vmem:[%s237 + $0x80] sm:$0xff]
        %v605 = vld [vmem:[%s237 + $0x88] sm:$0xff]
        %v606 = vld [vmem:[%s237 + $0x90] sm:$0xff]
        %v607 = vld [vmem:[%s237 + $0x98] sm:$0xff]
        %v608 = vld [vmem:[%s237 + $0xa0] sm:$0xff]
        %v609 = vld [vmem:[%s237 + $0xa8] sm:$0xff]
        %v610 = vld [vmem:[%s237 + $0xb0] sm:$0xff]
        %v611 = vld [vmem:[%s237 + $0xb8] sm:$0xff]
        %v612 = vld [vmem:[%s237 + $0xc0] sm:$0xff]
        %v613 = vld [vmem:[%s237 + $0xc8] sm:$0xff]
        %v614 = vld [vmem:[%s237 + $0xd0] sm:$0xff]
        %v615 = vld [vmem:[%s237 + $0xd8] sm:$0xff]
        %v616 = vld [vmem:[%s237 + $0xe0] sm:$0xff]
        %v617 = vld [vmem:[%s237 + $0xe8] sm:$0xff]
        %v618 = vld [vmem:[%s237 + $0xf0] sm:$0xff]
        %v619 = vld [vmem:[%s237 + $0xf8] sm:$0xff]
        %v620 = vpack.c.bf16 %v592, %v588
        %v621 = vpack.c.bf16 %v593, %v589
        %v622 = vpack.c.bf16 %v594, %v590
        %v623 = vpack.c.bf16 %v595, %v591
        %v624 = vpack.c.bf16 %v600, %v596
        %v625 = vpack.c.bf16 %v601, %v597
        %v626 = vpack.c.bf16 %v602, %v598
        %v627 = vpack.c.bf16 %v603, %v599
        %v628 = vpack.c.bf16 %v608, %v604
        %v629 = vpack.c.bf16 %v609, %v605
        %v630 = vpack.c.bf16 %v610, %v606
        %v631 = vpack.c.bf16 %v611, %v607
        %v632 = vpack.c.bf16 %v616, %v612
        %v633 = vpack.c.bf16 %v617, %v613
        %v634 = vpack.c.bf16 %v618, %v614
        %v635 = vpack.c.bf16 %v619, %v615
        %652 = vrot.lane.b32.xlu0 %v620, 110
        %v653 = vpop.permute.xlu0 %652
        %654 = vrot.lane.b32.xlu0 %v621, 110
        %v655 = vpop.permute.xlu0 %654
        %656 = vrot.lane.b32.xlu0 %v622, 110
        %v657 = vpop.permute.xlu0 %656
        %658 = vrot.lane.b32.xlu0 %v623, 110
        %v659 = vpop.permute.xlu0 %658
        %660 = vrot.lane.b32.xlu0 %v624, 110
        %v661 = vpop.permute.xlu0 %660
        %662 = vrot.lane.b32.xlu0 %v625, 110
        %v663 = vpop.permute.xlu0 %662
        %664 = vrot.lane.b32.xlu0 %v626, 110
        %v665 = vpop.permute.xlu0 %664
        %666 = vrot.lane.b32.xlu0 %v627, 110
        %v667 = vpop.permute.xlu0 %666
        %668 = vrot.lane.b32.xlu0 %v628, 110
        %v669 = vpop.permute.xlu0 %668
        %670 = vrot.lane.b32.xlu0 %v629, 110
        %v671 = vpop.permute.xlu0 %670
        %672 = vrot.lane.b32.xlu0 %v630, 110
        %v673 = vpop.permute.xlu0 %672
        %674 = vrot.lane.b32.xlu0 %v631, 110
        %v675 = vpop.permute.xlu0 %674
        %676 = vrot.lane.b32.xlu0 %v632, 110
        %v677 = vpop.permute.xlu0 %676
        %678 = vrot.lane.b32.xlu0 %v633, 110
        %v679 = vpop.permute.xlu0 %678
        %680 = vrot.lane.b32.xlu0 %v634, 110
        %v681 = vpop.permute.xlu0 %680
        %682 = vrot.lane.b32.xlu0 %v635, 110
        %v683 = vpop.permute.xlu0 %682
        %vm684 = vcmask 900096
        %v685 = vsel %vm684, %v653, %v655
        %v686 = vsel %vm684, %v655, %v657
        %v687 = vsel %vm684, %v657, %v659
        %v688 = vsel %vm684, %v661, %v663
        %v689 = vsel %vm684, %v663, %v665
        %v690 = vsel %vm684, %v665, %v667
        %v691 = vsel %vm684, %v669, %v671
        %v692 = vsel %vm684, %v671, %v673
        %v693 = vsel %vm684, %v673, %v675
        %v694 = vsel %vm684, %v677, %v679
        %v695 = vsel %vm684, %v679, %v681
        %v696 = vsel %vm684, %v681, %v683
        %709 = vst [vmem:[#allocation2 + $0x120] sm:$0xff] %v685
        %710 = vst [vmem:[#allocation2 + $0x128] sm:$0xff] %v686
        %711 = vst [vmem:[#allocation2 + $0x130] sm:$0xff] %v687
        %712 = vst [vmem:[#allocation2 + $0x138] sm:$0xff] %v688
        %713 = vst [vmem:[#allocation2 + $0x140] sm:$0xff] %v689
        %714 = vst [vmem:[#allocation2 + $0x148] sm:$0xff] %v690
        %715 = vst [vmem:[#allocation2 + $0x150] sm:$0xff] %v691
        %716 = vst [vmem:[#allocation2 + $0x158] sm:$0xff] %v692
        %717 = vst [vmem:[#allocation2 + $0x160] sm:$0xff] %v693
        %718 = vst [vmem:[#allocation2 + $0x168] sm:$0xff] %v694
        %719 = vst [vmem:[#allocation2 + $0x170] sm:$0xff] %v695
        %720 = vst [vmem:[#allocation2 + $0x178] sm:$0xff] %v696
        %v721 = vld [vmem:[%s237] sm:$0xff]
        %v722 = vld [vmem:[%s237 + $0x8] sm:$0xff]
        %v723 = vld [vmem:[%s237 + $0x10] sm:$0xff]
        %v724 = vld [vmem:[%s237 + $0x18] sm:$0xff]
        %v725 = vld [vmem:[%s237 + $0x20] sm:$0xff]
        %v726 = vld [vmem:[%s237 + $0x28] sm:$0xff]
        %v727 = vld [vmem:[%s237 + $0x30] sm:$0xff]
        %v728 = vld [vmem:[%s237 + $0x38] sm:$0xff]
        %v729 = vld [vmem:[%s237 + $0x40] sm:$0xff]
        %v730 = vld [vmem:[%s237 + $0x48] sm:$0xff]
        %v731 = vld [vmem:[%s237 + $0x50] sm:$0xff]
        %v732 = vld [vmem:[%s237 + $0x58] sm:$0xff]
        %v733 = vld [vmem:[%s237 + $0x60] sm:$0xff]
        %v734 = vld [vmem:[%s237 + $0x68] sm:$0xff]
        %v735 = vld [vmem:[%s237 + $0x70] sm:$0xff]
        %v736 = vld [vmem:[%s237 + $0x78] sm:$0xff]
        %v737 = vld [vmem:[%s237 + $0x80] sm:$0xff]
        %v738 = vld [vmem:[%s237 + $0x88] sm:$0xff]
        %v739 = vld [vmem:[%s237 + $0x90] sm:$0xff]
        %v740 = vld [vmem:[%s237 + $0x98] sm:$0xff]
        %v741 = vld [vmem:[%s237 + $0xa0] sm:$0xff]
        %v742 = vld [vmem:[%s237 + $0xa8] sm:$0xff]
        %v743 = vld [vmem:[%s237 + $0xb0] sm:$0xff]
        %v744 = vld [vmem:[%s237 + $0xb8] sm:$0xff]
        %v745 = vld [vmem:[%s237 + $0xc0] sm:$0xff]
        %v746 = vld [vmem:[%s237 + $0xc8] sm:$0xff]
        %v747 = vld [vmem:[%s237 + $0xd0] sm:$0xff]
        %v748 = vld [vmem:[%s237 + $0xd8] sm:$0xff]
        %v749 = vld [vmem:[%s237 + $0xe0] sm:$0xff]
        %v750 = vld [vmem:[%s237 + $0xe8] sm:$0xff]
        %v751 = vld [vmem:[%s237 + $0xf0] sm:$0xff]
        %v752 = vld [vmem:[%s237 + $0xf8] sm:$0xff]
        %v753 = vpack.c.bf16 %v725, %v721
        %v754 = vpack.c.bf16 %v726, %v722
        %v755 = vpack.c.bf16 %v727, %v723
        %v756 = vpack.c.bf16 %v728, %v724
        %v757 = vpack.c.bf16 %v733, %v729
        %v758 = vpack.c.bf16 %v734, %v730
        %v759 = vpack.c.bf16 %v735, %v731
        %v760 = vpack.c.bf16 %v736, %v732
        %v761 = vpack.c.bf16 %v741, %v737
        %v762 = vpack.c.bf16 %v742, %v738
        %v763 = vpack.c.bf16 %v743, %v739
        %v764 = vpack.c.bf16 %v744, %v740
        %v765 = vpack.c.bf16 %v749, %v745
        %v766 = vpack.c.bf16 %v750, %v746
        %v767 = vpack.c.bf16 %v751, %v747
        %v768 = vpack.c.bf16 %v752, %v748
        %785 = vrot.lane.b32.xlu0 %v753, 109
        %v786 = vpop.permute.xlu0 %785
        %787 = vrot.lane.b32.xlu0 %v754, 109
        %v788 = vpop.permute.xlu0 %787
        %789 = vrot.lane.b32.xlu0 %v755, 109
        %v790 = vpop.permute.xlu0 %789
        %791 = vrot.lane.b32.xlu0 %v756, 109
        %v792 = vpop.permute.xlu0 %791
        %793 = vrot.lane.b32.xlu0 %v757, 109
        %v794 = vpop.permute.xlu0 %793
        %795 = vrot.lane.b32.xlu0 %v758, 109
        %v796 = vpop.permute.xlu0 %795
        %797 = vrot.lane.b32.xlu0 %v759, 109
        %v798 = vpop.permute.xlu0 %797
        %799 = vrot.lane.b32.xlu0 %v760, 109
        %v800 = vpop.permute.xlu0 %799
        %801 = vrot.lane.b32.xlu0 %v761, 109
        %v802 = vpop.permute.xlu0 %801
        %803 = vrot.lane.b32.xlu0 %v762, 109
        %v804 = vpop.permute.xlu0 %803
        %805 = vrot.lane.b32.xlu0 %v763, 109
        %v806 = vpop.permute.xlu0 %805
        %807 = vrot.lane.b32.xlu0 %v764, 109
        %v808 = vpop.permute.xlu0 %807
        %809 = vrot.lane.b32.xlu0 %v765, 109
        %v810 = vpop.permute.xlu0 %809
        %811 = vrot.lane.b32.xlu0 %v766, 109
        %v812 = vpop.permute.xlu0 %811
        %813 = vrot.lane.b32.xlu0 %v767, 109
        %v814 = vpop.permute.xlu0 %813
        %815 = vrot.lane.b32.xlu0 %v768, 109
        %v816 = vpop.permute.xlu0 %815
        %vm817 = vcmask 891904
        %v818 = vsel %vm817, %v786, %v788
        %v819 = vsel %vm817, %v788, %v790
        %v820 = vsel %vm817, %v790, %v792
        %v821 = vsel %vm817, %v794, %v796
        %v822 = vsel %vm817, %v796, %v798
        %v823 = vsel %vm817, %v798, %v800
        %v824 = vsel %vm817, %v802, %v804
        %v825 = vsel %vm817, %v804, %v806
        %v826 = vsel %vm817, %v806, %v808
        %v827 = vsel %vm817, %v810, %v812
        %v828 = vsel %vm817, %v812, %v814
        %v829 = vsel %vm817, %v814, %v816
        %842 = vst [vmem:[#allocation2 + $0x180] sm:$0xff] %v818
        %843 = vst [vmem:[#allocation2 + $0x188] sm:$0xff] %v819
        %844 = vst [vmem:[#allocation2 + $0x190] sm:$0xff] %v820
        %845 = vst [vmem:[#allocation2 + $0x198] sm:$0xff] %v821
        %846 = vst [vmem:[#allocation2 + $0x1a0] sm:$0xff] %v822
        %847 = vst [vmem:[#allocation2 + $0x1a8] sm:$0xff] %v823
        %848 = vst [vmem:[#allocation2 + $0x1b0] sm:$0xff] %v824
        %849 = vst [vmem:[#allocation2 + $0x1b8] sm:$0xff] %v825
        %850 = vst [vmem:[#allocation2 + $0x1c0] sm:$0xff] %v826
        %851 = vst [vmem:[#allocation2 + $0x1c8] sm:$0xff] %v827
        %852 = vst [vmem:[#allocation2 + $0x1d0] sm:$0xff] %v828
        %853 = vst [vmem:[#allocation2 + $0x1d8] sm:$0xff] %v829
        %v854 = vld [vmem:[%s237] sm:$0xff]
        %v855 = vld [vmem:[%s237 + $0x8] sm:$0xff]
        %v856 = vld [vmem:[%s237 + $0x10] sm:$0xff]
        %v857 = vld [vmem:[%s237 + $0x18] sm:$0xff]
        %v858 = vld [vmem:[%s237 + $0x20] sm:$0xff]
        %v859 = vld [vmem:[%s237 + $0x28] sm:$0xff]
        %v860 = vld [vmem:[%s237 + $0x30] sm:$0xff]
        %v861 = vld [vmem:[%s237 + $0x38] sm:$0xff]
        %v862 = vld [vmem:[%s237 + $0x40] sm:$0xff]
        %v863 = vld [vmem:[%s237 + $0x48] sm:$0xff]
        %v864 = vld [vmem:[%s237 + $0x50] sm:$0xff]
        %v865 = vld [vmem:[%s237 + $0x58] sm:$0xff]
        %v866 = vld [vmem:[%s237 + $0x60] sm:$0xff]
        %v867 = vld [vmem:[%s237 + $0x68] sm:$0xff]
        %v868 = vld [vmem:[%s237 + $0x70] sm:$0xff]
        %v869 = vld [vmem:[%s237 + $0x78] sm:$0xff]
        %v870 = vld [vmem:[%s237 + $0x80] sm:$0xff]
        %v871 = vld [vmem:[%s237 + $0x88] sm:$0xff]
        %v872 = vld [vmem:[%s237 + $0x90] sm:$0xff]
        %v873 = vld [vmem:[%s237 + $0x98] sm:$0xff]
        %v874 = vld [vmem:[%s237 + $0xa0] sm:$0xff]
        %v875 = vld [vmem:[%s237 + $0xa8] sm:$0xff]
        %v876 = vld [vmem:[%s237 + $0xb0] sm:$0xff]
        %v877 = vld [vmem:[%s237 + $0xb8] sm:$0xff]
        %v878 = vld [vmem:[%s237 + $0xc0] sm:$0xff]
        %v879 = vld [vmem:[%s237 + $0xc8] sm:$0xff]
        %v880 = vld [vmem:[%s237 + $0xd0] sm:$0xff]
        %v881 = vld [vmem:[%s237 + $0xd8] sm:$0xff]
        %v882 = vld [vmem:[%s237 + $0xe0] sm:$0xff]
        %v883 = vld [vmem:[%s237 + $0xe8] sm:$0xff]
        %v884 = vld [vmem:[%s237 + $0xf0] sm:$0xff]
        %v885 = vld [vmem:[%s237 + $0xf8] sm:$0xff]
        %v886 = vpack.c.bf16 %v858, %v854
        %v887 = vpack.c.bf16 %v859, %v855
        %v888 = vpack.c.bf16 %v860, %v856
        %v889 = vpack.c.bf16 %v861, %v857
        %v890 = vpack.c.bf16 %v866, %v862
        %v891 = vpack.c.bf16 %v867, %v863
        %v892 = vpack.c.bf16 %v868, %v864
        %v893 = vpack.c.bf16 %v869, %v865
        %v894 = vpack.c.bf16 %v874, %v870
        %v895 = vpack.c.bf16 %v875, %v871
        %v896 = vpack.c.bf16 %v876, %v872
        %v897 = vpack.c.bf16 %v877, %v873
        %v898 = vpack.c.bf16 %v882, %v878
        %v899 = vpack.c.bf16 %v883, %v879
        %v900 = vpack.c.bf16 %v884, %v880
        %v901 = vpack.c.bf16 %v885, %v881
        %918 = vrot.lane.b32.xlu0 %v886, 108
        %v919 = vpop.permute.xlu0 %918
        %920 = vrot.lane.b32.xlu0 %v887, 108
        %v921 = vpop.permute.xlu0 %920
        %922 = vrot.lane.b32.xlu0 %v888, 108
        %v923 = vpop.permute.xlu0 %922
        %924 = vrot.lane.b32.xlu0 %v889, 108
        %v925 = vpop.permute.xlu0 %924
        %926 = vrot.lane.b32.xlu0 %v890, 108
        %v927 = vpop.permute.xlu0 %926
        %928 = vrot.lane.b32.xlu0 %v891, 108
        %v929 = vpop.permute.xlu0 %928
        %930 = vrot.lane.b32.xlu0 %v892, 108
        %v931 = vpop.permute.xlu0 %930
        %932 = vrot.lane.b32.xlu0 %v893, 108
        %v933 = vpop.permute.xlu0 %932
        %934 = vrot.lane.b32.xlu0 %v894, 108
        %v935 = vpop.permute.xlu0 %934
        %936 = vrot.lane.b32.xlu0 %v895, 108
        %v937 = vpop.permute.xlu0 %936
        %938 = vrot.lane.b32.xlu0 %v896, 108
        %v939 = vpop.permute.xlu0 %938
        %940 = vrot.lane.b32.xlu0 %v897, 108
        %v941 = vpop.permute.xlu0 %940
        %942 = vrot.lane.b32.xlu0 %v898, 108
        %v943 = vpop.permute.xlu0 %942
        %944 = vrot.lane.b32.xlu0 %v899, 108
        %v945 = vpop.permute.xlu0 %944
        %946 = vrot.lane.b32.xlu0 %v900, 108
        %v947 = vpop.permute.xlu0 %946
        %948 = vrot.lane.b32.xlu0 %v901, 108
        %v949 = vpop.permute.xlu0 %948
        %vm950 = vcmask 883712
        %v951 = vsel %vm950, %v919, %v921
        %v952 = vsel %vm950, %v921, %v923
        %v953 = vsel %vm950, %v923, %v925
        %v954 = vsel %vm950, %v927, %v929
        %v955 = vsel %vm950, %v929, %v931
        %v956 = vsel %vm950, %v931, %v933
        %v957 = vsel %vm950, %v935, %v937
        %v958 = vsel %vm950, %v937, %v939
        %v959 = vsel %vm950, %v939, %v941
        %v960 = vsel %vm950, %v943, %v945
        %v961 = vsel %vm950, %v945, %v947
        %v962 = vsel %vm950, %v947, %v949
        %975 = vst [vmem:[#allocation2 + $0x1e0] sm:$0xff] %v951
        %976 = vst [vmem:[#allocation2 + $0x1e8] sm:$0xff] %v952
        %977 = vst [vmem:[#allocation2 + $0x1f0] sm:$0xff] %v953
        %978 = vst [vmem:[#allocation2 + $0x1f8] sm:$0xff] %v954
        %979 = vst [vmem:[#allocation2 + $0x200] sm:$0xff] %v955
        %980 = vst [vmem:[#allocation2 + $0x208] sm:$0xff] %v956
        %981 = vst [vmem:[#allocation2 + $0x210] sm:$0xff] %v957
        %982 = vst [vmem:[#allocation2 + $0x218] sm:$0xff] %v958
        %983 = vst [vmem:[#allocation2 + $0x220] sm:$0xff] %v959
        %984 = vst [vmem:[#allocation2 + $0x228] sm:$0xff] %v960
        %985 = vst [vmem:[#allocation2 + $0x230] sm:$0xff] %v961
        %986 = vst [vmem:[#allocation2 + $0x238] sm:$0xff] %v962
        %v987 = vld [vmem:[%s237] sm:$0xff]
        %v988 = vld [vmem:[%s237 + $0x8] sm:$0xff]
        %v989 = vld [vmem:[%s237 + $0x10] sm:$0xff]
        %v990 = vld [vmem:[%s237 + $0x18] sm:$0xff]
        %v991 = vld [vmem:[%s237 + $0x20] sm:$0xff]
        %v992 = vld [vmem:[%s237 + $0x28] sm:$0xff]
        %v993 = vld [vmem:[%s237 + $0x30] sm:$0xff]
        %v994 = vld [vmem:[%s237 + $0x38] sm:$0xff]
        %v995 = vld [vmem:[%s237 + $0x40] sm:$0xff]
        %v996 = vld [vmem:[%s237 + $0x48] sm:$0xff]
        %v997 = vld [vmem:[%s237 + $0x50] sm:$0xff]
        %v998 = vld [vmem:[%s237 + $0x58] sm:$0xff]
        %v999 = vld [vmem:[%s237 + $0x60] sm:$0xff]
        %v1000 = vld [vmem:[%s237 + $0x68] sm:$0xff]
        %v1001 = vld [vmem:[%s237 + $0x70] sm:$0xff]
        %v1002 = vld [vmem:[%s237 + $0x78] sm:$0xff]
        %v1003 = vld [vmem:[%s237 + $0x80] sm:$0xff]
        %v1004 = vld [vmem:[%s237 + $0x88] sm:$0xff]
        %v1005 = vld [vmem:[%s237 + $0x90] sm:$0xff]
        %v1006 = vld [vmem:[%s237 + $0x98] sm:$0xff]
        %v1007 = vld [vmem:[%s237 + $0xa0] sm:$0xff]
        %v1008 = vld [vmem:[%s237 + $0xa8] sm:$0xff]
        %v1009 = vld [vmem:[%s237 + $0xb0] sm:$0xff]
        %v1010 = vld [vmem:[%s237 + $0xb8] sm:$0xff]
        %v1011 = vld [vmem:[%s237 + $0xc0] sm:$0xff]
        %v1012 = vld [vmem:[%s237 + $0xc8] sm:$0xff]
        %v1013 = vld [vmem:[%s237 + $0xd0] sm:$0xff]
        %v1014 = vld [vmem:[%s237 + $0xd8] sm:$0xff]
        %v1015 = vld [vmem:[%s237 + $0xe0] sm:$0xff]
        %v1016 = vld [vmem:[%s237 + $0xe8] sm:$0xff]
        %v1017 = vld [vmem:[%s237 + $0xf0] sm:$0xff]
        %v1018 = vld [vmem:[%s237 + $0xf8] sm:$0xff]
        %v1019 = vpack.c.bf16 %v991, %v987
        %v1020 = vpack.c.bf16 %v992, %v988
        %v1021 = vpack.c.bf16 %v993, %v989
        %v1022 = vpack.c.bf16 %v994, %v990
        %v1023 = vpack.c.bf16 %v999, %v995
        %v1024 = vpack.c.bf16 %v1000, %v996
        %v1025 = vpack.c.bf16 %v1001, %v997
        %v1026 = vpack.c.bf16 %v1002, %v998
        %v1027 = vpack.c.bf16 %v1007, %v1003
        %v1028 = vpack.c.bf16 %v1008, %v1004
        %v1029 = vpack.c.bf16 %v1009, %v1005
        %v1030 = vpack.c.bf16 %v1010, %v1006
        %v1031 = vpack.c.bf16 %v1015, %v1011
        %v1032 = vpack.c.bf16 %v1016, %v1012
        %v1033 = vpack.c.bf16 %v1017, %v1013
        %v1034 = vpack.c.bf16 %v1018, %v1014
        %1051 = vrot.lane.b32.xlu0 %v1019, 92
        %v1052 = vpop.permute.xlu0 %1051
        %1053 = vrot.lane.b32.xlu0 %v1020, 92
        %v1054 = vpop.permute.xlu0 %1053
        %1055 = vrot.lane.b32.xlu0 %v1021, 92
        %v1056 = vpop.permute.xlu0 %1055
        %1057 = vrot.lane.b32.xlu0 %v1022, 92
        %v1058 = vpop.permute.xlu0 %1057
        %1059 = vrot.lane.b32.xlu0 %v1023, 92
        %v1060 = vpop.permute.xlu0 %1059
        %1061 = vrot.lane.b32.xlu0 %v1024, 92
        %v1062 = vpop.permute.xlu0 %1061
        %1063 = vrot.lane.b32.xlu0 %v1025, 92
        %v1064 = vpop.permute.xlu0 %1063
        %1065 = vrot.lane.b32.xlu0 %v1026, 92
        %v1066 = vpop.permute.xlu0 %1065
        %1067 = vrot.lane.b32.xlu0 %v1027, 92
        %v1068 = vpop.permute.xlu0 %1067
        %1069 = vrot.lane.b32.xlu0 %v1028, 92
        %v1070 = vpop.permute.xlu0 %1069
        %1071 = vrot.lane.b32.xlu0 %v1029, 92
        %v1072 = vpop.permute.xlu0 %1071
        %1073 = vrot.lane.b32.xlu0 %v1030, 92
        %v1074 = vpop.permute.xlu0 %1073
        %1075 = vrot.lane.b32.xlu0 %v1031, 92
        %v1076 = vpop.permute.xlu0 %1075
        %1077 = vrot.lane.b32.xlu0 %v1032, 92
        %v1078 = vpop.permute.xlu0 %1077
        %1079 = vrot.lane.b32.xlu0 %v1033, 92
        %v1080 = vpop.permute.xlu0 %1079
        %1081 = vrot.lane.b32.xlu0 %v1034, 92
        %v1082 = vpop.permute.xlu0 %1081
        %vm1083 = vcmask 752640
        %v1084 = vsel %vm1083, %v1052, %v1054
        %v1085 = vsel %vm1083, %v1054, %v1056
        %v1086 = vsel %vm1083, %v1056, %v1058
        %v1087 = vsel %vm1083, %v1060, %v1062
        %v1088 = vsel %vm1083, %v1062, %v1064
        %v1089 = vsel %vm1083, %v1064, %v1066
        %v1090 = vsel %vm1083, %v1068, %v1070
        %v1091 = vsel %vm1083, %v1070, %v1072
        %v1092 = vsel %vm1083, %v1072, %v1074
        %v1093 = vsel %vm1083, %v1076, %v1078
        %v1094 = vsel %vm1083, %v1078, %v1080
        %v1095 = vsel %vm1083, %v1080, %v1082
        %1108 = vst [vmem:[#allocation2 + $0x240] sm:$0xff] %v1084
        %1109 = vst [vmem:[#allocation2 + $0x248] sm:$0xff] %v1085
        %1110 = vst [vmem:[#allocation2 + $0x250] sm:$0xff] %v1086
        %1111 = vst [vmem:[#allocation2 + $0x258] sm:$0xff] %v1087
        %1112 = vst [vmem:[#allocation2 + $0x260] sm:$0xff] %v1088
        %1113 = vst [vmem:[#allocation2 + $0x268] sm:$0xff] %v1089
        %1114 = vst [vmem:[#allocation2 + $0x270] sm:$0xff] %v1090
        %1115 = vst [vmem:[#allocation2 + $0x278] sm:$0xff] %v1091
        %1116 = vst [vmem:[#allocation2 + $0x280] sm:$0xff] %v1092
        %1117 = vst [vmem:[#allocation2 + $0x288] sm:$0xff] %v1093
        %1118 = vst [vmem:[#allocation2 + $0x290] sm:$0xff] %v1094
        %1119 = vst [vmem:[#allocation2 + $0x298] sm:$0xff] %v1095
        %v1120 = vld [vmem:[%s237] sm:$0xff]
        %v1121 = vld [vmem:[%s237 + $0x8] sm:$0xff]
        %v1122 = vld [vmem:[%s237 + $0x10] sm:$0xff]
        %v1123 = vld [vmem:[%s237 + $0x18] sm:$0xff]
        %v1124 = vld [vmem:[%s237 + $0x20] sm:$0xff]
        %v1125 = vld [vmem:[%s237 + $0x28] sm:$0xff]
        %v1126 = vld [vmem:[%s237 + $0x30] sm:$0xff]
        %v1127 = vld [vmem:[%s237 + $0x38] sm:$0xff]
        %v1128 = vld [vmem:[%s237 + $0x40] sm:$0xff]
        %v1129 = vld [vmem:[%s237 + $0x48] sm:$0xff]
        %v1130 = vld [vmem:[%s237 + $0x50] sm:$0xff]
        %v1131 = vld [vmem:[%s237 + $0x58] sm:$0xff]
        %v1132 = vld [vmem:[%s237 + $0x60] sm:$0xff]
        %v1133 = vld [vmem:[%s237 + $0x68] sm:$0xff]
        %v1134 = vld [vmem:[%s237 + $0x70] sm:$0xff]
        %v1135 = vld [vmem:[%s237 + $0x78] sm:$0xff]
        %v1136 = vld [vmem:[%s237 + $0x80] sm:$0xff]
        %v1137 = vld [vmem:[%s237 + $0x88] sm:$0xff]
        %v1138 = vld [vmem:[%s237 + $0x90] sm:$0xff]
        %v1139 = vld [vmem:[%s237 + $0x98] sm:$0xff]
        %v1140 = vld [vmem:[%s237 + $0xa0] sm:$0xff]
        %v1141 = vld [vmem:[%s237 + $0xa8] sm:$0xff]
        %v1142 = vld [vmem:[%s237 + $0xb0] sm:$0xff]
        %v1143 = vld [vmem:[%s237 + $0xb8] sm:$0xff]
        %v1144 = vld [vmem:[%s237 + $0xc0] sm:$0xff]
        %v1145 = vld [vmem:[%s237 + $0xc8] sm:$0xff]
        %v1146 = vld [vmem:[%s237 + $0xd0] sm:$0xff]
        %v1147 = vld [vmem:[%s237 + $0xd8] sm:$0xff]
        %v1148 = vld [vmem:[%s237 + $0xe0] sm:$0xff]
        %v1149 = vld [vmem:[%s237 + $0xe8] sm:$0xff]
        %v1150 = vld [vmem:[%s237 + $0xf0] sm:$0xff]
        %v1151 = vld [vmem:[%s237 + $0xf8] sm:$0xff]
        %v1152 = vpack.c.bf16 %v1124, %v1120
        %v1153 = vpack.c.bf16 %v1125, %v1121
        %v1154 = vpack.c.bf16 %v1126, %v1122
        %v1155 = vpack.c.bf16 %v1127, %v1123
        %v1156 = vpack.c.bf16 %v1132, %v1128
        %v1157 = vpack.c.bf16 %v1133, %v1129
        %v1158 = vpack.c.bf16 %v1134, %v1130
        %v1159 = vpack.c.bf16 %v1135, %v1131
        %v1160 = vpack.c.bf16 %v1140, %v1136
        %v1161 = vpack.c.bf16 %v1141, %v1137
        %v1162 = vpack.c.bf16 %v1142, %v1138
        %v1163 = vpack.c.bf16 %v1143, %v1139
        %v1164 = vpack.c.bf16 %v1148, %v1144
        %v1165 = vpack.c.bf16 %v1149, %v1145
        %v1166 = vpack.c.bf16 %v1150, %v1146
        %v1167 = vpack.c.bf16 %v1151, %v1147
        %1184 = vrot.lane.b32.xlu0 %v1152, 91
        %v1185 = vpop.permute.xlu0 %1184
        %1186 = vrot.lane.b32.xlu0 %v1153, 91
        %v1187 = vpop.permute.xlu0 %1186
        %1188 = vrot.lane.b32.xlu0 %v1154, 91
        %v1189 = vpop.permute.xlu0 %1188
        %1190 = vrot.lane.b32.xlu0 %v1155, 91
        %v1191 = vpop.permute.xlu0 %1190
        %1192 = vrot.lane.b32.xlu0 %v1156, 91
        %v1193 = vpop.permute.xlu0 %1192
        %1194 = vrot.lane.b32.xlu0 %v1157, 91
        %v1195 = vpop.permute.xlu0 %1194
        %1196 = vrot.lane.b32.xlu0 %v1158, 91
        %v1197 = vpop.permute.xlu0 %1196
        %1198 = vrot.lane.b32.xlu0 %v1159, 91
        %v1199 = vpop.permute.xlu0 %1198
        %1200 = vrot.lane.b32.xlu0 %v1160, 91
        %v1201 = vpop.permute.xlu0 %1200
        %1202 = vrot.lane.b32.xlu0 %v1161, 91
        %v1203 = vpop.permute.xlu0 %1202
        %1204 = vrot.lane.b32.xlu0 %v1162, 91
        %v1205 = vpop.permute.xlu0 %1204
        %1206 = vrot.lane.b32.xlu0 %v1163, 91
        %v1207 = vpop.permute.xlu0 %1206
        %1208 = vrot.lane.b32.xlu0 %v1164, 91
        %v1209 = vpop.permute.xlu0 %1208
        %1210 = vrot.lane.b32.xlu0 %v1165, 91
        %v1211 = vpop.permute.xlu0 %1210
        %1212 = vrot.lane.b32.xlu0 %v1166, 91
        %v1213 = vpop.permute.xlu0 %1212
        %1214 = vrot.lane.b32.xlu0 %v1167, 91
        %v1215 = vpop.permute.xlu0 %1214
        %vm1216 = vcmask 744448
        %v1217 = vsel %vm1216, %v1185, %v1187
        %v1218 = vsel %vm1216, %v1187, %v1189
        %v1219 = vsel %vm1216, %v1189, %v1191
        %v1220 = vsel %vm1216, %v1193, %v1195
        %v1221 = vsel %vm1216, %v1195, %v1197
        %v1222 = vsel %vm1216, %v1197, %v1199
        %v1223 = vsel %vm1216, %v1201, %v1203
        %v1224 = vsel %vm1216, %v1203, %v1205
        %v1225 = vsel %vm1216, %v1205, %v1207
        %v1226 = vsel %vm1216, %v1209, %v1211
        %v1227 = vsel %vm1216, %v1211, %v1213
        %v1228 = vsel %vm1216, %v1213, %v1215
        %1241 = vst [vmem:[#allocation2 + $0x2a0] sm:$0xff] %v1217
        %1242 = vst [vmem:[#allocation2 + $0x2a8] sm:$0xff] %v1218
        %1243 = vst [vmem:[#allocation2 + $0x2b0] sm:$0xff] %v1219
        %1244 = vst [vmem:[#allocation2 + $0x2b8] sm:$0xff] %v1220
        %1245 = vst [vmem:[#allocation2 + $0x2c0] sm:$0xff] %v1221
        %1246 = vst [vmem:[#allocation2 + $0x2c8] sm:$0xff] %v1222
        %1247 = vst [vmem:[#allocation2 + $0x2d0] sm:$0xff] %v1223
        %1248 = vst [vmem:[#allocation2 + $0x2d8] sm:$0xff] %v1224
        %1249 = vst [vmem:[#allocation2 + $0x2e0] sm:$0xff] %v1225
        %1250 = vst [vmem:[#allocation2 + $0x2e8] sm:$0xff] %v1226
        %1251 = vst [vmem:[#allocation2 + $0x2f0] sm:$0xff] %v1227
        %1252 = vst [vmem:[#allocation2 + $0x2f8] sm:$0xff] %v1228
        %v1253 = vld [vmem:[%s237] sm:$0xff]
        %v1254 = vld [vmem:[%s237 + $0x8] sm:$0xff]
        %v1255 = vld [vmem:[%s237 + $0x10] sm:$0xff]
        %v1256 = vld [vmem:[%s237 + $0x18] sm:$0xff]
        %v1257 = vld [vmem:[%s237 + $0x20] sm:$0xff]
        %v1258 = vld [vmem:[%s237 + $0x28] sm:$0xff]
        %v1259 = vld [vmem:[%s237 + $0x30] sm:$0xff]
        %v1260 = vld [vmem:[%s237 + $0x38] sm:$0xff]
        %v1261 = vld [vmem:[%s237 + $0x40] sm:$0xff]
        %v1262 = vld [vmem:[%s237 + $0x48] sm:$0xff]
        %v1263 = vld [vmem:[%s237 + $0x50] sm:$0xff]
        %v1264 = vld [vmem:[%s237 + $0x58] sm:$0xff]
        %v1265 = vld [vmem:[%s237 + $0x60] sm:$0xff]
        %v1266 = vld [vmem:[%s237 + $0x68] sm:$0xff]
        %v1267 = vld [vmem:[%s237 + $0x70] sm:$0xff]
        %v1268 = vld [vmem:[%s237 + $0x78] sm:$0xff]
        %v1269 = vld [vmem:[%s237 + $0x80] sm:$0xff]
        %v1270 = vld [vmem:[%s237 + $0x88] sm:$0xff]
        %v1271 = vld [vmem:[%s237 + $0x90] sm:$0xff]
        %v1272 = vld [vmem:[%s237 + $0x98] sm:$0xff]
        %v1273 = vld [vmem:[%s237 + $0xa0] sm:$0xff]
        %v1274 = vld [vmem:[%s237 + $0xa8] sm:$0xff]
        %v1275 = vld [vmem:[%s237 + $0xb0] sm:$0xff]
        %v1276 = vld [vmem:[%s237 + $0xb8] sm:$0xff]
        %v1277 = vld [vmem:[%s237 + $0xc0] sm:$0xff]
        %v1278 = vld [vmem:[%s237 + $0xc8] sm:$0xff]
        %v1279 = vld [vmem:[%s237 + $0xd0] sm:$0xff]
        %v1280 = vld [vmem:[%s237 + $0xd8] sm:$0xff]
        %v1281 = vld [vmem:[%s237 + $0xe0] sm:$0xff]
        %v1282 = vld [vmem:[%s237 + $0xe8] sm:$0xff]
        %v1283 = vld [vmem:[%s237 + $0xf0] sm:$0xff]
        %v1284 = vld [vmem:[%s237 + $0xf8] sm:$0xff]
        %v1285 = vpack.c.bf16 %v1257, %v1253
        %v1286 = vpack.c.bf16 %v1258, %v1254
        %v1287 = vpack.c.bf16 %v1259, %v1255
        %v1288 = vpack.c.bf16 %v1260, %v1256
        %v1289 = vpack.c.bf16 %v1265, %v1261
        %v1290 = vpack.c.bf16 %v1266, %v1262
        %v1291 = vpack.c.bf16 %v1267, %v1263
        %v1292 = vpack.c.bf16 %v1268, %v1264
        %v1293 = vpack.c.bf16 %v1273, %v1269
        %v1294 = vpack.c.bf16 %v1274, %v1270
        %v1295 = vpack.c.bf16 %v1275, %v1271
        %v1296 = vpack.c.bf16 %v1276, %v1272
        %v1297 = vpack.c.bf16 %v1281, %v1277
        %v1298 = vpack.c.bf16 %v1282, %v1278
        %v1299 = vpack.c.bf16 %v1283, %v1279
        %v1300 = vpack.c.bf16 %v1284, %v1280
        %1317 = vrot.lane.b32.xlu0 %v1285, 90
        %v1318 = vpop.permute.xlu0 %1317
        %1319 = vrot.lane.b32.xlu0 %v1286, 90
        %v1320 = vpop.permute.xlu0 %1319
        %1321 = vrot.lane.b32.xlu0 %v1287, 90
        %v1322 = vpop.permute.xlu0 %1321
        %1323 = vrot.lane.b32.xlu0 %v1288, 90
        %v1324 = vpop.permute.xlu0 %1323
        %1325 = vrot.lane.b32.xlu0 %v1289, 90
        %v1326 = vpop.permute.xlu0 %1325
        %1327 = vrot.lane.b32.xlu0 %v1290, 90
        %v1328 = vpop.permute.xlu0 %1327
        %1329 = vrot.lane.b32.xlu0 %v1291, 90
        %v1330 = vpop.permute.xlu0 %1329
        %1331 = vrot.lane.b32.xlu0 %v1292, 90
        %v1332 = vpop.permute.xlu0 %1331
        %1333 = vrot.lane.b32.xlu0 %v1293, 90
        %v1334 = vpop.permute.xlu0 %1333
        %1335 = vrot.lane.b32.xlu0 %v1294, 90
        %v1336 = vpop.permute.xlu0 %1335
        %1337 = vrot.lane.b32.xlu0 %v1295, 90
        %v1338 = vpop.permute.xlu0 %1337
        %1339 = vrot.lane.b32.xlu0 %v1296, 90
        %v1340 = vpop.permute.xlu0 %1339
        %1341 = vrot.lane.b32.xlu0 %v1297, 90
        %v1342 = vpop.permute.xlu0 %1341
        %1343 = vrot.lane.b32.xlu0 %v1298, 90
        %v1344 = vpop.permute.xlu0 %1343
        %1345 = vrot.lane.b32.xlu0 %v1299, 90
        %v1346 = vpop.permute.xlu0 %1345
        %1347 = vrot.lane.b32.xlu0 %v1300, 90
        %v1348 = vpop.permute.xlu0 %1347
        %vm1349 = vcmask 736256
        %v1350 = vsel %vm1349, %v1318, %v1320
        %v1351 = vsel %vm1349, %v1320, %v1322
        %v1352 = vsel %vm1349, %v1322, %v1324
        %v1353 = vsel %vm1349, %v1326, %v1328
        %v1354 = vsel %vm1349, %v1328, %v1330
        %v1355 = vsel %vm1349, %v1330, %v1332
        %v1356 = vsel %vm1349, %v1334, %v1336
        %v1357 = vsel %vm1349, %v1336, %v1338
        %v1358 = vsel %vm1349, %v1338, %v1340
        %v1359 = vsel %vm1349, %v1342, %v1344
        %v1360 = vsel %vm1349, %v1344, %v1346
        %v1361 = vsel %vm1349, %v1346, %v1348
        %1374 = vst [vmem:[#allocation2 + $0x300] sm:$0xff] %v1350
        %1375 = vst [vmem:[#allocation2 + $0x308] sm:$0xff] %v1351
        %1376 = vst [vmem:[#allocation2 + $0x310] sm:$0xff] %v1352
        %1377 = vst [vmem:[#allocation2 + $0x318] sm:$0xff] %v1353
        %1378 = vst [vmem:[#allocation2 + $0x320] sm:$0xff] %v1354
        %1379 = vst [vmem:[#allocation2 + $0x328] sm:$0xff] %v1355
        %1380 = vst [vmem:[#allocation2 + $0x330] sm:$0xff] %v1356
        %1381 = vst [vmem:[#allocation2 + $0x338] sm:$0xff] %v1357
        %1382 = vst [vmem:[#allocation2 + $0x340] sm:$0xff] %v1358
        %1383 = vst [vmem:[#allocation2 + $0x348] sm:$0xff] %v1359
        %1384 = vst [vmem:[#allocation2 + $0x350] sm:$0xff] %v1360
        %1385 = vst [vmem:[#allocation2 + $0x358] sm:$0xff] %v1361
        %v1386 = vld [vmem:[#allocation7] sm:$0xff]
        %v1387 = vld [vmem:[#allocation7 + $0x8] sm:$0xff]
        %v1388 = vld [vmem:[#allocation7 + $0x10] sm:$0xf]
        %v1389 = vld [vmem:[#allocation7 + $0x14] sm:$0xff]
        %v1390 = vld [vmem:[#allocation7 + $0x1c] sm:$0xff]
        %v1391 = vld [vmem:[#allocation7 + $0x24] sm:$0xf]
        %v1392 = vld [vmem:[#allocation7 + $0x28] sm:$0xff]
        %v1393 = vld [vmem:[#allocation7 + $0x30] sm:$0xff]
        %v1394 = vld [vmem:[#allocation7 + $0x38] sm:$0xf]
        %v1395 = vld [vmem:[#allocation7 + $0x3c] sm:$0xff]
        %v1396 = vld [vmem:[#allocation7 + $0x44] sm:$0xff]
        %v1397 = vld [vmem:[#allocation7 + $0x4c] sm:$0xf]
        %v1398 = vld [vmem:[#allocation7 + $0x50] sm:$0xff]
        %v1399 = vld [vmem:[#allocation7 + $0x58] sm:$0xff]
        %v1400 = vld [vmem:[#allocation7 + $0x60] sm:$0xf]
        %v1401 = vld [vmem:[#allocation7 + $0x64] sm:$0xff]
        %v1402 = vld [vmem:[#allocation7 + $0x6c] sm:$0xff]
        %v1403 = vld [vmem:[#allocation7 + $0x74] sm:$0xf]
        %v1404 = vld [vmem:[#allocation7 + $0x78] sm:$0xff]
        %v1405 = vld [vmem:[#allocation7 + $0x80] sm:$0xff]
        %v1406 = vld [vmem:[#allocation7 + $0x88] sm:$0xf]
        %v1407 = vld [vmem:[#allocation7 + $0x8c] sm:$0xff]
        %v1408 = vld [vmem:[#allocation7 + $0x94] sm:$0xff]
        %v1409 = vld [vmem:[#allocation7 + $0x9c] sm:$0xf]
        %v1410 = vld [vmem:[#allocation2] sm:$0xff]
        %v1411 = vld [vmem:[#allocation2 + $0x8] sm:$0xff]
        %v1412 = vld [vmem:[#allocation2 + $0x10] sm:$0xff]
        %v1413 = vld [vmem:[#allocation2 + $0x18] sm:$0xff]
        %v1414 = vld [vmem:[#allocation2 + $0x20] sm:$0xff]
        %v1415 = vld [vmem:[#allocation2 + $0x28] sm:$0xff]
        %v1416 = vld [vmem:[#allocation2 + $0x30] sm:$0xff]
        %v1417 = vld [vmem:[#allocation2 + $0x38] sm:$0xff]
        %v1418 = vld [vmem:[#allocation2 + $0x40] sm:$0xff]
        %v1419 = vld [vmem:[#allocation2 + $0x48] sm:$0xff]
        %v1420 = vld [vmem:[#allocation2 + $0x50] sm:$0xff]
        %v1421 = vld [vmem:[#allocation2 + $0x58] sm:$0xff]
        %v1422 = vld [vmem:[#allocation2 + $0x60] sm:$0xff]
        %v1423 = vld [vmem:[#allocation2 + $0x68] sm:$0xff]
        %v1424 = vld [vmem:[#allocation2 + $0x70] sm:$0xff]
        %v1425 = vld [vmem:[#allocation2 + $0x78] sm:$0xff]
        %v1426 = vld [vmem:[#allocation2 + $0x80] sm:$0xff]
        %v1427 = vld [vmem:[#allocation2 + $0x88] sm:$0xff]
        %v1428 = vld [vmem:[#allocation2 + $0x90] sm:$0xff]
        %v1429 = vld [vmem:[#allocation2 + $0x98] sm:$0xff]
        %v1430 = vld [vmem:[#allocation2 + $0xa0] sm:$0xff]
        %v1431 = vld [vmem:[#allocation2 + $0xa8] sm:$0xff]
        %v1432 = vld [vmem:[#allocation2 + $0xb0] sm:$0xff]
        %v1433 = vld [vmem:[#allocation2 + $0xb8] sm:$0xff]
        %v1434 = vld [vmem:[#allocation2 + $0xc0] sm:$0xff]
        %v1435 = vld [vmem:[#allocation2 + $0xc8] sm:$0xff]
        %v1436 = vld [vmem:[#allocation2 + $0xd0] sm:$0xff]
        %v1437 = vld [vmem:[#allocation2 + $0xd8] sm:$0xff]
        %v1438 = vld [vmem:[#allocation2 + $0xe0] sm:$0xff]
        %v1439 = vld [vmem:[#allocation2 + $0xe8] sm:$0xff]
        %v1440 = vld [vmem:[#allocation2 + $0xf0] sm:$0xff]
        %v1441 = vld [vmem:[#allocation2 + $0xf8] sm:$0xff]
        %v1442 = vld [vmem:[#allocation2 + $0x100] sm:$0xff]
        %v1443 = vld [vmem:[#allocation2 + $0x108] sm:$0xff]
        %v1444 = vld [vmem:[#allocation2 + $0x110] sm:$0xff]
        %v1445 = vld [vmem:[#allocation2 + $0x118] sm:$0xff]
        %v1446 = vld [vmem:[#allocation2 + $0x120] sm:$0xff]
        %v1447 = vld [vmem:[#allocation2 + $0x128] sm:$0xff]
        %v1448 = vld [vmem:[#allocation2 + $0x130] sm:$0xff]
        %v1449 = vld [vmem:[#allocation2 + $0x138] sm:$0xff]
        %v1450 = vld [vmem:[#allocation2 + $0x140] sm:$0xff]
        %v1451 = vld [vmem:[#allocation2 + $0x148] sm:$0xff]
        %v1452 = vld [vmem:[#allocation2 + $0x150] sm:$0xff]
        %v1453 = vld [vmem:[#allocation2 + $0x158] sm:$0xff]
        %v1454 = vld [vmem:[#allocation2 + $0x160] sm:$0xff]
        %v1455 = vld [vmem:[#allocation2 + $0x168] sm:$0xff]
        %v1456 = vld [vmem:[#allocation2 + $0x170] sm:$0xff]
        %v1457 = vld [vmem:[#allocation2 + $0x178] sm:$0xff]
        %v1458 = vld [vmem:[#allocation2 + $0x180] sm:$0xff]
        %v1459 = vld [vmem:[#allocation2 + $0x188] sm:$0xff]
        %v1460 = vld [vmem:[#allocation2 + $0x190] sm:$0xff]
        %v1461 = vld [vmem:[#allocation2 + $0x198] sm:$0xff]
        %v1462 = vld [vmem:[#allocation2 + $0x1a0] sm:$0xff]
        %v1463 = vld [vmem:[#allocation2 + $0x1a8] sm:$0xff]
        %v1464 = vld [vmem:[#allocation2 + $0x1b0] sm:$0xff]
        %v1465 = vld [vmem:[#allocation2 + $0x1b8] sm:$0xff]
        %v1466 = vld [vmem:[#allocation2 + $0x1c0] sm:$0xff]
        %v1467 = vld [vmem:[#allocation2 + $0x1c8] sm:$0xff]
        %v1468 = vld [vmem:[#allocation2 + $0x1d0] sm:$0xff]
        %v1469 = vld [vmem:[#allocation2 + $0x1d8] sm:$0xff]
        %v1470 = vld [vmem:[#allocation2 + $0x1e0] sm:$0xff]
        %v1471 = vld [vmem:[#allocation2 + $0x1e8] sm:$0xff]
        %v1472 = vld [vmem:[#allocation2 + $0x1f0] sm:$0xff]
        %v1473 = vld [vmem:[#allocation2 + $0x1f8] sm:$0xff]
        %v1474 = vld [vmem:[#allocation2 + $0x200] sm:$0xff]
        %v1475 = vld [vmem:[#allocation2 + $0x208] sm:$0xff]
        %v1476 = vld [vmem:[#allocation2 + $0x210] sm:$0xff]
        %v1477 = vld [vmem:[#allocation2 + $0x218] sm:$0xff]
        %v1478 = vld [vmem:[#allocation2 + $0x220] sm:$0xff]
        %v1479 = vld [vmem:[#allocation2 + $0x228] sm:$0xff]
        %v1480 = vld [vmem:[#allocation2 + $0x230] sm:$0xff]
        %v1481 = vld [vmem:[#allocation2 + $0x238] sm:$0xff]
        %v1482 = vld [vmem:[#allocation2 + $0x240] sm:$0xff]
        %v1483 = vld [vmem:[#allocation2 + $0x248] sm:$0xff]
        %v1484 = vld [vmem:[#allocation2 + $0x250] sm:$0xff]
        %v1485 = vld [vmem:[#allocation2 + $0x258] sm:$0xff]
        %v1486 = vld [vmem:[#allocation2 + $0x260] sm:$0xff]
        %v1487 = vld [vmem:[#allocation2 + $0x268] sm:$0xff]
        %v1488 = vld [vmem:[#allocation2 + $0x270] sm:$0xff]
        %v1489 = vld [vmem:[#allocation2 + $0x278] sm:$0xff]
        %v1490 = vld [vmem:[#allocation2 + $0x280] sm:$0xff]
        %v1491 = vld [vmem:[#allocation2 + $0x288] sm:$0xff]
        %v1492 = vld [vmem:[#allocation2 + $0x290] sm:$0xff]
        %v1493 = vld [vmem:[#allocation2 + $0x298] sm:$0xff]
        %v1494 = vld [vmem:[#allocation2 + $0x2a0] sm:$0xff]
        %v1495 = vld [vmem:[#allocation2 + $0x2a8] sm:$0xff]
        %v1496 = vld [vmem:[#allocation2 + $0x2b0] sm:$0xff]
        %v1497 = vld [vmem:[#allocation2 + $0x2b8] sm:$0xff]
        %v1498 = vld [vmem:[#allocation2 + $0x2c0] sm:$0xff]
        %v1499 = vld [vmem:[#allocation2 + $0x2c8] sm:$0xff]
        %v1500 = vld [vmem:[#allocation2 + $0x2d0] sm:$0xff]
        %v1501 = vld [vmem:[#allocation2 + $0x2d8] sm:$0xff]
        %v1502 = vld [vmem:[#allocation2 + $0x2e0] sm:$0xff]
        %v1503 = vld [vmem:[#allocation2 + $0x2e8] sm:$0xff]
        %v1504 = vld [vmem:[#allocation2 + $0x2f0] sm:$0xff]
        %v1505 = vld [vmem:[#allocation2 + $0x2f8] sm:$0xff]
        %v1506 = vld [vmem:[#allocation2 + $0x300] sm:$0xff]
        %v1507 = vld [vmem:[#allocation2 + $0x308] sm:$0xff]
        %v1508 = vld [vmem:[#allocation2 + $0x310] sm:$0xff]
        %v1509 = vld [vmem:[#allocation2 + $0x318] sm:$0xff]
        %v1510 = vld [vmem:[#allocation2 + $0x320] sm:$0xff]
        %v1511 = vld [vmem:[#allocation2 + $0x328] sm:$0xff]
        %v1512 = vld [vmem:[#allocation2 + $0x330] sm:$0xff]
        %v1513 = vld [vmem:[#allocation2 + $0x338] sm:$0xff]
        %v1514 = vld [vmem:[#allocation2 + $0x340] sm:$0xff]
        %v1515 = vld [vmem:[#allocation2 + $0x348] sm:$0xff]
        %v1516 = vld [vmem:[#allocation2 + $0x350] sm:$0xff]
        %v1517 = vld [vmem:[#allocation2 + $0x358] sm:$0xff]
        %v1518 = vld [vmem:[%s4] sm:$0xff]
        %v1519 = vld [vmem:[%s4 + $0x8] sm:$0xff]
        %v1520 = vld [vmem:[%s4 + $0x10] sm:$0xff]
        %v1521 = vld [vmem:[%s4 + $0x18] sm:$0xff]
        %v1522 = vld [vmem:[%s4 + $0x20] sm:$0xff]
        %v1523 = vld [vmem:[%s4 + $0x28] sm:$0xff]
        %v1524 = vld [vmem:[%s4 + $0x30] sm:$0xff]
        %v1525 = vld [vmem:[%s4 + $0x38] sm:$0xff]
        %1527 = vset.pattern.permute.xlu0 0
        %1528 = vperm.xlu0 %1527, %v1518
        %v1529 = vpop.permute.xlu0 %1528
        %1532 = vset.pattern.permute.xlu0 0
        %1533 = vperm.xlu0 %1532, %v1519
        %v1534 = vpop.permute.xlu0 %1533
        %1537 = vset.pattern.permute.xlu0 0
        %1538 = vperm.xlu0 %1537, %v1520
        %v1539 = vpop.permute.xlu0 %1538
        %1542 = vset.pattern.permute.xlu0 0
        %1543 = vperm.xlu0 %1542, %v1521
        %v1544 = vpop.permute.xlu0 %1543
        %1547 = vset.pattern.permute.xlu0 0
        %1548 = vperm.xlu0 %1547, %v1522
        %v1549 = vpop.permute.xlu0 %1548
        %1552 = vset.pattern.permute.xlu0 0
        %1553 = vperm.xlu0 %1552, %v1523
        %v1554 = vpop.permute.xlu0 %1553
        %1557 = vset.pattern.permute.xlu0 0
        %1558 = vperm.xlu0 %1557, %v1524
        %v1559 = vpop.permute.xlu0 %1558
        %1562 = vset.pattern.permute.xlu0 0
        %1563 = vperm.xlu0 %1562, %v1525
        %v1564 = vpop.permute.xlu0 %1563
        %v1590 = vunpack.c.l.b16 %v1386
        %v1591 = vunpack.c.h.b16 %v1386
        %v1592 = vunpack.c.l.b16 %v1387
        %v1593 = vunpack.c.h.b16 %v1387
        %v1594 = vunpack.c.l.b16 %v1388
        %v1595 = vunpack.c.l.b16 %v1389
        %v1596 = vunpack.c.h.b16 %v1389
        %v1597 = vunpack.c.l.b16 %v1390
        %v1598 = vunpack.c.h.b16 %v1390
        %v1599 = vunpack.c.l.b16 %v1391
        %v1600 = vunpack.c.l.b16 %v1392
        %v1601 = vunpack.c.h.b16 %v1392
        %v1602 = vunpack.c.l.b16 %v1393
        %v1603 = vunpack.c.h.b16 %v1393
        %v1604 = vunpack.c.l.b16 %v1394
        %v1605 = vunpack.c.l.b16 %v1395
        %v1606 = vunpack.c.h.b16 %v1395
        %v1607 = vunpack.c.l.b16 %v1396
        %v1608 = vunpack.c.h.b16 %v1396
        %v1609 = vunpack.c.l.b16 %v1397
        %v1610 = vunpack.c.l.b16 %v1398
        %v1611 = vunpack.c.h.b16 %v1398
        %v1612 = vunpack.c.l.b16 %v1399
        %v1613 = vunpack.c.h.b16 %v1399
        %v1614 = vunpack.c.l.b16 %v1400
        %v1615 = vunpack.c.l.b16 %v1401
        %v1616 = vunpack.c.h.b16 %v1401
        %v1617 = vunpack.c.l.b16 %v1402
        %v1618 = vunpack.c.h.b16 %v1402
        %v1619 = vunpack.c.l.b16 %v1403
        %v1620 = vunpack.c.l.b16 %v1404
        %v1621 = vunpack.c.h.b16 %v1404
        %v1622 = vunpack.c.l.b16 %v1405
        %v1623 = vunpack.c.h.b16 %v1405
        %v1624 = vunpack.c.l.b16 %v1406
        %v1625 = vunpack.c.l.b16 %v1407
        %v1626 = vunpack.c.h.b16 %v1407
        %v1627 = vunpack.c.l.b16 %v1408
        %v1628 = vunpack.c.h.b16 %v1408
        %v1629 = vunpack.c.l.b16 %v1409
        %v1630 = vpack.c.b16 %v1595, %v1590
        %v1631 = vpack.c.b16 %v1596, %v1591
        %v1632 = vpack.c.b16 %v1597, %v1592
        %v1633 = vpack.c.b16 %v1598, %v1593
        %v1634 = vpack.c.b16 %v1599, %v1594
        %v1635 = vpack.c.b16 %v1605, %v1600
        %v1636 = vpack.c.b16 %v1606, %v1601
        %v1637 = vpack.c.b16 %v1607, %v1602
        %v1638 = vpack.c.b16 %v1608, %v1603
        %v1639 = vpack.c.b16 %v1609, %v1604
        %v1640 = vpack.c.b16 %v1615, %v1610
        %v1641 = vpack.c.b16 %v1616, %v1611
        %v1642 = vpack.c.b16 %v1617, %v1612
        %v1643 = vpack.c.b16 %v1618, %v1613
        %v1644 = vpack.c.b16 %v1619, %v1614
        %v1645 = vpack.c.b16 %v1625, %v1620
        %v1646 = vpack.c.b16 %v1626, %v1621
        %v1647 = vpack.c.b16 %v1627, %v1622
        %v1648 = vpack.c.b16 %v1628, %v1623
        %v1649 = vpack.c.b16 %v1629, %v1624
        %vm1666 = vcmask 523264
        %v1668 = vsel %vm1666, %v1634, 0
        %v1671 = vsel %vm1666, %v1639, 0
        %v1674 = vsel %vm1666, %v1644, 0
        %v1677 = vsel %vm1666, %v1649, 0
        %1679 = vmatprep.subr.bf16.mxu0 %v1411
        %1680 = vmatpush1.bf16.msra.mxu0 %v1410
        %1681 = vmatprep.subr.bf16.mxu0 %v1414
        %1682 = vmatpush1.bf16.msra.mxu0 %v1413
        %1683 = vmatprep.subr.bf16.mxu0 %v1417
        %1684 = vmatpush1.bf16.msra.mxu0 %v1416
        %1685 = vmatprep.subr.bf16.mxu0 %v1420
        %1686 = vmatpush1.bf16.msra.mxu0 %v1419
        %1687 = vmatprep.subr.bf16.mxu0 %v1423
        %1688 = vmatpush1.bf16.msra.mxu0 %v1422
        %1689 = vmatprep.subr.bf16.mxu0 %v1426
        %1690 = vmatpush1.bf16.msra.mxu0 %v1425
        %1691 = vmatprep.subr.bf16.mxu0 %v1429
        %1692 = vmatpush1.bf16.msra.mxu0 %v1428
        %1693 = vmatprep.subr.bf16.mxu0 %v1432
        %1694 = vmatpush1.bf16.msra.mxu0 %v1431
        %1695 = vmatprep.subr.bf16.mxu0 %v1435
        %1696 = vmatpush1.bf16.msra.mxu0 %v1434
        %1697 = vmatprep.subr.bf16.mxu0 %v1438
        %1698 = vmatpush1.bf16.msra.mxu0 %v1437
        %1699 = vmatprep.subr.bf16.mxu0 %v1441
        %1700 = vmatpush1.bf16.msra.mxu0 %v1440
        %1701 = vmatprep.subr.bf16.mxu0 %v1444
        %1702 = vmatpush1.bf16.msra.mxu0 %v1443
        %1703 = vmatprep.subr.bf16.mxu0 %v1447
        %1704 = vmatpush1.bf16.msra.mxu0 %v1446
        %1705 = vmatprep.subr.bf16.mxu0 %v1450
        %1706 = vmatpush1.bf16.msra.mxu0 %v1449
        %1707 = vmatprep.subr.bf16.mxu0 %v1453
        %1708 = vmatpush1.bf16.msra.mxu0 %v1452
        %1709 = vmatprep.subr.bf16.mxu0 %v1456
        %1710 = vmatpush1.bf16.msra.mxu0 %v1455
        %1711 = vmatprep.mubr.bf16.mxu0 %v1631
        %1712 = vmatmul.mubr.bf16.gmra.mrb[0].mxu0 %v1630
        %v1713 = vpop.f32.mrb[0].mxu0
        %v1714 = vadd.f32 %v1529, %v1713
        %v1715 = vpop.f32.mrb[0].mxu0
        %v1716 = vadd.f32 %v1529, %v1715
        %v1717 = vpop.f32.mrb[0].mxu0
        %v1718 = vadd.f32 %v1534, %v1717
        %v1719 = vpop.f32.mrb[0].mxu0
        %v1720 = vadd.f32 %v1534, %v1719
        %1721 = vmatprep.mubr.bf16.mxu0 %v1636
        %1722 = vmatmul.mubr.bf16.gmra.mrb[0].mxu0 %v1635
        %v1723 = vpop.f32.mrb[0].mxu0
        %v1724 = vadd.f32 %v1539, %v1723
        %v1725 = vpop.f32.mrb[0].mxu0
        %v1726 = vadd.f32 %v1539, %v1725
        %v1727 = vpop.f32.mrb[0].mxu0
        %v1728 = vadd.f32 %v1544, %v1727
        %v1729 = vpop.f32.mrb[0].mxu0
        %v1730 = vadd.f32 %v1544, %v1729
        %1731 = vmatprep.mubr.bf16.mxu0 %v1641
        %1732 = vmatmul.mubr.bf16.gmra.mrb[0].mxu0 %v1640
        %v1733 = vpop.f32.mrb[0].mxu0
        %v1734 = vadd.f32 %v1549, %v1733
        %v1735 = vpop.f32.mrb[0].mxu0
        %v1736 = vadd.f32 %v1549, %v1735
        %v1737 = vpop.f32.mrb[0].mxu0
        %v1738 = vadd.f32 %v1554, %v1737
        %v1739 = vpop.f32.mrb[0].mxu0
        %v1740 = vadd.f32 %v1554, %v1739
        %1741 = vmatprep.mubr.bf16.mxu0 %v1646
        %1742 = vmatmul.mubr.bf16.gmra.mrb[0].mxu0 %v1645
        %v1743 = vpop.f32.mrb[0].mxu0
        %v1744 = vadd.f32 %v1559, %v1743
        %v1745 = vpop.f32.mrb[0].mxu0
        %v1746 = vadd.f32 %v1559, %v1745
        %v1747 = vpop.f32.mrb[0].mxu0
        %v1748 = vadd.f32 %v1564, %v1747
        %v1749 = vpop.f32.mrb[0].mxu0
        %v1750 = vadd.f32 %v1564, %v1749
        %1751 = vdwg.mxu0
        %1752 = vmatprep.subr.bf16.mxu0 %v1459
        %1753 = vmatpush1.bf16.msra.mxu0 %v1458
        %1754 = vmatprep.subr.bf16.mxu0 %v1462
        %1755 = vmatpush1.bf16.msra.mxu0 %v1461
        %1756 = vmatprep.subr.bf16.mxu0 %v1465
        %1757 = vmatpush1.bf16.msra.mxu0 %v1464
        %1758 = vmatprep.subr.bf16.mxu0 %v1468
        %1759 = vmatpush1.bf16.msra.mxu0 %v1467
        %1760 = vmatprep.subr.bf16.mxu0 %v1471
        %1761 = vmatpush1.bf16.msra.mxu0 %v1470
        %1762 = vmatprep.subr.bf16.mxu0 %v1474
        %1763 = vmatpush1.bf16.msra.mxu0 %v1473
        %1764 = vmatprep.subr.bf16.mxu0 %v1477
        %1765 = vmatpush1.bf16.msra.mxu0 %v1476
        %1766 = vmatprep.subr.bf16.mxu0 %v1480
        %1767 = vmatpush1.bf16.msra.mxu0 %v1479
        %1768 = vmatprep.subr.bf16.mxu0 %v1483
        %1769 = vmatpush1.bf16.msra.mxu0 %v1482
        %1770 = vmatprep.subr.bf16.mxu0 %v1486
        %1771 = vmatpush1.bf16.msra.mxu0 %v1485
        %1772 = vmatprep.subr.bf16.mxu0 %v1489
        %1773 = vmatpush1.bf16.msra.mxu0 %v1488
        %1774 = vmatprep.subr.bf16.mxu0 %v1492
        %1775 = vmatpush1.bf16.msra.mxu0 %v1491
        %1776 = vmatprep.subr.bf16.mxu0 %v1495
        %1777 = vmatpush1.bf16.msra.mxu0 %v1494
        %1778 = vmatprep.subr.bf16.mxu0 %v1498
        %1779 = vmatpush1.bf16.msra.mxu0 %v1497
        %1780 = vmatprep.subr.bf16.mxu0 %v1501
        %1781 = vmatpush1.bf16.msra.mxu0 %v1500
        %1782 = vmatprep.subr.bf16.mxu0 %v1504
        %1783 = vmatpush1.bf16.msra.mxu0 %v1503
        %1784 = vmatprep.mubr.bf16.mxu0 %v1633
        %1785 = vmatmul.mubr.bf16.gmra.mrb[0].mxu0 %v1632
        %v1786 = vpop.f32.mrb[0].mxu0
        %v1787 = vadd.f32 %v1714, %v1786
        %v1788 = vpop.f32.mrb[0].mxu0
        %v1789 = vadd.f32 %v1716, %v1788
        %v1790 = vpop.f32.mrb[0].mxu0
        %v1791 = vadd.f32 %v1718, %v1790
        %v1792 = vpop.f32.mrb[0].mxu0
        %v1793 = vadd.f32 %v1720, %v1792
        %1794 = vmatprep.mubr.bf16.mxu0 %v1638
        %1795 = vmatmul.mubr.bf16.gmra.mrb[0].mxu0 %v1637
        %v1796 = vpop.f32.mrb[0].mxu0
        %v1797 = vadd.f32 %v1724, %v1796
        %v1798 = vpop.f32.mrb[0].mxu0
        %v1799 = vadd.f32 %v1726, %v1798
        %v1800 = vpop.f32.mrb[0].mxu0
        %v1801 = vadd.f32 %v1728, %v1800
        %v1802 = vpop.f32.mrb[0].mxu0
        %v1803 = vadd.f32 %v1730, %v1802
        %1804 = vmatprep.mubr.bf16.mxu0 %v1643
        %1805 = vmatmul.mubr.bf16.gmra.mrb[0].mxu0 %v1642
        %v1806 = vpop.f32.mrb[0].mxu0
        %v1807 = vadd.f32 %v1734, %v1806
        %v1808 = vpop.f32.mrb[0].mxu0
        %v1809 = vadd.f32 %v1736, %v1808
        %v1810 = vpop.f32.mrb[0].mxu0
        %v1811 = vadd.f32 %v1738, %v1810
        %v1812 = vpop.f32.mrb[0].mxu0
        %v1813 = vadd.f32 %v1740, %v1812
        %1814 = vmatprep.mubr.bf16.mxu0 %v1648
        %1815 = vmatmul.mubr.bf16.gmra.mrb[0].mxu0 %v1647
        %v1816 = vpop.f32.mrb[0].mxu0
        %v1817 = vadd.f32 %v1744, %v1816
        %v1818 = vpop.f32.mrb[0].mxu0
        %v1819 = vadd.f32 %v1746, %v1818
        %v1820 = vpop.f32.mrb[0].mxu0
        %v1821 = vadd.f32 %v1748, %v1820
        %v1822 = vpop.f32.mrb[0].mxu0
        %v1823 = vadd.f32 %v1750, %v1822
        %1824 = vdwg.mxu0
        %1825 = vmatprep.subr.bf16.mxu0 %v1507
        %1826 = vmatpush1.bf16.msra.mxu0 %v1506
        %1827 = vmatprep.subr.bf16.mxu0 %v1510
        %1828 = vmatpush1.bf16.msra.mxu0 %v1509
        %1829 = vmatprep.subr.bf16.mxu0 %v1513
        %1830 = vmatpush1.bf16.msra.mxu0 %v1512
        %1831 = vmatprep.subr.bf16.mxu0 %v1516
        %1832 = vmatpush1.bf16.msra.mxu0 %v1515
        %1833 = vmatprep.subr.bf16.mxu0 0
        %1834 = vmatpush1.bf16.msra.mxu0 0
        %1835 = vmatprep.subr.bf16.mxu0 0
        %1836 = vmatpush1.bf16.msra.mxu0 0
        %1837 = vmatprep.subr.bf16.mxu0 0
        %1838 = vmatpush1.bf16.msra.mxu0 0
        %1839 = vmatprep.subr.bf16.mxu0 0
        %1840 = vmatpush1.bf16.msra.mxu0 0
        %1841 = vmatprep.subr.bf16.mxu0 0
        %1842 = vmatpush1.bf16.msra.mxu0 0
        %1843 = vmatprep.subr.bf16.mxu0 0
        %1844 = vmatpush1.bf16.msra.mxu0 0
        %1845 = vmatprep.subr.bf16.mxu0 0
        %1846 = vmatpush1.bf16.msra.mxu0 0
        %1847 = vmatprep.subr.bf16.mxu0 0
        %1848 = vmatpush1.bf16.msra.mxu0 0
        %1849 = vmatprep.subr.bf16.mxu0 0
        %1850 = vmatpush1.bf16.msra.mxu0 0
        %1851 = vmatprep.subr.bf16.mxu0 0
        %1852 = vmatpush1.bf16.msra.mxu0 0
        %1853 = vmatprep.subr.bf16.mxu0 0
        %1854 = vmatpush1.bf16.msra.mxu0 0
        %1855 = vmatprep.subr.bf16.mxu0 0
        %1856 = vmatpush1.bf16.msra.mxu0 0
        %1857 = vmatprep.mubr.bf16.mxu0 0
        %1858 = vmatmul.mubr.bf16.gmra.mrb[0].mxu0 %v1668
        %v1859 = vpop.f32.mrb[0].mxu0
        %v1860 = vadd.f32 %v1787, %v1859
        %v1861 = vpop.f32.mrb[0].mxu0
        %v1862 = vadd.f32 %v1789, %v1861
        %v1863 = vpop.f32.mrb[0].mxu0
        %v1864 = vadd.f32 %v1791, %v1863
        %v1865 = vpop.f32.mrb[0].mxu0
        %v1866 = vadd.f32 %v1793, %v1865
        %1867 = vmatprep.mubr.bf16.mxu0 0
        %1868 = vmatmul.mubr.bf16.gmra.mrb[0].mxu0 %v1671
        %v1869 = vpop.f32.mrb[0].mxu0
        %v1870 = vadd.f32 %v1797, %v1869
        %v1871 = vpop.f32.mrb[0].mxu0
        %v1872 = vadd.f32 %v1799, %v1871
        %v1873 = vpop.f32.mrb[0].mxu0
        %v1874 = vadd.f32 %v1801, %v1873
        %v1875 = vpop.f32.mrb[0].mxu0
        %v1876 = vadd.f32 %v1803, %v1875
        %1877 = vmatprep.mubr.bf16.mxu0 0
        %1878 = vmatmul.mubr.bf16.gmra.mrb[0].mxu0 %v1674
        %v1879 = vpop.f32.mrb[0].mxu0
        %v1880 = vadd.f32 %v1807, %v1879
        %v1881 = vpop.f32.mrb[0].mxu0
        %v1882 = vadd.f32 %v1809, %v1881
        %v1883 = vpop.f32.mrb[0].mxu0
        %v1884 = vadd.f32 %v1811, %v1883
        %v1885 = vpop.f32.mrb[0].mxu0
        %v1886 = vadd.f32 %v1813, %v1885
        %1887 = vmatprep.mubr.bf16.mxu0 0
        %1888 = vmatmul.mubr.bf16.gmra.mrb[0].mxu0 %v1677
        %v1889 = vpop.f32.mrb[0].mxu0
        %v1890 = vadd.f32 %v1817, %v1889
        %v1891 = vpop.f32.mrb[0].mxu0
        %v1892 = vadd.f32 %v1819, %v1891
        %v1893 = vpop.f32.mrb[0].mxu0
        %v1894 = vadd.f32 %v1821, %v1893
        %v1895 = vpop.f32.mrb[0].mxu0
        %v1896 = vadd.f32 %v1823, %v1895
        %1897 = vdwg.mxu0
        %1898 = vmatprep.subr.bf16.mxu0 0
        %1899 = vmatpush1.bf16.msra.mxu0 %v1412
        %1900 = vmatprep.subr.bf16.mxu0 0
        %1901 = vmatpush1.bf16.msra.mxu0 %v1415
        %1902 = vmatprep.subr.bf16.mxu0 0
        %1903 = vmatpush1.bf16.msra.mxu0 %v1418
        %1904 = vmatprep.subr.bf16.mxu0 0
        %1905 = vmatpush1.bf16.msra.mxu0 %v1421
        %1906 = vmatprep.subr.bf16.mxu0 0
        %1907 = vmatpush1.bf16.msra.mxu0 %v1424
        %1908 = vmatprep.subr.bf16.mxu0 0
        %1909 = vmatpush1.bf16.msra.mxu0 %v1427
        %1910 = vmatprep.subr.bf16.mxu0 0
        %1911 = vmatpush1.bf16.msra.mxu0 %v1430
        %1912 = vmatprep.subr.bf16.mxu0 0
        %1913 = vmatpush1.bf16.msra.mxu0 %v1433
        %1914 = vmatprep.subr.bf16.mxu0 0
        %1915 = vmatpush1.bf16.msra.mxu0 %v1436
        %1916 = vmatprep.subr.bf16.mxu0 0
        %1917 = vmatpush1.bf16.msra.mxu0 %v1439
        %1918 = vmatprep.subr.bf16.mxu0 0
        %1919 = vmatpush1.bf16.msra.mxu0 %v1442
        %1920 = vmatprep.subr.bf16.mxu0 0
        %1921 = vmatpush1.bf16.msra.mxu0 %v1445
        %1922 = vmatprep.subr.bf16.mxu0 0
        %1923 = vmatpush1.bf16.msra.mxu0 %v1448
        %1924 = vmatprep.subr.bf16.mxu0 0
        %1925 = vmatpush1.bf16.msra.mxu0 %v1451
        %1926 = vmatprep.subr.bf16.mxu0 0
        %1927 = vmatpush1.bf16.msra.mxu0 %v1454
        %1928 = vmatprep.subr.bf16.mxu0 0
        %1929 = vmatpush1.bf16.msra.mxu0 %v1457
        %1930 = vmatprep.mubr.bf16.mxu0 %v1631
        %1931 = vmatmul.mubr.bf16.gmra.mrb[0].mxu0 %v1630
        %v1932 = vpop.f32.mrb[0].mxu0
        %v1933 = vadd.f32 %v1529, %v1932
        %v1934 = vpop.f32.mrb[0].mxu0
        %v1935 = vpop.f32.mrb[0].mxu0
        %v1936 = vadd.f32 %v1534, %v1935
        %v1937 = vpop.f32.mrb[0].mxu0
        %1938 = vmatprep.mubr.bf16.mxu0 %v1636
        %1939 = vmatmul.mubr.bf16.gmra.mrb[0].mxu0 %v1635
        %v1940 = vpop.f32.mrb[0].mxu0
        %v1941 = vadd.f32 %v1539, %v1940
        %v1942 = vpop.f32.mrb[0].mxu0
        %v1943 = vpop.f32.mrb[0].mxu0
        %v1944 = vadd.f32 %v1544, %v1943
        %v1945 = vpop.f32.mrb[0].mxu0
        %1946 = vmatprep.mubr.bf16.mxu0 %v1641
        %1947 = vmatmul.mubr.bf16.gmra.mrb[0].mxu0 %v1640
        %v1948 = vpop.f32.mrb[0].mxu0
        %v1949 = vadd.f32 %v1549, %v1948
        %v1950 = vpop.f32.mrb[0].mxu0
        %v1951 = vpop.f32.mrb[0].mxu0
        %v1952 = vadd.f32 %v1554, %v1951
        %v1953 = vpop.f32.mrb[0].mxu0
        %1954 = vmatprep.mubr.bf16.mxu0 %v1646
        %1955 = vmatmul.mubr.bf16.gmra.mrb[0].mxu0 %v1645
        %v1956 = vpop.f32.mrb[0].mxu0
        %v1957 = vadd.f32 %v1559, %v1956
        %v1958 = vpop.f32.mrb[0].mxu0
        %v1959 = vpop.f32.mrb[0].mxu0
        %v1960 = vadd.f32 %v1564, %v1959
        %v1961 = vpop.f32.mrb[0].mxu0
        %1962 = vdwg.mxu0
        %1963 = vmatprep.subr.bf16.mxu0 0
        %1964 = vmatpush1.bf16.msra.mxu0 %v1460
        %1965 = vmatprep.subr.bf16.mxu0 0
        %1966 = vmatpush1.bf16.msra.mxu0 %v1463
        %1967 = vmatprep.subr.bf16.mxu0 0
        %1968 = vmatpush1.bf16.msra.mxu0 %v1466
        %1969 = vmatprep.subr.bf16.mxu0 0
        %1970 = vmatpush1.bf16.msra.mxu0 %v1469
        %1971 = vmatprep.subr.bf16.mxu0 0
        %1972 = vmatpush1.bf16.msra.mxu0 %v1472
        %1973 = vmatprep.subr.bf16.mxu0 0
        %1974 = vmatpush1.bf16.msra.mxu0 %v1475
        %1975 = vmatprep.subr.bf16.mxu0 0
        %1976 = vmatpush1.bf16.msra.mxu0 %v1478
        %1977 = vmatprep.subr.bf16.mxu0 0
        %1978 = vmatpush1.bf16.msra.mxu0 %v1481
        %1979 = vmatprep.subr.bf16.mxu0 0
        %1980 = vmatpush1.bf16.msra.mxu0 %v1484
        %1981 = vmatprep.subr.bf16.mxu0 0
        %1982 = vmatpush1.bf16.msra.mxu0 %v1487
        %1983 = vmatprep.subr.bf16.mxu0 0
        %1984 = vmatpush1.bf16.msra.mxu0 %v1490
        %1985 = vmatprep.subr.bf16.mxu0 0
        %1986 = vmatpush1.bf16.msra.mxu0 %v1493
        %1987 = vmatprep.subr.bf16.mxu0 0
        %1988 = vmatpush1.bf16.msra.mxu0 %v1496
        %1989 = vmatprep.subr.bf16.mxu0 0
        %1990 = vmatpush1.bf16.msra.mxu0 %v1499
        %1991 = vmatprep.subr.bf16.mxu0 0
        %1992 = vmatpush1.bf16.msra.mxu0 %v1502
        %1993 = vmatprep.subr.bf16.mxu0 0
        %1994 = vmatpush1.bf16.msra.mxu0 %v1505
        %1995 = vmatprep.mubr.bf16.mxu0 %v1633
        %1996 = vmatmul.mubr.bf16.gmra.mrb[0].mxu0 %v1632
        %v1997 = vpop.f32.mrb[0].mxu0
        %v1998 = vadd.f32 %v1933, %v1997
        %v1999 = vpop.f32.mrb[0].mxu0
        %v2000 = vpop.f32.mrb[0].mxu0
        %v2001 = vadd.f32 %v1936, %v2000
        %v2002 = vpop.f32.mrb[0].mxu0
        %2003 = vmatprep.mubr.bf16.mxu0 %v1638
        %2004 = vmatmul.mubr.bf16.gmra.mrb[0].mxu0 %v1637
        %v2005 = vpop.f32.mrb[0].mxu0
        %v2006 = vadd.f32 %v1941, %v2005
        %v2007 = vpop.f32.mrb[0].mxu0
        %v2008 = vpop.f32.mrb[0].mxu0
        %v2009 = vadd.f32 %v1944, %v2008
        %v2010 = vpop.f32.mrb[0].mxu0
        %2011 = vmatprep.mubr.bf16.mxu0 %v1643
        %2012 = vmatmul.mubr.bf16.gmra.mrb[0].mxu0 %v1642
        %v2013 = vpop.f32.mrb[0].mxu0
        %v2014 = vadd.f32 %v1949, %v2013
        %v2015 = vpop.f32.mrb[0].mxu0
        %v2016 = vpop.f32.mrb[0].mxu0
        %v2017 = vadd.f32 %v1952, %v2016
        %v2018 = vpop.f32.mrb[0].mxu0
        %2019 = vmatprep.mubr.bf16.mxu0 %v1648
        %2020 = vmatmul.mubr.bf16.gmra.mrb[0].mxu0 %v1647
        %v2021 = vpop.f32.mrb[0].mxu0
        %v2022 = vadd.f32 %v1957, %v2021
        %v2023 = vpop.f32.mrb[0].mxu0
        %v2024 = vpop.f32.mrb[0].mxu0
        %v2025 = vadd.f32 %v1960, %v2024
        %v2026 = vpop.f32.mrb[0].mxu0
        %2027 = vdwg.mxu0
        %2028 = vmatprep.subr.bf16.mxu0 0
        %2029 = vmatpush1.bf16.msra.mxu0 %v1508
        %2030 = vmatprep.subr.bf16.mxu0 0
        %2031 = vmatpush1.bf16.msra.mxu0 %v1511
        %2032 = vmatprep.subr.bf16.mxu0 0
        %2033 = vmatpush1.bf16.msra.mxu0 %v1514
        %2034 = vmatprep.subr.bf16.mxu0 0
        %2035 = vmatpush1.bf16.msra.mxu0 %v1517
        %2036 = vmatprep.subr.bf16.mxu0 0
        %2037 = vmatpush1.bf16.msra.mxu0 0
        %2038 = vmatprep.subr.bf16.mxu0 0
        %2039 = vmatpush1.bf16.msra.mxu0 0
        %2040 = vmatprep.subr.bf16.mxu0 0
        %2041 = vmatpush1.bf16.msra.mxu0 0
        %2042 = vmatprep.subr.bf16.mxu0 0
        %2043 = vmatpush1.bf16.msra.mxu0 0
        %2044 = vmatprep.subr.bf16.mxu0 0
        %2045 = vmatpush1.bf16.msra.mxu0 0
        %2046 = vmatprep.subr.bf16.mxu0 0
        %2047 = vmatpush1.bf16.msra.mxu0 0
        %2048 = vmatprep.subr.bf16.mxu0 0
        %2049 = vmatpush1.bf16.msra.mxu0 0
        %2050 = vmatprep.subr.bf16.mxu0 0
        %2051 = vmatpush1.bf16.msra.mxu0 0
        %2052 = vmatprep.subr.bf16.mxu0 0
        %2053 = vmatpush1.bf16.msra.mxu0 0
        %2054 = vmatprep.subr.bf16.mxu0 0
        %2055 = vmatpush1.bf16.msra.mxu0 0
        %2056 = vmatprep.subr.bf16.mxu0 0
        %2057 = vmatpush1.bf16.msra.mxu0 0
        %2058 = vmatprep.subr.bf16.mxu0 0
        %2059 = vmatpush1.bf16.msra.mxu0 0
        %2060 = vmatprep.mubr.bf16.mxu0 0
        %2061 = vmatmul.mubr.bf16.gmra.mrb[0].mxu0 %v1668
        %v2062 = vpop.f32.mrb[0].mxu0
        %v2063 = vadd.f32 %v1998, %v2062
        %v2064 = vpop.f32.mrb[0].mxu0
        %v2065 = vpop.f32.mrb[0].mxu0
        %v2066 = vadd.f32 %v2001, %v2065
        %v2067 = vpop.f32.mrb[0].mxu0
        %2068 = vmatprep.mubr.bf16.mxu0 0
        %2069 = vmatmul.mubr.bf16.gmra.mrb[0].mxu0 %v1671
        %v2070 = vpop.f32.mrb[0].mxu0
        %v2071 = vadd.f32 %v2006, %v2070
        %v2072 = vpop.f32.mrb[0].mxu0
        %v2073 = vpop.f32.mrb[0].mxu0
        %v2074 = vadd.f32 %v2009, %v2073
        %v2075 = vpop.f32.mrb[0].mxu0
        %2076 = vmatprep.mubr.bf16.mxu0 0
        %2077 = vmatmul.mubr.bf16.gmra.mrb[0].mxu0 %v1674
        %v2078 = vpop.f32.mrb[0].mxu0
        %v2079 = vadd.f32 %v2014, %v2078
        %v2080 = vpop.f32.mrb[0].mxu0
        %v2081 = vpop.f32.mrb[0].mxu0
        %v2082 = vadd.f32 %v2017, %v2081
        %v2083 = vpop.f32.mrb[0].mxu0
        %2084 = vmatprep.mubr.bf16.mxu0 0
        %2085 = vmatmul.mubr.bf16.gmra.mrb[0].mxu0 %v1677
        %v2086 = vpop.f32.mrb[0].mxu0
        %v2087 = vadd.f32 %v2022, %v2086
        %v2088 = vpop.f32.mrb[0].mxu0
        %v2089 = vpop.f32.mrb[0].mxu0
        %v2090 = vadd.f32 %v2025, %v2089
        %v2091 = vpop.f32.mrb[0].mxu0
        %2092 = vdwg.mxu0
        %v2093 = vmax.f32 %v1860, 0.0
        %v2094 = vmax.f32 %v1862, 0.0
        %v2095 = vmax.f32 %v2063, 0.0
        %v2096 = vmax.f32 %v1864, 0.0
        %v2097 = vmax.f32 %v1866, 0.0
        %v2098 = vmax.f32 %v2066, 0.0
        %v2099 = vmax.f32 %v1870, 0.0
        %v2100 = vmax.f32 %v1872, 0.0
        %v2101 = vmax.f32 %v2071, 0.0
        %v2102 = vmax.f32 %v1874, 0.0
        %v2103 = vmax.f32 %v1876, 0.0
        %v2104 = vmax.f32 %v2074, 0.0
        %v2105 = vmax.f32 %v1880, 0.0
        %v2106 = vmax.f32 %v1882, 0.0
        %v2107 = vmax.f32 %v2079, 0.0
        %v2108 = vmax.f32 %v1884, 0.0
        %v2109 = vmax.f32 %v1886, 0.0
        %v2110 = vmax.f32 %v2082, 0.0
        %v2111 = vmax.f32 %v1890, 0.0
        %v2112 = vmax.f32 %v1892, 0.0
        %v2113 = vmax.f32 %v2087, 0.0
        %v2114 = vmax.f32 %v1894, 0.0
        %v2115 = vmax.f32 %v1896, 0.0
        %v2116 = vmax.f32 %v2090, 0.0
        %v2118 = vlaneseq
        %v2119 = vshrl.u32 %v2118, 7
        %v2120 = vsub.s32 0, %v2119
        %v2121 = vrot.slane %v273, %v2120
        %v2122 = vlaneseq
        %v2123 = vshrl.u32 %v2122, 7
        %v2124 = vsub.s32 1, %v2123
        %v2125 = vrot.slane %v273, %v2124
        %v2126 = vlaneseq
        %v2127 = vshrl.u32 %v2126, 7
        %v2128 = vsub.s32 2, %v2127
        %v2129 = vrot.slane %v273, %v2128
        %v2133 = vmul.f32 %v2093, %v2121
        %v2134 = vmul.f32 %v2094, %v2125
        %v2135 = vmul.f32 %v2095, %v2129
        %v2136 = vmul.f32 %v2096, %v2121
        %v2137 = vmul.f32 %v2097, %v2125
        %v2138 = vmul.f32 %v2098, %v2129
        %v2139 = vmul.f32 %v2099, %v2121
        %v2140 = vmul.f32 %v2100, %v2125
        %v2141 = vmul.f32 %v2101, %v2129
        %v2142 = vmul.f32 %v2102, %v2121
        %v2143 = vmul.f32 %v2103, %v2125
        %v2144 = vmul.f32 %v2104, %v2129
        %v2145 = vmul.f32 %v2105, %v2121
        %v2146 = vmul.f32 %v2106, %v2125
        %v2147 = vmul.f32 %v2107, %v2129
        %v2148 = vmul.f32 %v2108, %v2121
        %v2149 = vmul.f32 %v2109, %v2125
        %v2150 = vmul.f32 %v2110, %v2129
        %v2151 = vmul.f32 %v2111, %v2121
        %v2152 = vmul.f32 %v2112, %v2125
        %v2153 = vmul.f32 %v2113, %v2129
        %v2154 = vmul.f32 %v2114, %v2121
        %v2155 = vmul.f32 %v2115, %v2125
        %v2156 = vmul.f32 %v2116, %v2129
        %v2157 = vpack.c.bf16 %v2136, %v2133
        %v2158 = vpack.c.bf16 %v2137, %v2134
        %v2159 = vpack.c.bf16 %v2138, %v2135
        %v2160 = vpack.c.bf16 %v2142, %v2139
        %v2161 = vpack.c.bf16 %v2143, %v2140
        %v2162 = vpack.c.bf16 %v2144, %v2141
        %v2163 = vpack.c.bf16 %v2148, %v2145
        %v2164 = vpack.c.bf16 %v2149, %v2146
        %v2165 = vpack.c.bf16 %v2150, %v2147
        %v2166 = vpack.c.bf16 %v2154, %v2151
        %v2167 = vpack.c.bf16 %v2155, %v2152
        %v2168 = vpack.c.bf16 %v2156, %v2153
        %2169 = vst [vmem:[#allocation3] sm:$0xff] %v2157
        %2170 = vst [vmem:[#allocation3 + $0x8] sm:$0xff] %v2158
        %2171 = vst [vmem:[#allocation3 + $0x10] sm:$0xff] %v2159
        %2172 = vst [vmem:[#allocation3 + $0x20] sm:$0xff] %v2160
        %2173 = vst [vmem:[#allocation3 + $0x28] sm:$0xff] %v2161
        %2174 = vst [vmem:[#allocation3 + $0x30] sm:$0xff] %v2162
        %2175 = vst [vmem:[#allocation3 + $0x40] sm:$0xff] %v2163
        %2176 = vst [vmem:[#allocation3 + $0x48] sm:$0xff] %v2164
        %2177 = vst [vmem:[#allocation3 + $0x50] sm:$0xff] %v2165
        %2178 = vst [vmem:[#allocation3 + $0x60] sm:$0xff] %v2166
        %2179 = vst [vmem:[#allocation3 + $0x68] sm:$0xff] %v2167
        %2180 = vst [vmem:[#allocation3 + $0x70] sm:$0xff] %v2168
        %2181 = vst [vmem:[#allocation3 + $0x18] sm:$0xff] 0
        %2182 = vst [vmem:[#allocation3 + $0x38] sm:$0xff] 0
        %2183 = vst [vmem:[#allocation3 + $0x58] sm:$0xff] 0
        %2184 = vst [vmem:[#allocation3 + $0x78] sm:$0xff] 0
        %v2185 = vld [vmem:[#allocation3] sm:$0xff]
        %v2186 = vld [vmem:[#allocation3 + $0x8] sm:$0xff]
        %v2187 = vld [vmem:[#allocation3 + $0x10] sm:$0xff]
        %v2188 = vld [vmem:[#allocation3 + $0x20] sm:$0xff]
        %v2189 = vld [vmem:[#allocation3 + $0x28] sm:$0xff]
        %v2190 = vld [vmem:[#allocation3 + $0x30] sm:$0xff]
        %v2191 = vld [vmem:[#allocation3 + $0x40] sm:$0xff]
        %v2192 = vld [vmem:[#allocation3 + $0x48] sm:$0xff]
        %v2193 = vld [vmem:[#allocation3 + $0x50] sm:$0xff]
        %v2194 = vld [vmem:[#allocation3 + $0x60] sm:$0xff]
        %v2195 = vld [vmem:[#allocation3 + $0x68] sm:$0xff]
        %v2196 = vld [vmem:[#allocation3 + $0x70] sm:$0xff]
        %2197 = vst [vmem:[#allocation2] sm:$0xff] %v2185
        %2198 = vst [vmem:[#allocation2 + $0x8] sm:$0xff] %v2186
        %2199 = vst [vmem:[#allocation2 + $0x10] sm:$0xff] %v2187
        %2200 = vst [vmem:[#allocation2 + $0x18] sm:$0xff] %v2188
        %2201 = vst [vmem:[#allocation2 + $0x20] sm:$0xff] %v2189
        %2202 = vst [vmem:[#allocation2 + $0x28] sm:$0xff] %v2190
        %2203 = vst [vmem:[#allocation2 + $0x30] sm:$0xff] %v2191
        %2204 = vst [vmem:[#allocation2 + $0x38] sm:$0xff] %v2192
        %2205 = vst [vmem:[#allocation2 + $0x40] sm:$0xff] %v2193
        %2206 = vst [vmem:[#allocation2 + $0x48] sm:$0xff] %v2194
        %2207 = vst [vmem:[#allocation2 + $0x50] sm:$0xff] %v2195
        %2208 = vst [vmem:[#allocation2 + $0x58] sm:$0xff] %v2196
        %v2209 = vld [vmem:[#allocation3] sm:$0xff]
        %v2210 = vld [vmem:[#allocation3 + $0x8] sm:$0xff]
        %v2211 = vld [vmem:[#allocation3 + $0x10] sm:$0xff]
        %v2212 = vld [vmem:[#allocation3 + $0x18] sm:$0xff]
        %v2213 = vld [vmem:[#allocation3 + $0x20] sm:$0xff]
        %v2214 = vld [vmem:[#allocation3 + $0x28] sm:$0xff]
        %v2215 = vld [vmem:[#allocation3 + $0x30] sm:$0xff]
        %v2216 = vld [vmem:[#allocation3 + $0x38] sm:$0xff]
        %v2217 = vld [vmem:[#allocation3 + $0x40] sm:$0xff]
        %v2218 = vld [vmem:[#allocation3 + $0x48] sm:$0xff]
        %v2219 = vld [vmem:[#allocation3 + $0x50] sm:$0xff]
        %v2220 = vld [vmem:[#allocation3 + $0x58] sm:$0xff]
        %v2221 = vld [vmem:[#allocation3 + $0x60] sm:$0xff]
        %v2222 = vld [vmem:[#allocation3 + $0x68] sm:$0xff]
        %v2223 = vld [vmem:[#allocation3 + $0x70] sm:$0xff]
        %v2224 = vld [vmem:[#allocation3 + $0x78] sm:$0xff]
        %2241 = vrot.lane.b32.xlu0 %v2209, 127
        %v2242 = vpop.permute.xlu0 %2241
        %2243 = vrot.lane.b32.xlu0 %v2210, 127
        %v2244 = vpop.permute.xlu0 %2243
        %2245 = vrot.lane.b32.xlu0 %v2211, 127
        %v2246 = vpop.permute.xlu0 %2245
        %2247 = vrot.lane.b32.xlu0 %v2212, 127
        %v2248 = vpop.permute.xlu0 %2247
        %2249 = vrot.lane.b32.xlu0 %v2213, 127
        %v2250 = vpop.permute.xlu0 %2249
        %2251 = vrot.lane.b32.xlu0 %v2214, 127
        %v2252 = vpop.permute.xlu0 %2251
        %2253 = vrot.lane.b32.xlu0 %v2215, 127
        %v2254 = vpop.permute.xlu0 %2253
        %2255 = vrot.lane.b32.xlu0 %v2216, 127
        %v2256 = vpop.permute.xlu0 %2255
        %2257 = vrot.lane.b32.xlu0 %v2217, 127
        %v2258 = vpop.permute.xlu0 %2257
        %2259 = vrot.lane.b32.xlu0 %v2218, 127
        %v2260 = vpop.permute.xlu0 %2259
        %2261 = vrot.lane.b32.xlu0 %v2219, 127
        %v2262 = vpop.permute.xlu0 %2261
        %2263 = vrot.lane.b32.xlu0 %v2220, 127
        %v2264 = vpop.permute.xlu0 %2263
        %2265 = vrot.lane.b32.xlu0 %v2221, 127
        %v2266 = vpop.permute.xlu0 %2265
        %2267 = vrot.lane.b32.xlu0 %v2222, 127
        %v2268 = vpop.permute.xlu0 %2267
        %2269 = vrot.lane.b32.xlu0 %v2223, 127
        %v2270 = vpop.permute.xlu0 %2269
        %2271 = vrot.lane.b32.xlu0 %v2224, 127
        %v2272 = vpop.permute.xlu0 %2271
        %v2273 = vsel %vm418, %v2242, %v2244
        %v2274 = vsel %vm418, %v2244, %v2246
        %v2275 = vsel %vm418, %v2246, %v2248
        %v2276 = vsel %vm418, %v2250, %v2252
        %v2277 = vsel %vm418, %v2252, %v2254
        %v2278 = vsel %vm418, %v2254, %v2256
        %v2279 = vsel %vm418, %v2258, %v2260
        %v2280 = vsel %vm418, %v2260, %v2262
        %v2281 = vsel %vm418, %v2262, %v2264
        %v2282 = vsel %vm418, %v2266, %v2268
        %v2283 = vsel %vm418, %v2268, %v2270
        %v2284 = vsel %vm418, %v2270, %v2272
        %2297 = vst [vmem:[#allocation2 + $0x60] sm:$0xff] %v2273
        %2298 = vst [vmem:[#allocation2 + $0x68] sm:$0xff] %v2274
        %2299 = vst [vmem:[#allocation2 + $0x70] sm:$0xff] %v2275
        %2300 = vst [vmem:[#allocation2 + $0x78] sm:$0xff] %v2276
        %2301 = vst [vmem:[#allocation2 + $0x80] sm:$0xff] %v2277
        %2302 = vst [vmem:[#allocation2 + $0x88] sm:$0xff] %v2278
        %2303 = vst [vmem:[#allocation2 + $0x90] sm:$0xff] %v2279
        %2304 = vst [vmem:[#allocation2 + $0x98] sm:$0xff] %v2280
        %2305 = vst [vmem:[#allocation2 + $0xa0] sm:$0xff] %v2281
        %2306 = vst [vmem:[#allocation2 + $0xa8] sm:$0xff] %v2282
        %2307 = vst [vmem:[#allocation2 + $0xb0] sm:$0xff] %v2283
        %2308 = vst [vmem:[#allocation2 + $0xb8] sm:$0xff] %v2284
        %v2309 = vld [vmem:[#allocation3] sm:$0xff]
        %v2310 = vld [vmem:[#allocation3 + $0x8] sm:$0xff]
        %v2311 = vld [vmem:[#allocation3 + $0x10] sm:$0xff]
        %v2312 = vld [vmem:[#allocation3 + $0x18] sm:$0xff]
        %v2313 = vld [vmem:[#allocation3 + $0x20] sm:$0xff]
        %v2314 = vld [vmem:[#allocation3 + $0x28] sm:$0xff]
        %v2315 = vld [vmem:[#allocation3 + $0x30] sm:$0xff]
        %v2316 = vld [vmem:[#allocation3 + $0x38] sm:$0xff]
        %v2317 = vld [vmem:[#allocation3 + $0x40] sm:$0xff]
        %v2318 = vld [vmem:[#allocation3 + $0x48] sm:$0xff]
        %v2319 = vld [vmem:[#allocation3 + $0x50] sm:$0xff]
        %v2320 = vld [vmem:[#allocation3 + $0x58] sm:$0xff]
        %v2321 = vld [vmem:[#allocation3 + $0x60] sm:$0xff]
        %v2322 = vld [vmem:[#allocation3 + $0x68] sm:$0xff]
        %v2323 = vld [vmem:[#allocation3 + $0x70] sm:$0xff]
        %v2324 = vld [vmem:[#allocation3 + $0x78] sm:$0xff]
        %2341 = vrot.lane.b32.xlu0 %v2309, 126
        %v2342 = vpop.permute.xlu0 %2341
        %2343 = vrot.lane.b32.xlu0 %v2310, 126
        %v2344 = vpop.permute.xlu0 %2343
        %2345 = vrot.lane.b32.xlu0 %v2311, 126
        %v2346 = vpop.permute.xlu0 %2345
        %2347 = vrot.lane.b32.xlu0 %v2312, 126
        %v2348 = vpop.permute.xlu0 %2347
        %2349 = vrot.lane.b32.xlu0 %v2313, 126
        %v2350 = vpop.permute.xlu0 %2349
        %2351 = vrot.lane.b32.xlu0 %v2314, 126
        %v2352 = vpop.permute.xlu0 %2351
        %2353 = vrot.lane.b32.xlu0 %v2315, 126
        %v2354 = vpop.permute.xlu0 %2353
        %2355 = vrot.lane.b32.xlu0 %v2316, 126
        %v2356 = vpop.permute.xlu0 %2355
        %2357 = vrot.lane.b32.xlu0 %v2317, 126
        %v2358 = vpop.permute.xlu0 %2357
        %2359 = vrot.lane.b32.xlu0 %v2318, 126
        %v2360 = vpop.permute.xlu0 %2359
        %2361 = vrot.lane.b32.xlu0 %v2319, 126
        %v2362 = vpop.permute.xlu0 %2361
        %2363 = vrot.lane.b32.xlu0 %v2320, 126
        %v2364 = vpop.permute.xlu0 %2363
        %2365 = vrot.lane.b32.xlu0 %v2321, 126
        %v2366 = vpop.permute.xlu0 %2365
        %2367 = vrot.lane.b32.xlu0 %v2322, 126
        %v2368 = vpop.permute.xlu0 %2367
        %2369 = vrot.lane.b32.xlu0 %v2323, 126
        %v2370 = vpop.permute.xlu0 %2369
        %2371 = vrot.lane.b32.xlu0 %v2324, 126
        %v2372 = vpop.permute.xlu0 %2371
        %v2373 = vsel %vm551, %v2342, %v2344
        %v2374 = vsel %vm551, %v2344, %v2346
        %v2375 = vsel %vm551, %v2346, %v2348
        %v2376 = vsel %vm551, %v2350, %v2352
        %v2377 = vsel %vm551, %v2352, %v2354
        %v2378 = vsel %vm551, %v2354, %v2356
        %v2379 = vsel %vm551, %v2358, %v2360
        %v2380 = vsel %vm551, %v2360, %v2362
        %v2381 = vsel %vm551, %v2362, %v2364
        %v2382 = vsel %vm551, %v2366, %v2368
        %v2383 = vsel %vm551, %v2368, %v2370
        %v2384 = vsel %vm551, %v2370, %v2372
        %2397 = vst [vmem:[#allocation2 + $0xc0] sm:$0xff] %v2373
        %2398 = vst [vmem:[#allocation2 + $0xc8] sm:$0xff] %v2374
        %2399 = vst [vmem:[#allocation2 + $0xd0] sm:$0xff] %v2375
        %2400 = vst [vmem:[#allocation2 + $0xd8] sm:$0xff] %v2376
        %2401 = vst [vmem:[#allocation2 + $0xe0] sm:$0xff] %v2377
        %2402 = vst [vmem:[#allocation2 + $0xe8] sm:$0xff] %v2378
        %2403 = vst [vmem:[#allocation2 + $0xf0] sm:$0xff] %v2379
        %2404 = vst [vmem:[#allocation2 + $0xf8] sm:$0xff] %v2380
        %2405 = vst [vmem:[#allocation2 + $0x100] sm:$0xff] %v2381
        %2406 = vst [vmem:[#allocation2 + $0x108] sm:$0xff] %v2382
        %2407 = vst [vmem:[#allocation2 + $0x110] sm:$0xff] %v2383
        %2408 = vst [vmem:[#allocation2 + $0x118] sm:$0xff] %v2384
        %v2409 = vld [vmem:[#allocation3] sm:$0xff]
        %v2410 = vld [vmem:[#allocation3 + $0x8] sm:$0xff]
        %v2411 = vld [vmem:[#allocation3 + $0x10] sm:$0xff]
        %v2412 = vld [vmem:[#allocation3 + $0x18] sm:$0xff]
        %v2413 = vld [vmem:[#allocation3 + $0x20] sm:$0xff]
        %v2414 = vld [vmem:[#allocation3 + $0x28] sm:$0xff]
        %v2415 = vld [vmem:[#allocation3 + $0x30] sm:$0xff]
        %v2416 = vld [vmem:[#allocation3 + $0x38] sm:$0xff]
        %v2417 = vld [vmem:[#allocation3 + $0x40] sm:$0xff]
        %v2418 = vld [vmem:[#allocation3 + $0x48] sm:$0xff]
        %v2419 = vld [vmem:[#allocation3 + $0x50] sm:$0xff]
        %v2420 = vld [vmem:[#allocation3 + $0x58] sm:$0xff]
        %v2421 = vld [vmem:[#allocation3 + $0x60] sm:$0xff]
        %v2422 = vld [vmem:[#allocation3 + $0x68] sm:$0xff]
        %v2423 = vld [vmem:[#allocation3 + $0x70] sm:$0xff]
        %v2424 = vld [vmem:[#allocation3 + $0x78] sm:$0xff]
        %2441 = vrot.lane.b32.xlu0 %v2409, 110
        %v2442 = vpop.permute.xlu0 %2441
        %2443 = vrot.lane.b32.xlu0 %v2410, 110
        %v2444 = vpop.permute.xlu0 %2443
        %2445 = vrot.lane.b32.xlu0 %v2411, 110
        %v2446 = vpop.permute.xlu0 %2445
        %2447 = vrot.lane.b32.xlu0 %v2412, 110
        %v2448 = vpop.permute.xlu0 %2447
        %2449 = vrot.lane.b32.xlu0 %v2413, 110
        %v2450 = vpop.permute.xlu0 %2449
        %2451 = vrot.lane.b32.xlu0 %v2414, 110
        %v2452 = vpop.permute.xlu0 %2451
        %2453 = vrot.lane.b32.xlu0 %v2415, 110
        %v2454 = vpop.permute.xlu0 %2453
        %2455 = vrot.lane.b32.xlu0 %v2416, 110
        %v2456 = vpop.permute.xlu0 %2455
        %2457 = vrot.lane.b32.xlu0 %v2417, 110
        %v2458 = vpop.permute.xlu0 %2457
        %2459 = vrot.lane.b32.xlu0 %v2418, 110
        %v2460 = vpop.permute.xlu0 %2459
        %2461 = vrot.lane.b32.xlu0 %v2419, 110
        %v2462 = vpop.permute.xlu0 %2461
        %2463 = vrot.lane.b32.xlu0 %v2420, 110
        %v2464 = vpop.permute.xlu0 %2463
        %2465 = vrot.lane.b32.xlu0 %v2421, 110
        %v2466 = vpop.permute.xlu0 %2465
        %2467 = vrot.lane.b32.xlu0 %v2422, 110
        %v2468 = vpop.permute.xlu0 %2467
        %2469 = vrot.lane.b32.xlu0 %v2423, 110
        %v2470 = vpop.permute.xlu0 %2469
        %2471 = vrot.lane.b32.xlu0 %v2424, 110
        %v2472 = vpop.permute.xlu0 %2471
        %v2473 = vsel %vm684, %v2442, %v2444
        %v2474 = vsel %vm684, %v2444, %v2446
        %v2475 = vsel %vm684, %v2446, %v2448
        %v2476 = vsel %vm684, %v2450, %v2452
        %v2477 = vsel %vm684, %v2452, %v2454
        %v2478 = vsel %vm684, %v2454, %v2456
        %v2479 = vsel %vm684, %v2458, %v2460
        %v2480 = vsel %vm684, %v2460, %v2462
        %v2481 = vsel %vm684, %v2462, %v2464
        %v2482 = vsel %vm684, %v2466, %v2468
        %v2483 = vsel %vm684, %v2468, %v2470
        %v2484 = vsel %vm684, %v2470, %v2472
        %2497 = vst [vmem:[#allocation2 + $0x120] sm:$0xff] %v2473
        %2498 = vst [vmem:[#allocation2 + $0x128] sm:$0xff] %v2474
        %2499 = vst [vmem:[#allocation2 + $0x130] sm:$0xff] %v2475
        %2500 = vst [vmem:[#allocation2 + $0x138] sm:$0xff] %v2476
        %2501 = vst [vmem:[#allocation2 + $0x140] sm:$0xff] %v2477
        %2502 = vst [vmem:[#allocation2 + $0x148] sm:$0xff] %v2478
        %2503 = vst [vmem:[#allocation2 + $0x150] sm:$0xff] %v2479
        %2504 = vst [vmem:[#allocation2 + $0x158] sm:$0xff] %v2480
        %2505 = vst [vmem:[#allocation2 + $0x160] sm:$0xff] %v2481
        %2506 = vst [vmem:[#allocation2 + $0x168] sm:$0xff] %v2482
        %2507 = vst [vmem:[#allocation2 + $0x170] sm:$0xff] %v2483
        %2508 = vst [vmem:[#allocation2 + $0x178] sm:$0xff] %v2484
        %v2509 = vld [vmem:[#allocation3] sm:$0xff]
        %v2510 = vld [vmem:[#allocation3 + $0x8] sm:$0xff]
        %v2511 = vld [vmem:[#allocation3 + $0x10] sm:$0xff]
        %v2512 = vld [vmem:[#allocation3 + $0x18] sm:$0xff]
        %v2513 = vld [vmem:[#allocation3 + $0x20] sm:$0xff]
        %v2514 = vld [vmem:[#allocation3 + $0x28] sm:$0xff]
        %v2515 = vld [vmem:[#allocation3 + $0x30] sm:$0xff]
        %v2516 = vld [vmem:[#allocation3 + $0x38] sm:$0xff]
        %v2517 = vld [vmem:[#allocation3 + $0x40] sm:$0xff]
        %v2518 = vld [vmem:[#allocation3 + $0x48] sm:$0xff]
        %v2519 = vld [vmem:[#allocation3 + $0x50] sm:$0xff]
        %v2520 = vld [vmem:[#allocation3 + $0x58] sm:$0xff]
        %v2521 = vld [vmem:[#allocation3 + $0x60] sm:$0xff]
        %v2522 = vld [vmem:[#allocation3 + $0x68] sm:$0xff]
        %v2523 = vld [vmem:[#allocation3 + $0x70] sm:$0xff]
        %v2524 = vld [vmem:[#allocation3 + $0x78] sm:$0xff]
        %2541 = vrot.lane.b32.xlu0 %v2509, 109
        %v2542 = vpop.permute.xlu0 %2541
        %2543 = vrot.lane.b32.xlu0 %v2510, 109
        %v2544 = vpop.permute.xlu0 %2543
        %2545 = vrot.lane.b32.xlu0 %v2511, 109
        %v2546 = vpop.permute.xlu0 %2545
        %2547 = vrot.lane.b32.xlu0 %v2512, 109
        %v2548 = vpop.permute.xlu0 %2547
        %2549 = vrot.lane.b32.xlu0 %v2513, 109
        %v2550 = vpop.permute.xlu0 %2549
        %2551 = vrot.lane.b32.xlu0 %v2514, 109
        %v2552 = vpop.permute.xlu0 %2551
        %2553 = vrot.lane.b32.xlu0 %v2515, 109
        %v2554 = vpop.permute.xlu0 %2553
        %2555 = vrot.lane.b32.xlu0 %v2516, 109
        %v2556 = vpop.permute.xlu0 %2555
        %2557 = vrot.lane.b32.xlu0 %v2517, 109
        %v2558 = vpop.permute.xlu0 %2557
        %2559 = vrot.lane.b32.xlu0 %v2518, 109
        %v2560 = vpop.permute.xlu0 %2559
        %2561 = vrot.lane.b32.xlu0 %v2519, 109
        %v2562 = vpop.permute.xlu0 %2561
        %2563 = vrot.lane.b32.xlu0 %v2520, 109
        %v2564 = vpop.permute.xlu0 %2563
        %2565 = vrot.lane.b32.xlu0 %v2521, 109
        %v2566 = vpop.permute.xlu0 %2565
        %2567 = vrot.lane.b32.xlu0 %v2522, 109
        %v2568 = vpop.permute.xlu0 %2567
        %2569 = vrot.lane.b32.xlu0 %v2523, 109
        %v2570 = vpop.permute.xlu0 %2569
        %2571 = vrot.lane.b32.xlu0 %v2524, 109
        %v2572 = vpop.permute.xlu0 %2571
        %v2573 = vsel %vm817, %v2542, %v2544
        %v2574 = vsel %vm817, %v2544, %v2546
        %v2575 = vsel %vm817, %v2546, %v2548
        %v2576 = vsel %vm817, %v2550, %v2552
        %v2577 = vsel %vm817, %v2552, %v2554
        %v2578 = vsel %vm817, %v2554, %v2556
        %v2579 = vsel %vm817, %v2558, %v2560
        %v2580 = vsel %vm817, %v2560, %v2562
        %v2581 = vsel %vm817, %v2562, %v2564
        %v2582 = vsel %vm817, %v2566, %v2568
        %v2583 = vsel %vm817, %v2568, %v2570
        %v2584 = vsel %vm817, %v2570, %v2572
        %2597 = vst [vmem:[#allocation2 + $0x180] sm:$0xff] %v2573
        %2598 = vst [vmem:[#allocation2 + $0x188] sm:$0xff] %v2574
        %2599 = vst [vmem:[#allocation2 + $0x190] sm:$0xff] %v2575
        %2600 = vst [vmem:[#allocation2 + $0x198] sm:$0xff] %v2576
        %2601 = vst [vmem:[#allocation2 + $0x1a0] sm:$0xff] %v2577
        %2602 = vst [vmem:[#allocation2 + $0x1a8] sm:$0xff] %v2578
        %2603 = vst [vmem:[#allocation2 + $0x1b0] sm:$0xff] %v2579
        %2604 = vst [vmem:[#allocation2 + $0x1b8] sm:$0xff] %v2580
        %2605 = vst [vmem:[#allocation2 + $0x1c0] sm:$0xff] %v2581
        %2606 = vst [vmem:[#allocation2 + $0x1c8] sm:$0xff] %v2582
        %2607 = vst [vmem:[#allocation2 + $0x1d0] sm:$0xff] %v2583
        %2608 = vst [vmem:[#allocation2 + $0x1d8] sm:$0xff] %v2584
        %v2609 = vld [vmem:[#allocation3] sm:$0xff]
        %v2610 = vld [vmem:[#allocation3 + $0x8] sm:$0xff]
        %v2611 = vld [vmem:[#allocation3 + $0x10] sm:$0xff]
        %v2612 = vld [vmem:[#allocation3 + $0x18] sm:$0xff]
        %v2613 = vld [vmem:[#allocation3 + $0x20] sm:$0xff]
        %v2614 = vld [vmem:[#allocation3 + $0x28] sm:$0xff]
        %v2615 = vld [vmem:[#allocation3 + $0x30] sm:$0xff]
        %v2616 = vld [vmem:[#allocation3 + $0x38] sm:$0xff]
        %v2617 = vld [vmem:[#allocation3 + $0x40] sm:$0xff]
        %v2618 = vld [vmem:[#allocation3 + $0x48] sm:$0xff]
        %v2619 = vld [vmem:[#allocation3 + $0x50] sm:$0xff]
        %v2620 = vld [vmem:[#allocation3 + $0x58] sm:$0xff]
        %v2621 = vld [vmem:[#allocation3 + $0x60] sm:$0xff]
        %v2622 = vld [vmem:[#allocation3 + $0x68] sm:$0xff]
        %v2623 = vld [vmem:[#allocation3 + $0x70] sm:$0xff]
        %v2624 = vld [vmem:[#allocation3 + $0x78] sm:$0xff]
        %2641 = vrot.lane.b32.xlu0 %v2609, 108
        %v2642 = vpop.permute.xlu0 %2641
        %2643 = vrot.lane.b32.xlu0 %v2610, 108
        %v2644 = vpop.permute.xlu0 %2643
        %2645 = vrot.lane.b32.xlu0 %v2611, 108
        %v2646 = vpop.permute.xlu0 %2645
        %2647 = vrot.lane.b32.xlu0 %v2612, 108
        %v2648 = vpop.permute.xlu0 %2647
        %2649 = vrot.lane.b32.xlu0 %v2613, 108
        %v2650 = vpop.permute.xlu0 %2649
        %2651 = vrot.lane.b32.xlu0 %v2614, 108
        %v2652 = vpop.permute.xlu0 %2651
        %2653 = vrot.lane.b32.xlu0 %v2615, 108
        %v2654 = vpop.permute.xlu0 %2653
        %2655 = vrot.lane.b32.xlu0 %v2616, 108
        %v2656 = vpop.permute.xlu0 %2655
        %2657 = vrot.lane.b32.xlu0 %v2617, 108
        %v2658 = vpop.permute.xlu0 %2657
        %2659 = vrot.lane.b32.xlu0 %v2618, 108
        %v2660 = vpop.permute.xlu0 %2659
        %2661 = vrot.lane.b32.xlu0 %v2619, 108
        %v2662 = vpop.permute.xlu0 %2661
        %2663 = vrot.lane.b32.xlu0 %v2620, 108
        %v2664 = vpop.permute.xlu0 %2663
        %2665 = vrot.lane.b32.xlu0 %v2621, 108
        %v2666 = vpop.permute.xlu0 %2665
        %2667 = vrot.lane.b32.xlu0 %v2622, 108
        %v2668 = vpop.permute.xlu0 %2667
        %2669 = vrot.lane.b32.xlu0 %v2623, 108
        %v2670 = vpop.permute.xlu0 %2669
        %2671 = vrot.lane.b32.xlu0 %v2624, 108
        %v2672 = vpop.permute.xlu0 %2671
        %v2673 = vsel %vm950, %v2642, %v2644
        %v2674 = vsel %vm950, %v2644, %v2646
        %v2675 = vsel %vm950, %v2646, %v2648
        %v2676 = vsel %vm950, %v2650, %v2652
        %v2677 = vsel %vm950, %v2652, %v2654
        %v2678 = vsel %vm950, %v2654, %v2656
        %v2679 = vsel %vm950, %v2658, %v2660
        %v2680 = vsel %vm950, %v2660, %v2662
        %v2681 = vsel %vm950, %v2662, %v2664
        %v2682 = vsel %vm950, %v2666, %v2668
        %v2683 = vsel %vm950, %v2668, %v2670
        %v2684 = vsel %vm950, %v2670, %v2672
        %2697 = vst [vmem:[#allocation2 + $0x1e0] sm:$0xff] %v2673
        %2698 = vst [vmem:[#allocation2 + $0x1e8] sm:$0xff] %v2674
        %2699 = vst [vmem:[#allocation2 + $0x1f0] sm:$0xff] %v2675
        %2700 = vst [vmem:[#allocation2 + $0x1f8] sm:$0xff] %v2676
        %2701 = vst [vmem:[#allocation2 + $0x200] sm:$0xff] %v2677
        %2702 = vst [vmem:[#allocation2 + $0x208] sm:$0xff] %v2678
        %2703 = vst [vmem:[#allocation2 + $0x210] sm:$0xff] %v2679
        %2704 = vst [vmem:[#allocation2 + $0x218] sm:$0xff] %v2680
        %2705 = vst [vmem:[#allocation2 + $0x220] sm:$0xff] %v2681
        %2706 = vst [vmem:[#allocation2 + $0x228] sm:$0xff] %v2682
        %2707 = vst [vmem:[#allocation2 + $0x230] sm:$0xff] %v2683
        %2708 = vst [vmem:[#allocation2 + $0x238] sm:$0xff] %v2684
        %v2709 = vld [vmem:[#allocation3] sm:$0xff]
        %v2710 = vld [vmem:[#allocation3 + $0x8] sm:$0xff]
        %v2711 = vld [vmem:[#allocation3 + $0x10] sm:$0xff]
        %v2712 = vld [vmem:[#allocation3 + $0x18] sm:$0xff]
        %v2713 = vld [vmem:[#allocation3 + $0x20] sm:$0xff]
        %v2714 = vld [vmem:[#allocation3 + $0x28] sm:$0xff]
        %v2715 = vld [vmem:[#allocation3 + $0x30] sm:$0xff]
        %v2716 = vld [vmem:[#allocation3 + $0x38] sm:$0xff]
        %v2717 = vld [vmem:[#allocation3 + $0x40] sm:$0xff]
        %v2718 = vld [vmem:[#allocation3 + $0x48] sm:$0xff]
        %v2719 = vld [vmem:[#allocation3 + $0x50] sm:$0xff]
        %v2720 = vld [vmem:[#allocation3 + $0x58] sm:$0xff]
        %v2721 = vld [vmem:[#allocation3 + $0x60] sm:$0xff]
        %v2722 = vld [vmem:[#allocation3 + $0x68] sm:$0xff]
        %v2723 = vld [vmem:[#allocation3 + $0x70] sm:$0xff]
        %v2724 = vld [vmem:[#allocation3 + $0x78] sm:$0xff]
        %2741 = vrot.lane.b32.xlu0 %v2709, 92
        %v2742 = vpop.permute.xlu0 %2741
        %2743 = vrot.lane.b32.xlu0 %v2710, 92
        %v2744 = vpop.permute.xlu0 %2743
        %2745 = vrot.lane.b32.xlu0 %v2711, 92
        %v2746 = vpop.permute.xlu0 %2745
        %2747 = vrot.lane.b32.xlu0 %v2712, 92
        %v2748 = vpop.permute.xlu0 %2747
        %2749 = vrot.lane.b32.xlu0 %v2713, 92
        %v2750 = vpop.permute.xlu0 %2749
        %2751 = vrot.lane.b32.xlu0 %v2714, 92
        %v2752 = vpop.permute.xlu0 %2751
        %2753 = vrot.lane.b32.xlu0 %v2715, 92
        %v2754 = vpop.permute.xlu0 %2753
        %2755 = vrot.lane.b32.xlu0 %v2716, 92
        %v2756 = vpop.permute.xlu0 %2755
        %2757 = vrot.lane.b32.xlu0 %v2717, 92
        %v2758 = vpop.permute.xlu0 %2757
        %2759 = vrot.lane.b32.xlu0 %v2718, 92
        %v2760 = vpop.permute.xlu0 %2759
        %2761 = vrot.lane.b32.xlu0 %v2719, 92
        %v2762 = vpop.permute.xlu0 %2761
        %2763 = vrot.lane.b32.xlu0 %v2720, 92
        %v2764 = vpop.permute.xlu0 %2763
        %2765 = vrot.lane.b32.xlu0 %v2721, 92
        %v2766 = vpop.permute.xlu0 %2765
        %2767 = vrot.lane.b32.xlu0 %v2722, 92
        %v2768 = vpop.permute.xlu0 %2767
        %2769 = vrot.lane.b32.xlu0 %v2723, 92
        %v2770 = vpop.permute.xlu0 %2769
        %2771 = vrot.lane.b32.xlu0 %v2724, 92
        %v2772 = vpop.permute.xlu0 %2771
        %v2773 = vsel %vm1083, %v2742, %v2744
        %v2774 = vsel %vm1083, %v2744, %v2746
        %v2775 = vsel %vm1083, %v2746, %v2748
        %v2776 = vsel %vm1083, %v2750, %v2752
        %v2777 = vsel %vm1083, %v2752, %v2754
        %v2778 = vsel %vm1083, %v2754, %v2756
        %v2779 = vsel %vm1083, %v2758, %v2760
        %v2780 = vsel %vm1083, %v2760, %v2762
        %v2781 = vsel %vm1083, %v2762, %v2764
        %v2782 = vsel %vm1083, %v2766, %v2768
        %v2783 = vsel %vm1083, %v2768, %v2770
        %v2784 = vsel %vm1083, %v2770, %v2772
        %2797 = vst [vmem:[#allocation2 + $0x240] sm:$0xff] %v2773
        %2798 = vst [vmem:[#allocation2 + $0x248] sm:$0xff] %v2774
        %2799 = vst [vmem:[#allocation2 + $0x250] sm:$0xff] %v2775
        %2800 = vst [vmem:[#allocation2 + $0x258] sm:$0xff] %v2776
        %2801 = vst [vmem:[#allocation2 + $0x260] sm:$0xff] %v2777
        %2802 = vst [vmem:[#allocation2 + $0x268] sm:$0xff] %v2778
        %2803 = vst [vmem:[#allocation2 + $0x270] sm:$0xff] %v2779
        %2804 = vst [vmem:[#allocation2 + $0x278] sm:$0xff] %v2780
        %2805 = vst [vmem:[#allocation2 + $0x280] sm:$0xff] %v2781
        %2806 = vst [vmem:[#allocation2 + $0x288] sm:$0xff] %v2782
        %2807 = vst [vmem:[#allocation2 + $0x290] sm:$0xff] %v2783
        %2808 = vst [vmem:[#allocation2 + $0x298] sm:$0xff] %v2784
        %v2809 = vld [vmem:[#allocation3] sm:$0xff]
        %v2810 = vld [vmem:[#allocation3 + $0x8] sm:$0xff]
        %v2811 = vld [vmem:[#allocation3 + $0x10] sm:$0xff]
        %v2812 = vld [vmem:[#allocation3 + $0x18] sm:$0xff]
        %v2813 = vld [vmem:[#allocation3 + $0x20] sm:$0xff]
        %v2814 = vld [vmem:[#allocation3 + $0x28] sm:$0xff]
        %v2815 = vld [vmem:[#allocation3 + $0x30] sm:$0xff]
        %v2816 = vld [vmem:[#allocation3 + $0x38] sm:$0xff]
        %v2817 = vld [vmem:[#allocation3 + $0x40] sm:$0xff]
        %v2818 = vld [vmem:[#allocation3 + $0x48] sm:$0xff]
        %v2819 = vld [vmem:[#allocation3 + $0x50] sm:$0xff]
        %v2820 = vld [vmem:[#allocation3 + $0x58] sm:$0xff]
        %v2821 = vld [vmem:[#allocation3 + $0x60] sm:$0xff]
        %v2822 = vld [vmem:[#allocation3 + $0x68] sm:$0xff]
        %v2823 = vld [vmem:[#allocation3 + $0x70] sm:$0xff]
        %v2824 = vld [vmem:[#allocation3 + $0x78] sm:$0xff]
        %2841 = vrot.lane.b32.xlu0 %v2809, 91
        %v2842 = vpop.permute.xlu0 %2841
        %2843 = vrot.lane.b32.xlu0 %v2810, 91
        %v2844 = vpop.permute.xlu0 %2843
        %2845 = vrot.lane.b32.xlu0 %v2811, 91
        %v2846 = vpop.permute.xlu0 %2845
        %2847 = vrot.lane.b32.xlu0 %v2812, 91
        %v2848 = vpop.permute.xlu0 %2847
        %2849 = vrot.lane.b32.xlu0 %v2813, 91
        %v2850 = vpop.permute.xlu0 %2849
        %2851 = vrot.lane.b32.xlu0 %v2814, 91
        %v2852 = vpop.permute.xlu0 %2851
        %2853 = vrot.lane.b32.xlu0 %v2815, 91
        %v2854 = vpop.permute.xlu0 %2853
        %2855 = vrot.lane.b32.xlu0 %v2816, 91
        %v2856 = vpop.permute.xlu0 %2855
        %2857 = vrot.lane.b32.xlu0 %v2817, 91
        %v2858 = vpop.permute.xlu0 %2857
        %2859 = vrot.lane.b32.xlu0 %v2818, 91
        %v2860 = vpop.permute.xlu0 %2859
        %2861 = vrot.lane.b32.xlu0 %v2819, 91
        %v2862 = vpop.permute.xlu0 %2861
        %2863 = vrot.lane.b32.xlu0 %v2820, 91
        %v2864 = vpop.permute.xlu0 %2863
        %2865 = vrot.lane.b32.xlu0 %v2821, 91
        %v2866 = vpop.permute.xlu0 %2865
        %2867 = vrot.lane.b32.xlu0 %v2822, 91
        %v2868 = vpop.permute.xlu0 %2867
        %2869 = vrot.lane.b32.xlu0 %v2823, 91
        %v2870 = vpop.permute.xlu0 %2869
        %2871 = vrot.lane.b32.xlu0 %v2824, 91
        %v2872 = vpop.permute.xlu0 %2871
        %v2873 = vsel %vm1216, %v2842, %v2844
        %v2874 = vsel %vm1216, %v2844, %v2846
        %v2875 = vsel %vm1216, %v2846, %v2848
        %v2876 = vsel %vm1216, %v2850, %v2852
        %v2877 = vsel %vm1216, %v2852, %v2854
        %v2878 = vsel %vm1216, %v2854, %v2856
        %v2879 = vsel %vm1216, %v2858, %v2860
        %v2880 = vsel %vm1216, %v2860, %v2862
        %v2881 = vsel %vm1216, %v2862, %v2864
        %v2882 = vsel %vm1216, %v2866, %v2868
        %v2883 = vsel %vm1216, %v2868, %v2870
        %v2884 = vsel %vm1216, %v2870, %v2872
        %2897 = vst [vmem:[#allocation2 + $0x2a0] sm:$0xff] %v2873
        %2898 = vst [vmem:[#allocation2 + $0x2a8] sm:$0xff] %v2874
        %2899 = vst [vmem:[#allocation2 + $0x2b0] sm:$0xff] %v2875
        %2900 = vst [vmem:[#allocation2 + $0x2b8] sm:$0xff] %v2876
        %2901 = vst [vmem:[#allocation2 + $0x2c0] sm:$0xff] %v2877
        %2902 = vst [vmem:[#allocation2 + $0x2c8] sm:$0xff] %v2878
        %2903 = vst [vmem:[#allocation2 + $0x2d0] sm:$0xff] %v2879
        %2904 = vst [vmem:[#allocation2 + $0x2d8] sm:$0xff] %v2880
        %2905 = vst [vmem:[#allocation2 + $0x2e0] sm:$0xff] %v2881
        %2906 = vst [vmem:[#allocation2 + $0x2e8] sm:$0xff] %v2882
        %2907 = vst [vmem:[#allocation2 + $0x2f0] sm:$0xff] %v2883
        %2908 = vst [vmem:[#allocation2 + $0x2f8] sm:$0xff] %v2884
        %v2909 = vld [vmem:[#allocation3] sm:$0xff]
        %v2910 = vld [vmem:[#allocation3 + $0x8] sm:$0xff]
        %v2911 = vld [vmem:[#allocation3 + $0x10] sm:$0xff]
        %v2912 = vld [vmem:[#allocation3 + $0x18] sm:$0xff]
        %v2913 = vld [vmem:[#allocation3 + $0x20] sm:$0xff]
        %v2914 = vld [vmem:[#allocation3 + $0x28] sm:$0xff]
        %v2915 = vld [vmem:[#allocation3 + $0x30] sm:$0xff]
        %v2916 = vld [vmem:[#allocation3 + $0x38] sm:$0xff]
        %v2917 = vld [vmem:[#allocation3 + $0x40] sm:$0xff]
        %v2918 = vld [vmem:[#allocation3 + $0x48] sm:$0xff]
        %v2919 = vld [vmem:[#allocation3 + $0x50] sm:$0xff]
        %v2920 = vld [vmem:[#allocation3 + $0x58] sm:$0xff]
        %v2921 = vld [vmem:[#allocation3 + $0x60] sm:$0xff]
        %v2922 = vld [vmem:[#allocation3 + $0x68] sm:$0xff]
        %v2923 = vld [vmem:[#allocation3 + $0x70] sm:$0xff]
        %v2924 = vld [vmem:[#allocation3 + $0x78] sm:$0xff]
        %2941 = vrot.lane.b32.xlu0 %v2909, 90
        %v2942 = vpop.permute.xlu0 %2941
        %2943 = vrot.lane.b32.xlu0 %v2910, 90
        %v2944 = vpop.permute.xlu0 %2943
        %2945 = vrot.lane.b32.xlu0 %v2911, 90
        %v2946 = vpop.permute.xlu0 %2945
        %2947 = vrot.lane.b32.xlu0 %v2912, 90
        %v2948 = vpop.permute.xlu0 %2947
        %2949 = vrot.lane.b32.xlu0 %v2913, 90
        %v2950 = vpop.permute.xlu0 %2949
        %2951 = vrot.lane.b32.xlu0 %v2914, 90
        %v2952 = vpop.permute.xlu0 %2951
        %2953 = vrot.lane.b32.xlu0 %v2915, 90
        %v2954 = vpop.permute.xlu0 %2953
        %2955 = vrot.lane.b32.xlu0 %v2916, 90
        %v2956 = vpop.permute.xlu0 %2955
        %2957 = vrot.lane.b32.xlu0 %v2917, 90
        %v2958 = vpop.permute.xlu0 %2957
        %2959 = vrot.lane.b32.xlu0 %v2918, 90
        %v2960 = vpop.permute.xlu0 %2959
        %2961 = vrot.lane.b32.xlu0 %v2919, 90
        %v2962 = vpop.permute.xlu0 %2961
        %2963 = vrot.lane.b32.xlu0 %v2920, 90
        %v2964 = vpop.permute.xlu0 %2963
        %2965 = vrot.lane.b32.xlu0 %v2921, 90
        %v2966 = vpop.permute.xlu0 %2965
        %2967 = vrot.lane.b32.xlu0 %v2922, 90
        %v2968 = vpop.permute.xlu0 %2967
        %2969 = vrot.lane.b32.xlu0 %v2923, 90
        %v2970 = vpop.permute.xlu0 %2969
        %2971 = vrot.lane.b32.xlu0 %v2924, 90
        %v2972 = vpop.permute.xlu0 %2971
        %v2973 = vsel %vm1349, %v2942, %v2944
        %v2974 = vsel %vm1349, %v2944, %v2946
        %v2975 = vsel %vm1349, %v2946, %v2948
        %v2976 = vsel %vm1349, %v2950, %v2952
        %v2977 = vsel %vm1349, %v2952, %v2954
        %v2978 = vsel %vm1349, %v2954, %v2956
        %v2979 = vsel %vm1349, %v2958, %v2960
        %v2980 = vsel %vm1349, %v2960, %v2962
        %v2981 = vsel %vm1349, %v2962, %v2964
        %v2982 = vsel %vm1349, %v2966, %v2968
        %v2983 = vsel %vm1349, %v2968, %v2970
        %v2984 = vsel %vm1349, %v2970, %v2972
        %2997 = vst [vmem:[#allocation2 + $0x300] sm:$0xff] %v2973
        %2998 = vst [vmem:[#allocation2 + $0x308] sm:$0xff] %v2974
        %2999 = vst [vmem:[#allocation2 + $0x310] sm:$0xff] %v2975
        %3000 = vst [vmem:[#allocation2 + $0x318] sm:$0xff] %v2976
        %3001 = vst [vmem:[#allocation2 + $0x320] sm:$0xff] %v2977
        %3002 = vst [vmem:[#allocation2 + $0x328] sm:$0xff] %v2978
        %3003 = vst [vmem:[#allocation2 + $0x330] sm:$0xff] %v2979
        %3004 = vst [vmem:[#allocation2 + $0x338] sm:$0xff] %v2980
        %3005 = vst [vmem:[#allocation2 + $0x340] sm:$0xff] %v2981
        %3006 = vst [vmem:[#allocation2 + $0x348] sm:$0xff] %v2982
        %3007 = vst [vmem:[#allocation2 + $0x350] sm:$0xff] %v2983
        %3008 = vst [vmem:[#allocation2 + $0x358] sm:$0xff] %v2984
        %v3009 = vld [vmem:[#allocation9] sm:$0xff]
        %v3010 = vld [vmem:[#allocation9 + $0x8] sm:$0xff]
        %v3011 = vld [vmem:[#allocation9 + $0x10] sm:$0xf]
        %v3012 = vld [vmem:[#allocation9 + $0x14] sm:$0xff]
        %v3013 = vld [vmem:[#allocation9 + $0x1c] sm:$0xff]
        %v3014 = vld [vmem:[#allocation9 + $0x24] sm:$0xf]
        %v3015 = vld [vmem:[#allocation9 + $0x28] sm:$0xff]
        %v3016 = vld [vmem:[#allocation9 + $0x30] sm:$0xff]
        %v3017 = vld [vmem:[#allocation9 + $0x38] sm:$0xf]
        %v3018 = vld [vmem:[#allocation9 + $0x3c] sm:$0xff]
        %v3019 = vld [vmem:[#allocation9 + $0x44] sm:$0xff]
        %v3020 = vld [vmem:[#allocation9 + $0x4c] sm:$0xf]
        %v3021 = vld [vmem:[#allocation9 + $0x50] sm:$0xff]
        %v3022 = vld [vmem:[#allocation9 + $0x58] sm:$0xff]
        %v3023 = vld [vmem:[#allocation9 + $0x60] sm:$0xf]
        %v3024 = vld [vmem:[#allocation9 + $0x64] sm:$0xff]
        %v3025 = vld [vmem:[#allocation9 + $0x6c] sm:$0xff]
        %v3026 = vld [vmem:[#allocation9 + $0x74] sm:$0xf]
        %v3027 = vld [vmem:[#allocation9 + $0x78] sm:$0xff]
        %v3028 = vld [vmem:[#allocation9 + $0x80] sm:$0xff]
        %v3029 = vld [vmem:[#allocation9 + $0x88] sm:$0xf]
        %v3030 = vld [vmem:[#allocation9 + $0x8c] sm:$0xff]
        %v3031 = vld [vmem:[#allocation9 + $0x94] sm:$0xff]
        %v3032 = vld [vmem:[#allocation9 + $0x9c] sm:$0xf]
        %v3033 = vld [vmem:[#allocation2] sm:$0xff]
        %v3034 = vld [vmem:[#allocation2 + $0x8] sm:$0xff]
        %v3035 = vld [vmem:[#allocation2 + $0x10] sm:$0xff]
        %v3036 = vld [vmem:[#allocation2 + $0x18] sm:$0xff]
        %v3037 = vld [vmem:[#allocation2 + $0x20] sm:$0xff]
        %v3038 = vld [vmem:[#allocation2 + $0x28] sm:$0xff]
        %v3039 = vld [vmem:[#allocation2 + $0x30] sm:$0xff]
        %v3040 = vld [vmem:[#allocation2 + $0x38] sm:$0xff]
        %v3041 = vld [vmem:[#allocation2 + $0x40] sm:$0xff]
        %v3042 = vld [vmem:[#allocation2 + $0x48] sm:$0xff]
        %v3043 = vld [vmem:[#allocation2 + $0x50] sm:$0xff]
        %v3044 = vld [vmem:[#allocation2 + $0x58] sm:$0xff]
        %v3045 = vld [vmem:[#allocation2 + $0x60] sm:$0xff]
        %v3046 = vld [vmem:[#allocation2 + $0x68] sm:$0xff]
        %v3047 = vld [vmem:[#allocation2 + $0x70] sm:$0xff]
        %v3048 = vld [vmem:[#allocation2 + $0x78] sm:$0xff]
        %v3049 = vld [vmem:[#allocation2 + $0x80] sm:$0xff]
        %v3050 = vld [vmem:[#allocation2 + $0x88] sm:$0xff]
        %v3051 = vld [vmem:[#allocation2 + $0x90] sm:$0xff]
        %v3052 = vld [vmem:[#allocation2 + $0x98] sm:$0xff]
        %v3053 = vld [vmem:[#allocation2 + $0xa0] sm:$0xff]
        %v3054 = vld [vmem:[#allocation2 + $0xa8] sm:$0xff]
        %v3055 = vld [vmem:[#allocation2 + $0xb0] sm:$0xff]
        %v3056 = vld [vmem:[#allocation2 + $0xb8] sm:$0xff]
        %v3057 = vld [vmem:[#allocation2 + $0xc0] sm:$0xff]
        %v3058 = vld [vmem:[#allocation2 + $0xc8] sm:$0xff]
        %v3059 = vld [vmem:[#allocation2 + $0xd0] sm:$0xff]
        %v3060 = vld [vmem:[#allocation2 + $0xd8] sm:$0xff]
        %v3061 = vld [vmem:[#allocation2 + $0xe0] sm:$0xff]
        %v3062 = vld [vmem:[#allocation2 + $0xe8] sm:$0xff]
        %v3063 = vld [vmem:[#allocation2 + $0xf0] sm:$0xff]
        %v3064 = vld [vmem:[#allocation2 + $0xf8] sm:$0xff]
        %v3065 = vld [vmem:[#allocation2 + $0x100] sm:$0xff]
        %v3066 = vld [vmem:[#allocation2 + $0x108] sm:$0xff]
        %v3067 = vld [vmem:[#allocation2 + $0x110] sm:$0xff]
        %v3068 = vld [vmem:[#allocation2 + $0x118] sm:$0xff]
        %v3069 = vld [vmem:[#allocation2 + $0x120] sm:$0xff]
        %v3070 = vld [vmem:[#allocation2 + $0x128] sm:$0xff]
        %v3071 = vld [vmem:[#allocation2 + $0x130] sm:$0xff]
        %v3072 = vld [vmem:[#allocation2 + $0x138] sm:$0xff]
        %v3073 = vld [vmem:[#allocation2 + $0x140] sm:$0xff]
        %v3074 = vld [vmem:[#allocation2 + $0x148] sm:$0xff]
        %v3075 = vld [vmem:[#allocation2 + $0x150] sm:$0xff]
        %v3076 = vld [vmem:[#allocation2 + $0x158] sm:$0xff]
        %v3077 = vld [vmem:[#allocation2 + $0x160] sm:$0xff]
        %v3078 = vld [vmem:[#allocation2 + $0x168] sm:$0xff]
        %v3079 = vld [vmem:[#allocation2 + $0x170] sm:$0xff]
        %v3080 = vld [vmem:[#allocation2 + $0x178] sm:$0xff]
        %v3081 = vld [vmem:[#allocation2 + $0x180] sm:$0xff]
        %v3082 = vld [vmem:[#allocation2 + $0x188] sm:$0xff]
        %v3083 = vld [vmem:[#allocation2 + $0x190] sm:$0xff]
        %v3084 = vld [vmem:[#allocation2 + $0x198] sm:$0xff]
        %v3085 = vld [vmem:[#allocation2 + $0x1a0] sm:$0xff]
        %v3086 = vld [vmem:[#allocation2 + $0x1a8] sm:$0xff]
        %v3087 = vld [vmem:[#allocation2 + $0x1b0] sm:$0xff]
        %v3088 = vld [vmem:[#allocation2 + $0x1b8] sm:$0xff]
        %v3089 = vld [vmem:[#allocation2 + $0x1c0] sm:$0xff]
        %v3090 = vld [vmem:[#allocation2 + $0x1c8] sm:$0xff]
        %v3091 = vld [vmem:[#allocation2 + $0x1d0] sm:$0xff]
        %v3092 = vld [vmem:[#allocation2 + $0x1d8] sm:$0xff]
        %v3093 = vld [vmem:[#allocation2 + $0x1e0] sm:$0xff]
        %v3094 = vld [vmem:[#allocation2 + $0x1e8] sm:$0xff]
        %v3095 = vld [vmem:[#allocation2 + $0x1f0] sm:$0xff]
        %v3096 = vld [vmem:[#allocation2 + $0x1f8] sm:$0xff]
        %v3097 = vld [vmem:[#allocation2 + $0x200] sm:$0xff]
        %v3098 = vld [vmem:[#allocation2 + $0x208] sm:$0xff]
        %v3099 = vld [vmem:[#allocation2 + $0x210] sm:$0xff]
        %v3100 = vld [vmem:[#allocation2 + $0x218] sm:$0xff]
        %v3101 = vld [vmem:[#allocation2 + $0x220] sm:$0xff]
        %v3102 = vld [vmem:[#allocation2 + $0x228] sm:$0xff]
        %v3103 = vld [vmem:[#allocation2 + $0x230] sm:$0xff]
        %v3104 = vld [vmem:[#allocation2 + $0x238] sm:$0xff]
        %v3105 = vld [vmem:[#allocation2 + $0x240] sm:$0xff]
        %v3106 = vld [vmem:[#allocation2 + $0x248] sm:$0xff]
        %v3107 = vld [vmem:[#allocation2 + $0x250] sm:$0xff]
        %v3108 = vld [vmem:[#allocation2 + $0x258] sm:$0xff]
        %v3109 = vld [vmem:[#allocation2 + $0x260] sm:$0xff]
        %v3110 = vld [vmem:[#allocation2 + $0x268] sm:$0xff]
        %v3111 = vld [vmem:[#allocation2 + $0x270] sm:$0xff]
        %v3112 = vld [vmem:[#allocation2 + $0x278] sm:$0xff]
        %v3113 = vld [vmem:[#allocation2 + $0x280] sm:$0xff]
        %v3114 = vld [vmem:[#allocation2 + $0x288] sm:$0xff]
        %v3115 = vld [vmem:[#allocation2 + $0x290] sm:$0xff]
        %v3116 = vld [vmem:[#allocation2 + $0x298] sm:$0xff]
        %v3117 = vld [vmem:[#allocation2 + $0x2a0] sm:$0xff]
        %v3118 = vld [vmem:[#allocation2 + $0x2a8] sm:$0xff]
        %v3119 = vld [vmem:[#allocation2 + $0x2b0] sm:$0xff]
        %v3120 = vld [vmem:[#allocation2 + $0x2b8] sm:$0xff]
        %v3121 = vld [vmem:[#allocation2 + $0x2c0] sm:$0xff]
        %v3122 = vld [vmem:[#allocation2 + $0x2c8] sm:$0xff]
        %v3123 = vld [vmem:[#allocation2 + $0x2d0] sm:$0xff]
        %v3124 = vld [vmem:[#allocation2 + $0x2d8] sm:$0xff]
        %v3125 = vld [vmem:[#allocation2 + $0x2e0] sm:$0xff]
        %v3126 = vld [vmem:[#allocation2 + $0x2e8] sm:$0xff]
        %v3127 = vld [vmem:[#allocation2 + $0x2f0] sm:$0xff]
        %v3128 = vld [vmem:[#allocation2 + $0x2f8] sm:$0xff]
        %v3129 = vld [vmem:[#allocation2 + $0x300] sm:$0xff]
        %v3130 = vld [vmem:[#allocation2 + $0x308] sm:$0xff]
        %v3131 = vld [vmem:[#allocation2 + $0x310] sm:$0xff]
        %v3132 = vld [vmem:[#allocation2 + $0x318] sm:$0xff]
        %v3133 = vld [vmem:[#allocation2 + $0x320] sm:$0xff]
        %v3134 = vld [vmem:[#allocation2 + $0x328] sm:$0xff]
        %v3135 = vld [vmem:[#allocation2 + $0x330] sm:$0xff]
        %v3136 = vld [vmem:[#allocation2 + $0x338] sm:$0xff]
        %v3137 = vld [vmem:[#allocation2 + $0x340] sm:$0xff]
        %v3138 = vld [vmem:[#allocation2 + $0x348] sm:$0xff]
        %v3139 = vld [vmem:[#allocation2 + $0x350] sm:$0xff]
        %v3140 = vld [vmem:[#allocation2 + $0x358] sm:$0xff]
        %v3165 = vunpack.c.l.b16 %v3009
        %v3166 = vunpack.c.h.b16 %v3009
        %v3167 = vunpack.c.l.b16 %v3010
        %v3168 = vunpack.c.h.b16 %v3010
        %v3169 = vunpack.c.l.b16 %v3011
        %v3170 = vunpack.c.l.b16 %v3012
        %v3171 = vunpack.c.h.b16 %v3012
        %v3172 = vunpack.c.l.b16 %v3013
        %v3173 = vunpack.c.h.b16 %v3013
        %v3174 = vunpack.c.l.b16 %v3014
        %v3175 = vunpack.c.l.b16 %v3015
        %v3176 = vunpack.c.h.b16 %v3015
        %v3177 = vunpack.c.l.b16 %v3016
        %v3178 = vunpack.c.h.b16 %v3016
        %v3179 = vunpack.c.l.b16 %v3017
        %v3180 = vunpack.c.l.b16 %v3018
        %v3181 = vunpack.c.h.b16 %v3018
        %v3182 = vunpack.c.l.b16 %v3019
        %v3183 = vunpack.c.h.b16 %v3019
        %v3184 = vunpack.c.l.b16 %v3020
        %v3185 = vunpack.c.l.b16 %v3021
        %v3186 = vunpack.c.h.b16 %v3021
        %v3187 = vunpack.c.l.b16 %v3022
        %v3188 = vunpack.c.h.b16 %v3022
        %v3189 = vunpack.c.l.b16 %v3023
        %v3190 = vunpack.c.l.b16 %v3024
        %v3191 = vunpack.c.h.b16 %v3024
        %v3192 = vunpack.c.l.b16 %v3025
        %v3193 = vunpack.c.h.b16 %v3025
        %v3194 = vunpack.c.l.b16 %v3026
        %v3195 = vunpack.c.l.b16 %v3027
        %v3196 = vunpack.c.h.b16 %v3027
        %v3197 = vunpack.c.l.b16 %v3028
        %v3198 = vunpack.c.h.b16 %v3028
        %v3199 = vunpack.c.l.b16 %v3029
        %v3200 = vunpack.c.l.b16 %v3030
        %v3201 = vunpack.c.h.b16 %v3030
        %v3202 = vunpack.c.l.b16 %v3031
        %v3203 = vunpack.c.h.b16 %v3031
        %v3204 = vunpack.c.l.b16 %v3032
        %v3205 = vpack.c.b16 %v3170, %v3165
        %v3206 = vpack.c.b16 %v3171, %v3166
        %v3207 = vpack.c.b16 %v3172, %v3167
        %v3208 = vpack.c.b16 %v3173, %v3168
        %v3209 = vpack.c.b16 %v3174, %v3169
        %v3210 = vpack.c.b16 %v3180, %v3175
        %v3211 = vpack.c.b16 %v3181, %v3176
        %v3212 = vpack.c.b16 %v3182, %v3177
        %v3213 = vpack.c.b16 %v3183, %v3178
        %v3214 = vpack.c.b16 %v3184, %v3179
        %v3215 = vpack.c.b16 %v3190, %v3185
        %v3216 = vpack.c.b16 %v3191, %v3186
        %v3217 = vpack.c.b16 %v3192, %v3187
        %v3218 = vpack.c.b16 %v3193, %v3188
        %v3219 = vpack.c.b16 %v3194, %v3189
        %v3220 = vpack.c.b16 %v3200, %v3195
        %v3221 = vpack.c.b16 %v3201, %v3196
        %v3222 = vpack.c.b16 %v3202, %v3197
        %v3223 = vpack.c.b16 %v3203, %v3198
        %v3224 = vpack.c.b16 %v3204, %v3199
        %v3242 = vsel %vm1666, %v3209, 0
        %v3245 = vsel %vm1666, %v3214, 0
        %v3248 = vsel %vm1666, %v3219, 0
        %v3251 = vsel %vm1666, %v3224, 0
        %3253 = vmatprep.subr.bf16.mxu0 %v3034
        %3254 = vmatpush1.bf16.msra.mxu0 %v3033
        %3255 = vmatprep.subr.bf16.mxu0 %v3037
        %3256 = vmatpush1.bf16.msra.mxu0 %v3036
        %3257 = vmatprep.subr.bf16.mxu0 %v3040
        %3258 = vmatpush1.bf16.msra.mxu0 %v3039
        %3259 = vmatprep.subr.bf16.mxu0 %v3043
        %3260 = vmatpush1.bf16.msra.mxu0 %v3042
        %3261 = vmatprep.subr.bf16.mxu0 %v3046
        %3262 = vmatpush1.bf16.msra.mxu0 %v3045
        %3263 = vmatprep.subr.bf16.mxu0 %v3049
        %3264 = vmatpush1.bf16.msra.mxu0 %v3048
        %3265 = vmatprep.subr.bf16.mxu0 %v3052
        %3266 = vmatpush1.bf16.msra.mxu0 %v3051
        %3267 = vmatprep.subr.bf16.mxu0 %v3055
        %3268 = vmatpush1.bf16.msra.mxu0 %v3054
        %3269 = vmatprep.subr.bf16.mxu0 %v3058
        %3270 = vmatpush1.bf16.msra.mxu0 %v3057
        %3271 = vmatprep.subr.bf16.mxu0 %v3061
        %3272 = vmatpush1.bf16.msra.mxu0 %v3060
        %3273 = vmatprep.subr.bf16.mxu0 %v3064
        %3274 = vmatpush1.bf16.msra.mxu0 %v3063
        %3275 = vmatprep.subr.bf16.mxu0 %v3067
        %3276 = vmatpush1.bf16.msra.mxu0 %v3066
        %3277 = vmatprep.subr.bf16.mxu0 %v3070
        %3278 = vmatpush1.bf16.msra.mxu0 %v3069
        %3279 = vmatprep.subr.bf16.mxu0 %v3073
        %3280 = vmatpush1.bf16.msra.mxu0 %v3072
        %3281 = vmatprep.subr.bf16.mxu0 %v3076
        %3282 = vmatpush1.bf16.msra.mxu0 %v3075
        %3283 = vmatprep.subr.bf16.mxu0 %v3079
        %3284 = vmatpush1.bf16.msra.mxu0 %v3078
        %3285 = vmatprep.mubr.bf16.mxu0 %v3206
        %3286 = vmatmul.mubr.bf16.gmra.mrb[0].mxu0 %v3205
        %v3287 = vpop.f32.mrb[0].mxu0
        %v3288 = vadd.f32 0.0, %v3287
        %v3289 = vpop.f32.mrb[0].mxu0
        %v3290 = vadd.f32 0.0, %v3289
        %v3291 = vpop.f32.mrb[0].mxu0
        %v3292 = vadd.f32 0.0, %v3291
        %v3293 = vpop.f32.mrb[0].mxu0
        %v3294 = vadd.f32 0.0, %v3293
        %3295 = vmatprep.mubr.bf16.mxu0 %v3211
        %3296 = vmatmul.mubr.bf16.gmra.mrb[0].mxu0 %v3210
        %v3297 = vpop.f32.mrb[0].mxu0
        %v3298 = vadd.f32 0.0, %v3297
        %v3299 = vpop.f32.mrb[0].mxu0
        %v3300 = vadd.f32 0.0, %v3299
        %v3301 = vpop.f32.mrb[0].mxu0
        %v3302 = vadd.f32 0.0, %v3301
        %v3303 = vpop.f32.mrb[0].mxu0
        %v3304 = vadd.f32 0.0, %v3303
        %3305 = vmatprep.mubr.bf16.mxu0 %v3216
        %3306 = vmatmul.mubr.bf16.gmra.mrb[0].mxu0 %v3215
        %v3307 = vpop.f32.mrb[0].mxu0
        %v3308 = vadd.f32 0.0, %v3307
        %v3309 = vpop.f32.mrb[0].mxu0
        %v3310 = vadd.f32 0.0, %v3309
        %v3311 = vpop.f32.mrb[0].mxu0
        %v3312 = vadd.f32 0.0, %v3311
        %v3313 = vpop.f32.mrb[0].mxu0
        %v3314 = vadd.f32 0.0, %v3313
        %3315 = vmatprep.mubr.bf16.mxu0 %v3221
        %3316 = vmatmul.mubr.bf16.gmra.mrb[0].mxu0 %v3220
        %v3317 = vpop.f32.mrb[0].mxu0
        %v3318 = vadd.f32 0.0, %v3317
        %v3319 = vpop.f32.mrb[0].mxu0
        %v3320 = vadd.f32 0.0, %v3319
        %v3321 = vpop.f32.mrb[0].mxu0
        %v3322 = vadd.f32 0.0, %v3321
        %v3323 = vpop.f32.mrb[0].mxu0
        %v3324 = vadd.f32 0.0, %v3323
        %3325 = vdwg.mxu0
        %3326 = vmatprep.subr.bf16.mxu0 %v3082
        %3327 = vmatpush1.bf16.msra.mxu0 %v3081
        %3328 = vmatprep.subr.bf16.mxu0 %v3085
        %3329 = vmatpush1.bf16.msra.mxu0 %v3084
        %3330 = vmatprep.subr.bf16.mxu0 %v3088
        %3331 = vmatpush1.bf16.msra.mxu0 %v3087
        %3332 = vmatprep.subr.bf16.mxu0 %v3091
        %3333 = vmatpush1.bf16.msra.mxu0 %v3090
        %3334 = vmatprep.subr.bf16.mxu0 %v3094
        %3335 = vmatpush1.bf16.msra.mxu0 %v3093
        %3336 = vmatprep.subr.bf16.mxu0 %v3097
        %3337 = vmatpush1.bf16.msra.mxu0 %v3096
        %3338 = vmatprep.subr.bf16.mxu0 %v3100
        %3339 = vmatpush1.bf16.msra.mxu0 %v3099
        %3340 = vmatprep.subr.bf16.mxu0 %v3103
        %3341 = vmatpush1.bf16.msra.mxu0 %v3102
        %3342 = vmatprep.subr.bf16.mxu0 %v3106
        %3343 = vmatpush1.bf16.msra.mxu0 %v3105
        %3344 = vmatprep.subr.bf16.mxu0 %v3109
        %3345 = vmatpush1.bf16.msra.mxu0 %v3108
        %3346 = vmatprep.subr.bf16.mxu0 %v3112
        %3347 = vmatpush1.bf16.msra.mxu0 %v3111
        %3348 = vmatprep.subr.bf16.mxu0 %v3115
        %3349 = vmatpush1.bf16.msra.mxu0 %v3114
        %3350 = vmatprep.subr.bf16.mxu0 %v3118
        %3351 = vmatpush1.bf16.msra.mxu0 %v3117
        %3352 = vmatprep.subr.bf16.mxu0 %v3121
        %3353 = vmatpush1.bf16.msra.mxu0 %v3120
        %3354 = vmatprep.subr.bf16.mxu0 %v3124
        %3355 = vmatpush1.bf16.msra.mxu0 %v3123
        %3356 = vmatprep.subr.bf16.mxu0 %v3127
        %3357 = vmatpush1.bf16.msra.mxu0 %v3126
        %3358 = vmatprep.mubr.bf16.mxu0 %v3208
        %3359 = vmatmul.mubr.bf16.gmra.mrb[0].mxu0 %v3207
        %v3360 = vpop.f32.mrb[0].mxu0
        %v3361 = vadd.f32 %v3288, %v3360
        %v3362 = vpop.f32.mrb[0].mxu0
        %v3363 = vadd.f32 %v3290, %v3362
        %v3364 = vpop.f32.mrb[0].mxu0
        %v3365 = vadd.f32 %v3292, %v3364
        %v3366 = vpop.f32.mrb[0].mxu0
        %v3367 = vadd.f32 %v3294, %v3366
        %3368 = vmatprep.mubr.bf16.mxu0 %v3213
        %3369 = vmatmul.mubr.bf16.gmra.mrb[0].mxu0 %v3212
        %v3370 = vpop.f32.mrb[0].mxu0
        %v3371 = vadd.f32 %v3298, %v3370
        %v3372 = vpop.f32.mrb[0].mxu0
        %v3373 = vadd.f32 %v3300, %v3372
        %v3374 = vpop.f32.mrb[0].mxu0
        %v3375 = vadd.f32 %v3302, %v3374
        %v3376 = vpop.f32.mrb[0].mxu0
        %v3377 = vadd.f32 %v3304, %v3376
        %3378 = vmatprep.mubr.bf16.mxu0 %v3218
        %3379 = vmatmul.mubr.bf16.gmra.mrb[0].mxu0 %v3217
        %v3380 = vpop.f32.mrb[0].mxu0
        %v3381 = vadd.f32 %v3308, %v3380
        %v3382 = vpop.f32.mrb[0].mxu0
        %v3383 = vadd.f32 %v3310, %v3382
        %v3384 = vpop.f32.mrb[0].mxu0
        %v3385 = vadd.f32 %v3312, %v3384
        %v3386 = vpop.f32.mrb[0].mxu0
        %v3387 = vadd.f32 %v3314, %v3386
        %3388 = vmatprep.mubr.bf16.mxu0 %v3223
        %3389 = vmatmul.mubr.bf16.gmra.mrb[0].mxu0 %v3222
        %v3390 = vpop.f32.mrb[0].mxu0
        %v3391 = vadd.f32 %v3318, %v3390
        %v3392 = vpop.f32.mrb[0].mxu0
        %v3393 = vadd.f32 %v3320, %v3392
        %v3394 = vpop.f32.mrb[0].mxu0
        %v3395 = vadd.f32 %v3322, %v3394
        %v3396 = vpop.f32.mrb[0].mxu0
        %v3397 = vadd.f32 %v3324, %v3396
        %3398 = vdwg.mxu0
        %3399 = vmatprep.subr.bf16.mxu0 %v3130
        %3400 = vmatpush1.bf16.msra.mxu0 %v3129
        %3401 = vmatprep.subr.bf16.mxu0 %v3133
        %3402 = vmatpush1.bf16.msra.mxu0 %v3132
        %3403 = vmatprep.subr.bf16.mxu0 %v3136
        %3404 = vmatpush1.bf16.msra.mxu0 %v3135
        %3405 = vmatprep.subr.bf16.mxu0 %v3139
        %3406 = vmatpush1.bf16.msra.mxu0 %v3138
        %3407 = vmatprep.subr.bf16.mxu0 0
        %3408 = vmatpush1.bf16.msra.mxu0 0
        %3409 = vmatprep.subr.bf16.mxu0 0
        %3410 = vmatpush1.bf16.msra.mxu0 0
        %3411 = vmatprep.subr.bf16.mxu0 0
        %3412 = vmatpush1.bf16.msra.mxu0 0
        %3413 = vmatprep.subr.bf16.mxu0 0
        %3414 = vmatpush1.bf16.msra.mxu0 0
        %3415 = vmatprep.subr.bf16.mxu0 0
        %3416 = vmatpush1.bf16.msra.mxu0 0
        %3417 = vmatprep.subr.bf16.mxu0 0
        %3418 = vmatpush1.bf16.msra.mxu0 0
        %3419 = vmatprep.subr.bf16.mxu0 0
        %3420 = vmatpush1.bf16.msra.mxu0 0
        %3421 = vmatprep.subr.bf16.mxu0 0
        %3422 = vmatpush1.bf16.msra.mxu0 0
        %3423 = vmatprep.subr.bf16.mxu0 0
        %3424 = vmatpush1.bf16.msra.mxu0 0
        %3425 = vmatprep.subr.bf16.mxu0 0
        %3426 = vmatpush1.bf16.msra.mxu0 0
        %3427 = vmatprep.subr.bf16.mxu0 0
        %3428 = vmatpush1.bf16.msra.mxu0 0
        %3429 = vmatprep.subr.bf16.mxu0 0
        %3430 = vmatpush1.bf16.msra.mxu0 0
        %3431 = vmatprep.mubr.bf16.mxu0 0
        %3432 = vmatmul.mubr.bf16.gmra.mrb[0].mxu0 %v3242
        %v3433 = vpop.f32.mrb[0].mxu0
        %v3434 = vadd.f32 %v3361, %v3433
        %v3435 = vpop.f32.mrb[0].mxu0
        %v3436 = vadd.f32 %v3363, %v3435
        %v3437 = vpop.f32.mrb[0].mxu0
        %v3438 = vadd.f32 %v3365, %v3437
        %v3439 = vpop.f32.mrb[0].mxu0
        %v3440 = vadd.f32 %v3367, %v3439
        %3441 = vmatprep.mubr.bf16.mxu0 0
        %3442 = vmatmul.mubr.bf16.gmra.mrb[0].mxu0 %v3245
        %v3443 = vpop.f32.mrb[0].mxu0
        %v3444 = vadd.f32 %v3371, %v3443
        %v3445 = vpop.f32.mrb[0].mxu0
        %v3446 = vadd.f32 %v3373, %v3445
        %v3447 = vpop.f32.mrb[0].mxu0
        %v3448 = vadd.f32 %v3375, %v3447
        %v3449 = vpop.f32.mrb[0].mxu0
        %v3450 = vadd.f32 %v3377, %v3449
        %3451 = vmatprep.mubr.bf16.mxu0 0
        %3452 = vmatmul.mubr.bf16.gmra.mrb[0].mxu0 %v3248
        %v3453 = vpop.f32.mrb[0].mxu0
        %v3454 = vadd.f32 %v3381, %v3453
        %v3455 = vpop.f32.mrb[0].mxu0
        %v3456 = vadd.f32 %v3383, %v3455
        %v3457 = vpop.f32.mrb[0].mxu0
        %v3458 = vadd.f32 %v3385, %v3457
        %v3459 = vpop.f32.mrb[0].mxu0
        %v3460 = vadd.f32 %v3387, %v3459
        %3461 = vmatprep.mubr.bf16.mxu0 0
        %3462 = vmatmul.mubr.bf16.gmra.mrb[0].mxu0 %v3251
        %v3463 = vpop.f32.mrb[0].mxu0
        %v3464 = vadd.f32 %v3391, %v3463
        %v3465 = vpop.f32.mrb[0].mxu0
        %v3466 = vadd.f32 %v3393, %v3465
        %v3467 = vpop.f32.mrb[0].mxu0
        %v3468 = vadd.f32 %v3395, %v3467
        %v3469 = vpop.f32.mrb[0].mxu0
        %v3470 = vadd.f32 %v3397, %v3469
        %3471 = vdwg.mxu0
        %3472 = vmatprep.subr.bf16.mxu0 0
        %3473 = vmatpush1.bf16.msra.mxu0 %v3035
        %3474 = vmatprep.subr.bf16.mxu0 0
        %3475 = vmatpush1.bf16.msra.mxu0 %v3038
        %3476 = vmatprep.subr.bf16.mxu0 0
        %3477 = vmatpush1.bf16.msra.mxu0 %v3041
        %3478 = vmatprep.subr.bf16.mxu0 0
        %3479 = vmatpush1.bf16.msra.mxu0 %v3044
        %3480 = vmatprep.subr.bf16.mxu0 0
        %3481 = vmatpush1.bf16.msra.mxu0 %v3047
        %3482 = vmatprep.subr.bf16.mxu0 0
        %3483 = vmatpush1.bf16.msra.mxu0 %v3050
        %3484 = vmatprep.subr.bf16.mxu0 0
        %3485 = vmatpush1.bf16.msra.mxu0 %v3053
        %3486 = vmatprep.subr.bf16.mxu0 0
        %3487 = vmatpush1.bf16.msra.mxu0 %v3056
        %3488 = vmatprep.subr.bf16.mxu0 0
        %3489 = vmatpush1.bf16.msra.mxu0 %v3059
        %3490 = vmatprep.subr.bf16.mxu0 0
        %3491 = vmatpush1.bf16.msra.mxu0 %v3062
        %3492 = vmatprep.subr.bf16.mxu0 0
        %3493 = vmatpush1.bf16.msra.mxu0 %v3065
        %3494 = vmatprep.subr.bf16.mxu0 0
        %3495 = vmatpush1.bf16.msra.mxu0 %v3068
        %3496 = vmatprep.subr.bf16.mxu0 0
        %3497 = vmatpush1.bf16.msra.mxu0 %v3071
        %3498 = vmatprep.subr.bf16.mxu0 0
        %3499 = vmatpush1.bf16.msra.mxu0 %v3074
        %3500 = vmatprep.subr.bf16.mxu0 0
        %3501 = vmatpush1.bf16.msra.mxu0 %v3077
        %3502 = vmatprep.subr.bf16.mxu0 0
        %3503 = vmatpush1.bf16.msra.mxu0 %v3080
        %3504 = vmatprep.mubr.bf16.mxu0 %v3206
        %3505 = vmatmul.mubr.bf16.gmra.mrb[0].mxu0 %v3205
        %v3506 = vpop.f32.mrb[0].mxu0
        %v3507 = vadd.f32 0.0, %v3506
        %v3508 = vpop.f32.mrb[0].mxu0
        %v3509 = vpop.f32.mrb[0].mxu0
        %v3510 = vadd.f32 0.0, %v3509
        %v3511 = vpop.f32.mrb[0].mxu0
        %3512 = vmatprep.mubr.bf16.mxu0 %v3211
        %3513 = vmatmul.mubr.bf16.gmra.mrb[0].mxu0 %v3210
        %v3514 = vpop.f32.mrb[0].mxu0
        %v3515 = vadd.f32 0.0, %v3514
        %v3516 = vpop.f32.mrb[0].mxu0
        %v3517 = vpop.f32.mrb[0].mxu0
        %v3518 = vadd.f32 0.0, %v3517
        %v3519 = vpop.f32.mrb[0].mxu0
        %3520 = vmatprep.mubr.bf16.mxu0 %v3216
        %3521 = vmatmul.mubr.bf16.gmra.mrb[0].mxu0 %v3215
        %v3522 = vpop.f32.mrb[0].mxu0
        %v3523 = vadd.f32 0.0, %v3522
        %v3524 = vpop.f32.mrb[0].mxu0
        %v3525 = vpop.f32.mrb[0].mxu0
        %v3526 = vadd.f32 0.0, %v3525
        %v3527 = vpop.f32.mrb[0].mxu0
        %3528 = vmatprep.mubr.bf16.mxu0 %v3221
        %3529 = vmatmul.mubr.bf16.gmra.mrb[0].mxu0 %v3220
        %v3530 = vpop.f32.mrb[0].mxu0
        %v3531 = vadd.f32 0.0, %v3530
        %v3532 = vpop.f32.mrb[0].mxu0
        %v3533 = vpop.f32.mrb[0].mxu0
        %v3534 = vadd.f32 0.0, %v3533
        %v3535 = vpop.f32.mrb[0].mxu0
        %3536 = vdwg.mxu0
        %3537 = vmatprep.subr.bf16.mxu0 0
        %3538 = vmatpush1.bf16.msra.mxu0 %v3083
        %3539 = vmatprep.subr.bf16.mxu0 0
        %3540 = vmatpush1.bf16.msra.mxu0 %v3086
        %3541 = vmatprep.subr.bf16.mxu0 0
        %3542 = vmatpush1.bf16.msra.mxu0 %v3089
        %3543 = vmatprep.subr.bf16.mxu0 0
        %3544 = vmatpush1.bf16.msra.mxu0 %v3092
        %3545 = vmatprep.subr.bf16.mxu0 0
        %3546 = vmatpush1.bf16.msra.mxu0 %v3095
        %3547 = vmatprep.subr.bf16.mxu0 0
        %3548 = vmatpush1.bf16.msra.mxu0 %v3098
        %3549 = vmatprep.subr.bf16.mxu0 0
        %3550 = vmatpush1.bf16.msra.mxu0 %v3101
        %3551 = vmatprep.subr.bf16.mxu0 0
        %3552 = vmatpush1.bf16.msra.mxu0 %v3104
        %3553 = vmatprep.subr.bf16.mxu0 0
        %3554 = vmatpush1.bf16.msra.mxu0 %v3107
        %3555 = vmatprep.subr.bf16.mxu0 0
        %3556 = vmatpush1.bf16.msra.mxu0 %v3110
        %3557 = vmatprep.subr.bf16.mxu0 0
        %3558 = vmatpush1.bf16.msra.mxu0 %v3113
        %3559 = vmatprep.subr.bf16.mxu0 0
        %3560 = vmatpush1.bf16.msra.mxu0 %v3116
        %3561 = vmatprep.subr.bf16.mxu0 0
        %3562 = vmatpush1.bf16.msra.mxu0 %v3119
        %3563 = vmatprep.subr.bf16.mxu0 0
        %3564 = vmatpush1.bf16.msra.mxu0 %v3122
        %3565 = vmatprep.subr.bf16.mxu0 0
        %3566 = vmatpush1.bf16.msra.mxu0 %v3125
        %3567 = vmatprep.subr.bf16.mxu0 0
        %3568 = vmatpush1.bf16.msra.mxu0 %v3128
        %3569 = vmatprep.mubr.bf16.mxu0 %v3208
        %3570 = vmatmul.mubr.bf16.gmra.mrb[0].mxu0 %v3207
        %v3571 = vpop.f32.mrb[0].mxu0
        %v3572 = vadd.f32 %v3507, %v3571
        %v3573 = vpop.f32.mrb[0].mxu0
        %v3574 = vpop.f32.mrb[0].mxu0
        %v3575 = vadd.f32 %v3510, %v3574
        %v3576 = vpop.f32.mrb[0].mxu0
        %3577 = vmatprep.mubr.bf16.mxu0 %v3213
        %3578 = vmatmul.mubr.bf16.gmra.mrb[0].mxu0 %v3212
        %v3579 = vpop.f32.mrb[0].mxu0
        %v3580 = vadd.f32 %v3515, %v3579
        %v3581 = vpop.f32.mrb[0].mxu0
        %v3582 = vpop.f32.mrb[0].mxu0
        %v3583 = vadd.f32 %v3518, %v3582
        %v3584 = vpop.f32.mrb[0].mxu0
        %3585 = vmatprep.mubr.bf16.mxu0 %v3218
        %3586 = vmatmul.mubr.bf16.gmra.mrb[0].mxu0 %v3217
        %v3587 = vpop.f32.mrb[0].mxu0
        %v3588 = vadd.f32 %v3523, %v3587
        %v3589 = vpop.f32.mrb[0].mxu0
        %v3590 = vpop.f32.mrb[0].mxu0
        %v3591 = vadd.f32 %v3526, %v3590
        %v3592 = vpop.f32.mrb[0].mxu0
        %3593 = vmatprep.mubr.bf16.mxu0 %v3223
        %3594 = vmatmul.mubr.bf16.gmra.mrb[0].mxu0 %v3222
        %v3595 = vpop.f32.mrb[0].mxu0
        %v3596 = vadd.f32 %v3531, %v3595
        %v3597 = vpop.f32.mrb[0].mxu0
        %v3598 = vpop.f32.mrb[0].mxu0
        %v3599 = vadd.f32 %v3534, %v3598
        %v3600 = vpop.f32.mrb[0].mxu0
        %3601 = vdwg.mxu0
        %3602 = vmatprep.subr.bf16.mxu0 0
        %3603 = vmatpush1.bf16.msra.mxu0 %v3131
        %3604 = vmatprep.subr.bf16.mxu0 0
        %3605 = vmatpush1.bf16.msra.mxu0 %v3134
        %3606 = vmatprep.subr.bf16.mxu0 0
        %3607 = vmatpush1.bf16.msra.mxu0 %v3137
        %3608 = vmatprep.subr.bf16.mxu0 0
        %3609 = vmatpush1.bf16.msra.mxu0 %v3140
        %3610 = vmatprep.subr.bf16.mxu0 0
        %3611 = vmatpush1.bf16.msra.mxu0 0
        %3612 = vmatprep.subr.bf16.mxu0 0
        %3613 = vmatpush1.bf16.msra.mxu0 0
        %3614 = vmatprep.subr.bf16.mxu0 0
        %3615 = vmatpush1.bf16.msra.mxu0 0
        %3616 = vmatprep.subr.bf16.mxu0 0
        %3617 = vmatpush1.bf16.msra.mxu0 0
        %3618 = vmatprep.subr.bf16.mxu0 0
        %3619 = vmatpush1.bf16.msra.mxu0 0
        %3620 = vmatprep.subr.bf16.mxu0 0
        %3621 = vmatpush1.bf16.msra.mxu0 0
        %3622 = vmatprep.subr.bf16.mxu0 0
        %3623 = vmatpush1.bf16.msra.mxu0 0
        %3624 = vmatprep.subr.bf16.mxu0 0
        %3625 = vmatpush1.bf16.msra.mxu0 0
        %3626 = vmatprep.subr.bf16.mxu0 0
        %3627 = vmatpush1.bf16.msra.mxu0 0
        %3628 = vmatprep.subr.bf16.mxu0 0
        %3629 = vmatpush1.bf16.msra.mxu0 0
        %3630 = vmatprep.subr.bf16.mxu0 0
        %3631 = vmatpush1.bf16.msra.mxu0 0
        %3632 = vmatprep.subr.bf16.mxu0 0
        %3633 = vmatpush1.bf16.msra.mxu0 0
        %3634 = vmatprep.mubr.bf16.mxu0 0
        %3635 = vmatmul.mubr.bf16.gmra.mrb[0].mxu0 %v3242
        %v3636 = vpop.f32.mrb[0].mxu0
        %v3637 = vadd.f32 %v3572, %v3636
        %v3638 = vpop.f32.mrb[0].mxu0
        %v3639 = vpop.f32.mrb[0].mxu0
        %v3640 = vadd.f32 %v3575, %v3639
        %v3641 = vpop.f32.mrb[0].mxu0
        %3642 = vmatprep.mubr.bf16.mxu0 0
        %3643 = vmatmul.mubr.bf16.gmra.mrb[0].mxu0 %v3245
        %v3644 = vpop.f32.mrb[0].mxu0
        %v3645 = vadd.f32 %v3580, %v3644
        %v3646 = vpop.f32.mrb[0].mxu0
        %v3647 = vpop.f32.mrb[0].mxu0
        %v3648 = vadd.f32 %v3583, %v3647
        %v3649 = vpop.f32.mrb[0].mxu0
        %3650 = vmatprep.mubr.bf16.mxu0 0
        %3651 = vmatmul.mubr.bf16.gmra.mrb[0].mxu0 %v3248
        %v3652 = vpop.f32.mrb[0].mxu0
        %v3653 = vadd.f32 %v3588, %v3652
        %v3654 = vpop.f32.mrb[0].mxu0
        %v3655 = vpop.f32.mrb[0].mxu0
        %v3656 = vadd.f32 %v3591, %v3655
        %v3657 = vpop.f32.mrb[0].mxu0
        %3658 = vmatprep.mubr.bf16.mxu0 0
        %3659 = vmatmul.mubr.bf16.gmra.mrb[0].mxu0 %v3251
        %v3660 = vpop.f32.mrb[0].mxu0
        %v3661 = vadd.f32 %v3596, %v3660
        %v3662 = vpop.f32.mrb[0].mxu0
        %v3663 = vpop.f32.mrb[0].mxu0
        %v3664 = vadd.f32 %v3599, %v3663
        %v3665 = vpop.f32.mrb[0].mxu0
        %3666 = vdwg.mxu0
        %v3667 = vld [vmem:[%s237] sm:$0xff]
        %v3668 = vld [vmem:[%s237 + $0x8] sm:$0xff]
        %v3669 = vld [vmem:[%s237 + $0x10] sm:$0xff]
        %v3670 = vld [vmem:[%s237 + $0x18] sm:$0xff]
        %v3671 = vld [vmem:[%s237 + $0x20] sm:$0xff]
        %v3672 = vld [vmem:[%s237 + $0x28] sm:$0xff]
        %v3673 = vld [vmem:[%s237 + $0x30] sm:$0xff]
        %v3674 = vld [vmem:[%s237 + $0x38] sm:$0xff]
        %v3675 = vld [vmem:[%s237 + $0x40] sm:$0xff]
        %v3676 = vld [vmem:[%s237 + $0x48] sm:$0xff]
        %v3677 = vld [vmem:[%s237 + $0x50] sm:$0xff]
        %v3678 = vld [vmem:[%s237 + $0x58] sm:$0xff]
        %v3679 = vld [vmem:[%s237 + $0x60] sm:$0xff]
        %v3680 = vld [vmem:[%s237 + $0x68] sm:$0xff]
        %v3681 = vld [vmem:[%s237 + $0x70] sm:$0xff]
        %v3682 = vld [vmem:[%s237 + $0x78] sm:$0xff]
        %v3683 = vld [vmem:[%s237 + $0x80] sm:$0xff]
        %v3684 = vld [vmem:[%s237 + $0x88] sm:$0xff]
        %v3685 = vld [vmem:[%s237 + $0x90] sm:$0xff]
        %v3686 = vld [vmem:[%s237 + $0x98] sm:$0xff]
        %v3687 = vld [vmem:[%s237 + $0xa0] sm:$0xff]
        %v3688 = vld [vmem:[%s237 + $0xa8] sm:$0xff]
        %v3689 = vld [vmem:[%s237 + $0xb0] sm:$0xff]
        %v3690 = vld [vmem:[%s237 + $0xb8] sm:$0xff]
        %v3691 = vld [vmem:[%s237 + $0xc0] sm:$0xff]
        %v3692 = vld [vmem:[%s237 + $0xc8] sm:$0xff]
        %v3693 = vld [vmem:[%s237 + $0xd0] sm:$0xff]
        %v3694 = vld [vmem:[%s237 + $0xd8] sm:$0xff]
        %v3695 = vld [vmem:[%s237 + $0xe0] sm:$0xff]
        %v3696 = vld [vmem:[%s237 + $0xe8] sm:$0xff]
        %v3697 = vld [vmem:[%s237 + $0xf0] sm:$0xff]
        %v3698 = vld [vmem:[%s237 + $0xf8] sm:$0xff]
        %3723 = vrot.lane.b32.xlu0 %v3434, 38
        %v3724 = vpop.permute.xlu0 %3723
        %3725 = vrot.lane.b32.xlu0 %v3436, 38
        %v3726 = vpop.permute.xlu0 %3725
        %3727 = vrot.lane.b32.xlu0 %v3637, 38
        %v3728 = vpop.permute.xlu0 %3727
        %3729 = vrot.lane.b32.xlu0 %v3438, 38
        %v3730 = vpop.permute.xlu0 %3729
        %3731 = vrot.lane.b32.xlu0 %v3440, 38
        %v3732 = vpop.permute.xlu0 %3731
        %3733 = vrot.lane.b32.xlu0 %v3640, 38
        %v3734 = vpop.permute.xlu0 %3733
        %3735 = vrot.lane.b32.xlu0 %v3444, 38
        %v3736 = vpop.permute.xlu0 %3735
        %3737 = vrot.lane.b32.xlu0 %v3446, 38
        %v3738 = vpop.permute.xlu0 %3737
        %3739 = vrot.lane.b32.xlu0 %v3645, 38
        %v3740 = vpop.permute.xlu0 %3739
        %3741 = vrot.lane.b32.xlu0 %v3448, 38
        %v3742 = vpop.permute.xlu0 %3741
        %3743 = vrot.lane.b32.xlu0 %v3450, 38
        %v3744 = vpop.permute.xlu0 %3743
        %3745 = vrot.lane.b32.xlu0 %v3648, 38
        %v3746 = vpop.permute.xlu0 %3745
        %3747 = vrot.lane.b32.xlu0 %v3454, 38
        %v3748 = vpop.permute.xlu0 %3747
        %3749 = vrot.lane.b32.xlu0 %v3456, 38
        %v3750 = vpop.permute.xlu0 %3749
        %3751 = vrot.lane.b32.xlu0 %v3653, 38
        %v3752 = vpop.permute.xlu0 %3751
        %3753 = vrot.lane.b32.xlu0 %v3458, 38
        %v3754 = vpop.permute.xlu0 %3753
        %3755 = vrot.lane.b32.xlu0 %v3460, 38
        %v3756 = vpop.permute.xlu0 %3755
        %3757 = vrot.lane.b32.xlu0 %v3656, 38
        %v3758 = vpop.permute.xlu0 %3757
        %3759 = vrot.lane.b32.xlu0 %v3464, 38
        %v3760 = vpop.permute.xlu0 %3759
        %3761 = vrot.lane.b32.xlu0 %v3466, 38
        %v3762 = vpop.permute.xlu0 %3761
        %3763 = vrot.lane.b32.xlu0 %v3661, 38
        %v3764 = vpop.permute.xlu0 %3763
        %3765 = vrot.lane.b32.xlu0 %v3468, 38
        %v3766 = vpop.permute.xlu0 %3765
        %3767 = vrot.lane.b32.xlu0 %v3470, 38
        %v3768 = vpop.permute.xlu0 %3767
        %3769 = vrot.lane.b32.xlu0 %v3664, 38
        %v3770 = vpop.permute.xlu0 %3769
        %vm3771 = vcmask 310272
        %v3772 = vsel %vm3771, %v3724, %v3726
        %v3773 = vsel %vm3771, %v3726, %v3728
        %v3774 = vsel %vm3771, %v3730, %v3732
        %v3775 = vsel %vm3771, %v3732, %v3734
        %v3776 = vsel %vm3771, %v3736, %v3738
        %v3777 = vsel %vm3771, %v3738, %v3740
        %v3778 = vsel %vm3771, %v3742, %v3744
        %v3779 = vsel %vm3771, %v3744, %v3746
        %v3780 = vsel %vm3771, %v3748, %v3750
        %v3781 = vsel %vm3771, %v3750, %v3752
        %v3782 = vsel %vm3771, %v3754, %v3756
        %v3783 = vsel %vm3771, %v3756, %v3758
        %v3784 = vsel %vm3771, %v3760, %v3762
        %v3785 = vsel %vm3771, %v3762, %v3764
        %v3786 = vsel %vm3771, %v3766, %v3768
        %v3787 = vsel %vm3771, %v3768, %v3770
        %v3820 = vadd.f32 %v3667, %v3724
        %v3821 = vadd.f32 %v3668, %v3772
        %v3822 = vadd.f32 %v3669, %v3773
        %v3823 = vadd.f32 %v3670, %v3728
        %v3824 = vadd.f32 %v3671, %v3730
        %v3825 = vadd.f32 %v3672, %v3774
        %v3826 = vadd.f32 %v3673, %v3775
        %v3827 = vadd.f32 %v3674, %v3734
        %v3828 = vadd.f32 %v3675, %v3736
        %v3829 = vadd.f32 %v3676, %v3776
        %v3830 = vadd.f32 %v3677, %v3777
        %v3831 = vadd.f32 %v3678, %v3740
        %v3832 = vadd.f32 %v3679, %v3742
        %v3833 = vadd.f32 %v3680, %v3778
        %v3834 = vadd.f32 %v3681, %v3779
        %v3835 = vadd.f32 %v3682, %v3746
        %v3836 = vadd.f32 %v3683, %v3748
        %v3837 = vadd.f32 %v3684, %v3780
        %v3838 = vadd.f32 %v3685, %v3781
        %v3839 = vadd.f32 %v3686, %v3752
        %v3840 = vadd.f32 %v3687, %v3754
        %v3841 = vadd.f32 %v3688, %v3782
        %v3842 = vadd.f32 %v3689, %v3783
        %v3843 = vadd.f32 %v3690, %v3758
        %v3844 = vadd.f32 %v3691, %v3760
        %v3845 = vadd.f32 %v3692, %v3784
        %v3846 = vadd.f32 %v3693, %v3785
        %v3847 = vadd.f32 %v3694, %v3764
        %v3848 = vadd.f32 %v3695, %v3766
        %v3849 = vadd.f32 %v3696, %v3786
        %v3850 = vadd.f32 %v3697, %v3787
        %v3851 = vadd.f32 %v3698, %v3770
        %v3852 = vld [vmem:[%s4] sm:$0xff]
        %v3853 = vld [vmem:[%s4 + $0x8] sm:$0xff]
        %v3854 = vld [vmem:[%s4 + $0x10] sm:$0xff]
        %v3855 = vld [vmem:[%s4 + $0x18] sm:$0xff]
        %v3856 = vld [vmem:[%s4 + $0x20] sm:$0xff]
        %v3857 = vld [vmem:[%s4 + $0x28] sm:$0xff]
        %v3858 = vld [vmem:[%s4 + $0x30] sm:$0xff]
        %v3859 = vld [vmem:[%s4 + $0x38] sm:$0xff]
        %3861 = vset.pattern.permute.xlu0 1
        %3862 = vperm.xlu0 %3861, %v3852
        %v3863 = vpop.permute.xlu0 %3862
        %3866 = vset.pattern.permute.xlu0 1
        %3867 = vperm.xlu0 %3866, %v3853
        %v3868 = vpop.permute.xlu0 %3867
        %3871 = vset.pattern.permute.xlu0 1
        %3872 = vperm.xlu0 %3871, %v3854
        %v3873 = vpop.permute.xlu0 %3872
        %3876 = vset.pattern.permute.xlu0 1
        %3877 = vperm.xlu0 %3876, %v3855
        %v3878 = vpop.permute.xlu0 %3877
        %3881 = vset.pattern.permute.xlu0 1
        %3882 = vperm.xlu0 %3881, %v3856
        %v3883 = vpop.permute.xlu0 %3882
        %3886 = vset.pattern.permute.xlu0 1
        %3887 = vperm.xlu0 %3886, %v3857
        %v3888 = vpop.permute.xlu0 %3887
        %3891 = vset.pattern.permute.xlu0 1
        %3892 = vperm.xlu0 %3891, %v3858
        %v3893 = vpop.permute.xlu0 %3892
        %3896 = vset.pattern.permute.xlu0 1
        %3897 = vperm.xlu0 %3896, %v3859
        %v3898 = vpop.permute.xlu0 %3897
        %v3900 = vadd.f32 %v3820, %v3863
        %v3901 = vadd.f32 %v3821, %v3863
        %v3902 = vadd.f32 %v3822, %v3863
        %v3903 = vadd.f32 %v3823, %v3863
        %v3904 = vadd.f32 %v3824, %v3868
        %v3905 = vadd.f32 %v3825, %v3868
        %v3906 = vadd.f32 %v3826, %v3868
        %v3907 = vadd.f32 %v3827, %v3868
        %v3908 = vadd.f32 %v3828, %v3873
        %v3909 = vadd.f32 %v3829, %v3873
        %v3910 = vadd.f32 %v3830, %v3873
        %v3911 = vadd.f32 %v3831, %v3873
        %v3912 = vadd.f32 %v3832, %v3878
        %v3913 = vadd.f32 %v3833, %v3878
        %v3914 = vadd.f32 %v3834, %v3878
        %v3915 = vadd.f32 %v3835, %v3878
        %v3916 = vadd.f32 %v3836, %v3883
        %v3917 = vadd.f32 %v3837, %v3883
        %v3918 = vadd.f32 %v3838, %v3883
        %v3919 = vadd.f32 %v3839, %v3883
        %v3920 = vadd.f32 %v3840, %v3888
        %v3921 = vadd.f32 %v3841, %v3888
        %v3922 = vadd.f32 %v3842, %v3888
        %v3923 = vadd.f32 %v3843, %v3888
        %v3924 = vadd.f32 %v3844, %v3893
        %v3925 = vadd.f32 %v3845, %v3893
        %v3926 = vadd.f32 %v3846, %v3893
        %v3927 = vadd.f32 %v3847, %v3893
        %v3928 = vadd.f32 %v3848, %v3898
        %v3929 = vadd.f32 %v3849, %v3898
        %v3930 = vadd.f32 %v3850, %v3898
        %v3931 = vadd.f32 %v3851, %v3898
        %3964 = vrot.lane.b32.xlu0 %v3900, 90
        %v3965 = vpop.permute.xlu0 %3964
        %3966 = vrot.lane.b32.xlu0 %v3901, 90
        %v3967 = vpop.permute.xlu0 %3966
        %3968 = vrot.lane.b32.xlu0 %v3902, 90
        %v3969 = vpop.permute.xlu0 %3968
        %3970 = vrot.lane.b32.xlu0 %v3903, 90
        %v3971 = vpop.permute.xlu0 %3970
        %3972 = vrot.lane.b32.xlu0 %v3904, 90
        %v3973 = vpop.permute.xlu0 %3972
        %3974 = vrot.lane.b32.xlu0 %v3905, 90
        %v3975 = vpop.permute.xlu0 %3974
        %3976 = vrot.lane.b32.xlu0 %v3906, 90
        %v3977 = vpop.permute.xlu0 %3976
        %3978 = vrot.lane.b32.xlu0 %v3907, 90
        %v3979 = vpop.permute.xlu0 %3978
        %3980 = vrot.lane.b32.xlu0 %v3908, 90
        %v3981 = vpop.permute.xlu0 %3980
        %3982 = vrot.lane.b32.xlu0 %v3909, 90
        %v3983 = vpop.permute.xlu0 %3982
        %3984 = vrot.lane.b32.xlu0 %v3910, 90
        %v3985 = vpop.permute.xlu0 %3984
        %3986 = vrot.lane.b32.xlu0 %v3911, 90
        %v3987 = vpop.permute.xlu0 %3986
        %3988 = vrot.lane.b32.xlu0 %v3912, 90
        %v3989 = vpop.permute.xlu0 %3988
        %3990 = vrot.lane.b32.xlu0 %v3913, 90
        %v3991 = vpop.permute.xlu0 %3990
        %3992 = vrot.lane.b32.xlu0 %v3914, 90
        %v3993 = vpop.permute.xlu0 %3992
        %3994 = vrot.lane.b32.xlu0 %v3915, 90
        %v3995 = vpop.permute.xlu0 %3994
        %3996 = vrot.lane.b32.xlu0 %v3916, 90
        %v3997 = vpop.permute.xlu0 %3996
        %3998 = vrot.lane.b32.xlu0 %v3917, 90
        %v3999 = vpop.permute.xlu0 %3998
        %4000 = vrot.lane.b32.xlu0 %v3918, 90
        %v4001 = vpop.permute.xlu0 %4000
        %4002 = vrot.lane.b32.xlu0 %v3919, 90
        %v4003 = vpop.permute.xlu0 %4002
        %4004 = vrot.lane.b32.xlu0 %v3920, 90
        %v4005 = vpop.permute.xlu0 %4004
        %4006 = vrot.lane.b32.xlu0 %v3921, 90
        %v4007 = vpop.permute.xlu0 %4006
        %4008 = vrot.lane.b32.xlu0 %v3922, 90
        %v4009 = vpop.permute.xlu0 %4008
        %4010 = vrot.lane.b32.xlu0 %v3923, 90
        %v4011 = vpop.permute.xlu0 %4010
        %4012 = vrot.lane.b32.xlu0 %v3924, 90
        %v4013 = vpop.permute.xlu0 %4012
        %4014 = vrot.lane.b32.xlu0 %v3925, 90
        %v4015 = vpop.permute.xlu0 %4014
        %4016 = vrot.lane.b32.xlu0 %v3926, 90
        %v4017 = vpop.permute.xlu0 %4016
        %4018 = vrot.lane.b32.xlu0 %v3927, 90
        %v4019 = vpop.permute.xlu0 %4018
        %4020 = vrot.lane.b32.xlu0 %v3928, 90
        %v4021 = vpop.permute.xlu0 %4020
        %4022 = vrot.lane.b32.xlu0 %v3929, 90
        %v4023 = vpop.permute.xlu0 %4022
        %4024 = vrot.lane.b32.xlu0 %v3930, 90
        %v4025 = vpop.permute.xlu0 %4024
        %4026 = vrot.lane.b32.xlu0 %v3931, 90
        %v4027 = vpop.permute.xlu0 %4026
        %vm4028 = vcmask 736256
        %v4029 = vsel %vm4028, %v3965, %v3967
        %v4030 = vsel %vm4028, %v3967, %v3969
        %v4031 = vsel %vm4028, %v3969, %v3971
        %v4032 = vsel %vm4028, %v3973, %v3975
        %v4033 = vsel %vm4028, %v3975, %v3977
        %v4034 = vsel %vm4028, %v3977, %v3979
        %v4035 = vsel %vm4028, %v3981, %v3983
        %v4036 = vsel %vm4028, %v3983, %v3985
        %v4037 = vsel %vm4028, %v3985, %v3987
        %v4038 = vsel %vm4028, %v3989, %v3991
        %v4039 = vsel %vm4028, %v3991, %v3993
        %v4040 = vsel %vm4028, %v3993, %v3995
        %v4041 = vsel %vm4028, %v3997, %v3999
        %v4042 = vsel %vm4028, %v3999, %v4001
        %v4043 = vsel %vm4028, %v4001, %v4003
        %v4044 = vsel %vm4028, %v4005, %v4007
        %v4045 = vsel %vm4028, %v4007, %v4009
        %v4046 = vsel %vm4028, %v4009, %v4011
        %v4047 = vsel %vm4028, %v4013, %v4015
        %v4048 = vsel %vm4028, %v4015, %v4017
        %v4049 = vsel %vm4028, %v4017, %v4019
        %v4050 = vsel %vm4028, %v4021, %v4023
        %v4051 = vsel %vm4028, %v4023, %v4025
        %v4052 = vsel %vm4028, %v4025, %v4027
        %4077 = vst [vmem:[%s271] sm:$0xff] %v4029
        %4078 = vst [vmem:[%s271 + $0x8] sm:$0xff] %v4030
        %4079 = vst [vmem:[%s271 + $0x10] sm:$0xff] %v4031
        %4080 = vst [vmem:[%s271 + $0x18] sm:$0xff] %v4032
        %4081 = vst [vmem:[%s271 + $0x20] sm:$0xff] %v4033
        %4082 = vst [vmem:[%s271 + $0x28] sm:$0xff] %v4034
        %4083 = vst [vmem:[%s271 + $0x30] sm:$0xff] %v4035
        %4084 = vst [vmem:[%s271 + $0x38] sm:$0xff] %v4036
        %4085 = vst [vmem:[%s271 + $0x40] sm:$0xff] %v4037
        %4086 = vst [vmem:[%s271 + $0x48] sm:$0xff] %v4038
        %4087 = vst [vmem:[%s271 + $0x50] sm:$0xff] %v4039
        %4088 = vst [vmem:[%s271 + $0x58] sm:$0xff] %v4040
        %4089 = vst [vmem:[%s271 + $0x60] sm:$0xff] %v4041
        %4090 = vst [vmem:[%s271 + $0x68] sm:$0xff] %v4042
        %4091 = vst [vmem:[%s271 + $0x70] sm:$0xff] %v4043
        %4092 = vst [vmem:[%s271 + $0x78] sm:$0xff] %v4044
        %4093 = vst [vmem:[%s271 + $0x80] sm:$0xff] %v4045
        %4094 = vst [vmem:[%s271 + $0x88] sm:$0xff] %v4046
        %4095 = vst [vmem:[%s271 + $0x90] sm:$0xff] %v4047
        %4096 = vst [vmem:[%s271 + $0x98] sm:$0xff] %v4048
        %4097 = vst [vmem:[%s271 + $0xa0] sm:$0xff] %v4049
        %4098 = vst [vmem:[%s271 + $0xa8] sm:$0xff] %v4050
        %4099 = vst [vmem:[%s271 + $0xb0] sm:$0xff] %v4051
        %4100 = vst [vmem:[%s271 + $0xb8] sm:$0xff] %v4052
        %s4101 = sand.u32 %s141, 1
        %s4102 = scalar_lea.sflag [#allocation6], %s4101
        %s4103 = sand.u32 %s141, 1
        %s4104 = smul.addr %s4103, 192
        %s4105 = scalar_lea.vmem [#allocation10], %s4104
        // Predicated region
        $region53: #{tpu_custom_call.1} parent=39 // pred_check
          %p4106 = pneg %p151
        $region54: #{tpu_custom_call.1} parent=39 // pred_check_branch
          %4108 = sbr.rel (%p4106) target = $region56
        $region55: #{tpu_custom_call.1} parent=39 // pred_region
          %s4110 = ssub.s32 3072, 3072
          %4111 = vsyncadd %s4102, %s4110
          %s4112 = smul.addr %s23, 24
          %s4113 = smul.addr %s4112, 128
          %s4114 = scalar_lea.hbm %s5, %s4113
          %s4115 = sshll.u32 %s4105, 4
          %s4116 = int_to_ptr.vmem [resolvable:$true] %s4115
          %4121 = dma.vmem_to_hbm [thread:$0]  %s4116, 3072, %s4114, %s4102, 384, 384, 24
        $region56: #{tpu_custom_call.1} parent=39 // pred_fallthru
          _
      $region40: #{tpu_custom_call.1} parent=5 // pred_fallthru
        _
      %p4122 = scmp.le.s32.totalorder 2, %s18
      // Predicated region
      $region57: #{tpu_custom_call.1} parent=5 // pred_check
        %p4123 = pneg %p4122
      $region58: #{tpu_custom_call.1} parent=5 // pred_check_branch
        %4125 = sbr.rel (%p4123) target = $region60
      $region59: #{tpu_custom_call.1} parent=5 // pred_region
        %s4126 = ssub.s32 %s18, 2
        // Predicated region
        $region61: #{tpu_custom_call.1} parent=59 // pred_check
          %p4127 = pneg %p157
        $region62: #{tpu_custom_call.1} parent=59 // pred_check_branch
          %4129 = sbr.rel (%p4127) target = $region64
        $region63: #{tpu_custom_call.1} parent=59 // pred_region
          %s4130 = sand.u32 %s142, 1
          %s4131 = scalar_lea.sflag [#allocation6], %s4130
          %s4132 = sand.u32 %s142, 1
          %s4133 = smul.addr %s4132, 192
          %s4134 = scalar_lea.vmem [#allocation10], %s4133
          %4135 = dma.done %s4131, 3072
        $region64: #{tpu_custom_call.1} parent=59 // pred_fallthru
          _
      $region60: #{tpu_custom_call.1} parent=5 // pred_fallthru
        _
    $region6: #{tpu_custom_call.1} parent=1 // loop_footer
      %s22 = sadd.s32 1, %s18
    $region7: #{tpu_custom_call.1} parent=1 // loop_footer_branch
      %17 = sbr.rel target = $region3
    $region8: #{tpu_custom_call.1} parent=1 // loop_exit
      _
    %4136 = vsyncpa [#allocation5], 1
    %s4137 = scalar_lea.sflag [#allocation5], 1
    %4138 = vsyncpa %s4137, 1
    %4139 = vsyncpa [#allocation8], 1
    %4140 = vsyncpa [#allocation6], 1
    %s4141 = scalar_lea.sflag [#allocation6], 1
    %4142 = vsyncpa %s4141, 1

</llo_original>
